<compile_context>
chip_gen: v5e
topology: v5e:2x2
jax: 0.10.0
libtpu: 0.0.40
codegen_flags: <defaults>
</compile_context>

<pallas_src>
from functools import partial

import jax
import jax.numpy as jnp
from jax.experimental import pallas as pl
from jax.experimental.pallas import tpu as pltpu

DICT_SIZE = 28
DIM = 32          # args.dim, args.bidir=False, args.rnn='gru'
EOS = 27
LANE = 128        # every gate / logit block padded to one full vreg lane tile


def autoencoder_kernel(
    in_len_ref, tgt0_ref, enc_x_ref,
    enc_hw_ref, enc_nb_ref,
    dec_xw_ref, dec_xb_ref, w_fused_ref, b_fused_ref,
    out_ref, word_ref,
):
    B = in_len_ref.shape[0]
    T_in = enc_x_ref.shape[0] // B
    L = LANE
    maxlen = word_ref.shape[1]
    f32 = jnp.float32
    dot = partial(jnp.dot, preferred_element_type=f32)

    # ----------------------------- hoisted constants -----------------------------
    lane32 = jax.lax.broadcasted_iota(jnp.int32, (B, 32), 1)
    lane128 = jax.lax.broadcasted_iota(jnp.int32, (B, L), 1)
    pad_p = (lane128 == 0).astype(f32)                      # PAD_p one-hot rows
    # Tie-break key bias: breaks exact float ties toward the lower index (like
    # torch.topk); applied to the argmax key only, never to the emitted logits.
    tie_bias = lane128.astype(f32) * (-1e-6)
    enc_hw = enc_hw_ref[...]                                # (128, 384)
    enc_nb_b = jnp.broadcast_to(enc_nb_ref[...], (B, L))    # encoder b_hn
    dec_xw = dec_xw_ref[...]                                # (32, 384)
    dec_xb_b = jnp.broadcast_to(dec_xb_ref[...], (B, 3 * L))
    w_fused = w_fused_ref[...]                              # (128, 512)
    b_fused_b = jnp.broadcast_to(b_fused_ref[...], (B, 4 * L))
    lens_b = jnp.broadcast_to(in_len_ref[...], (B, L))      # int32

    # -------- Encoder GRU: x-side preactivations precomputed in the wrapper -------
    # Hidden state lives in a full (B,128) lane tile; lanes 32..127 stay exactly 0
    # (weights / biases are zero-padded there), so no slicing realignment is needed.
    h = jnp.zeros((B, L), f32)
    masks = [lens_b > t for t in range(T_in)]               # hoisted off the chain
    for t in range(T_in):
        xp = enc_x_ref[t * B:(t + 1) * B, :]                # (B, 384) = [r|z|n] x-side
        hg = dot(h, enc_hw)                                 # (B, 384)   h-side
        r = jax.nn.sigmoid(xp[:, 0:L] + hg[:, 0:L])
        z = jax.nn.sigmoid(xp[:, L:2 * L] + hg[:, L:2 * L])
        n = jnp.tanh(xp[:, 2 * L:3 * L] + r * (hg[:, 2 * L:3 * L] + enc_nb_b))
        h_new = (1.0 - z) * n + z * h
        # pack_padded_sequence semantics: hidden only advances while t < length
        h = jnp.where(masks[t], h_new, h)

    # -------------- Decoder.serial: greedy decode (maxlen = T_tgt - 1) --------------
    # One fused matmul on h produces [logits | h_r | h_z | h_n] (decoder b_hn folded
    # into the fused bias); the per-step x-side matmul consumes only the one-hot.
    fused = dot(h, w_fused) + b_fused_b                     # h-side gates for step 0
    oh = (lane32 == tgt0_ref[...]).astype(f32)              # first fed token one-hot
    active = jnp.ones((B, 1), jnp.bool_)                    # row still pre/at-EOS
    toks = []
    for t in range(maxlen):
        xg = dot(oh, dec_xw) + dec_xb_b                     # (B, 384) x-side gates
        r = jax.nn.sigmoid(xg[:, 0:L] + fused[:, L:2 * L])
        z = jax.nn.sigmoid(xg[:, L:2 * L] + fused[:, 2 * L:3 * L])
        n = jnp.tanh(xg[:, 2 * L:3 * L] + r * fused[:, 3 * L:4 * L])
        h = (1.0 - z) * n + z * h
        fused = dot(h, w_fused) + b_fused_b                 # [logits_t | gates t+1]
        logits = fused[:, 0:L]                              # pad lanes = -1e30
        key = logits + tie_bias
        m = jnp.max(key, axis=1, keepdims=True)
        hit = key == m                                      # one-hot (tie-broken)
        oh = hit[:, :32].astype(f32)                        # next-step one-hot (on chain)
        # Integer argmax / EOS bookkeeping stay OFF the recurrence chain.
        new_tok = jnp.min(jnp.where(hit, lane128, L),
                          axis=1, keepdims=True).astype(jnp.int32)
        out_ref[:, t * L:(t + 1) * L] = jnp.where(active, logits, pad_p)
        toks.append(jnp.where(active, new_tok, 0))          # post-EOS -> PAD token
        # Rows past EOS keep running (outputs already overridden above), matching
        # the masked outputs of the PyTorch per-row early-break loop.
        active = jnp.logical_and(active, new_tok != EOS)

    word_ref[...] = jnp.concatenate(toks, axis=1)           # (B, maxlen), tiny epilogue

    # TODO(synk): training-mode random teacher-forcing branch selection and the
    # teacher-forced packed-sequence Decoder.forward path are intentionally not
    # implemented; this kernel reproduces the deterministic eval-mode forward.


def _pack_params(params):
    """Fold embeddings into gate projections; gate-align every block to 128 lanes."""
    (e_emb, e_wih, e_whh, e_bih, e_bhh,
     d_emb, d_wih, d_whh, d_bih, d_bhh, lin_w, lin_b) = params
    V, D = e_emb.shape
    L = LANE
    f32 = jnp.float32

    def padc(w):                                  # pad columns to one 128-lane tile
        return jnp.pad(w.astype(f32), ((0, 0), (0, L - w.shape[1])))

    def padr(w, rows):                            # pad rows (zero rows are inert)
        return jnp.pad(w.astype(f32), ((0, rows - w.shape[0]), (0, 0)))

    # Encoder x-side lookup table (token -> [r|z|n] preactivation weights) + bias.
    enc_xw = jnp.concatenate([padc(e_emb @ e_wih[0]),
                              padc(e_emb @ e_wih[1]),
                              padc(e_emb @ e_wih[2])], axis=1)          # (V, 384)
    enc_xb = jnp.concatenate([padc(e_bih[0] + e_bhh[0]),
                              padc(e_bih[1] + e_bhh[1]),
                              padc(e_bih[2])], axis=1)                  # (1, 384)
    enc_hw = padr(jnp.concatenate([padc(e_whh[0]), padc(e_whh[1]),
                                   padc(e_whh[2])], axis=1), L)         # (128, 384)
    enc_nb = padc(e_bhh[2])                                             # (1, 128)

    # Decoder x-side: onehot32 @ (32, 384) with gate tiles [r|z|n]; biases folded.
    dec_xw = padr(jnp.concatenate([padc(d_emb @ d_wih[0]),
                                   padc(d_emb @ d_wih[1]),
                                   padc(d_emb @ d_wih[2])], axis=1), 32)  # (32, 384)
    dec_xb = jnp.concatenate([padc(d_bih[0] + d_bhh[0]),
                              padc(d_bih[1] + d_bhh[1]),
                              padc(d_bih[2])], axis=1)                  # (1, 384)

    # Fused h-side RHS: h @ (128, 512) -> [logits | h_r | h_z | h_n]; logit pad
    # bias = -1e30 keeps argmax in 0..V-1; decoder b_hn folded into the n tile.
    lin_b_pad = jnp.full((1, L), -1e30, f32).at[:, :lin_b.shape[1]].set(lin_b)
    w_fused = padr(jnp.concatenate([padc(lin_w), padc(d_whh[0]),
                                    padc(d_whh[1]), padc(d_whh[2])], axis=1), L)
    b_fused = jnp.concatenate([lin_b_pad, jnp.zeros((1, L), f32),
                               jnp.zeros((1, L), f32), padc(d_bhh[2])], axis=1)
    return enc_xw, enc_xb, enc_hw, enc_nb, dec_xw, dec_xb, w_fused, b_fused


def _vspec(shape):
    nd = len(shape)
    return pl.BlockSpec(shape, lambda i, _nd=nd: (0,) * _nd)


def autoencoder_forward(input_tok, target_tok, input_len, target_len, params):
    # target_len is unused on the eval (serial greedy-decode) path, as in PyTorch.
    del target_len
    B, T_in = input_tok.shape
    _, T_tgt = target_tok.shape
    maxlen = T_tgt - 1
    Bp = max(8, ((B + 7) // 8) * 8)              # pad batch to full sublane tiles

    enc_xw, enc_xb, enc_hw, enc_nb, dec_xw, dec_xb, w_fused, b_fused = \
        _pack_params(params)

    tok = jnp.zeros((Bp, T_in), jnp.int32).at[:B].set(input_tok.astype(jnp.int32))
    lens = jnp.zeros((Bp, 1), jnp.int32).at[:B, 0].set(input_len.astype(jnp.int32))
    tgt0 = jnp.zeros((Bp, 1), jnp.int32).at[:B, 0].set(target_tok[:, 0].astype(jnp.int32))
    # Encoder x-side gate preactivations hoisted to the wrapper (tiny token gather).
    enc_x = (jnp.take(enc_xw, tok, axis=0) + enc_xb)            # (Bp, T_in, 384)
    enc_x = enc_x.transpose(1, 0, 2).reshape(T_in * Bp, 3 * LANE)

    args = (lens, tgt0, enc_x, enc_hw, enc_nb, dec_xw, dec_xb, w_fused, b_fused)
    out_shapes = (
        jax.ShapeDtypeStruct((Bp, maxlen * LANE), jnp.float32),
        jax.ShapeDtypeStruct((Bp, maxlen), jnp.int32),
    )
    out2d, word = pl.pallas_call(
        autoencoder_kernel,
        out_shape=out_shapes,
        grid=(1,),
        in_specs=[_vspec(a.shape) for a in args],
        out_specs=(
            _vspec((Bp, maxlen * LANE)),
            _vspec((Bp, maxlen)),
        ),
        compiler_params=pltpu.CompilerParams(dimension_semantics=("arbitrary",)),
    )(*args)
    out = out2d[:B].reshape(B, maxlen, LANE)[:, :, :DICT_SIZE]
    # PyTorch returns (out_sequence [B, maxlen, dict], word_sequence [B, maxlen, 1])
    return out, word[:B, :, None]


def init_params(key, dim=DIM, dict_size=DICT_SIZE):
    ks = jax.random.split(key, 12)
    s = 1.0 / (dim ** 0.5)

    def u(k, shape):
        return jax.random.uniform(k, shape, jnp.float32, -s, s)

    e_emb = jax.random.normal(ks[0], (dict_size, dim), jnp.float32)
    e_emb = e_emb.at[0].set(0.0)                    # nn.Embedding(padding_idx=0)
    e_wih = u(ks[1], (3, dim, dim))
    e_whh = u(ks[2], (3, dim, dim))
    e_bih = u(ks[3], (3, 1, dim))
    e_bhh = u(ks[4], (3, 1, dim))
    d_emb = jax.random.normal(ks[5], (dict_size, dim), jnp.float32)
    d_wih = u(ks[6], (3, dim, dim))
    d_whh = u(ks[7], (3, dim, dim))
    d_bih = u(ks[8], (3, 1, dim))
    d_bhh = u(ks[9], (3, 1, dim))
    lin_w = u(ks[10], (dim, dict_size))             # nn.Linear(dim, dict_size) as W^T
    lin_b = u(ks[11], (1, dict_size))
    return [e_emb, e_wih, e_whh, e_bih, e_bhh,
            d_emb, d_wih, d_whh, d_bih, d_bhh,
            lin_w, lin_b]


if __name__ == "__main__":
    key = jax.random.PRNGKey(0)
    pkey, k1, k2 = jax.random.split(key, 3)
    params = init_params(pkey)

    B, T_in, T_tgt = 2, 8, 8
    input_tok = jax.random.randint(k1, (B, T_in), 1, DICT_SIZE, dtype=jnp.int32)
    target_tok = jax.random.randint(k2, (B, T_tgt), 1, DICT_SIZE, dtype=jnp.int32)
    input_len = jnp.array([8, 5], jnp.int32)
    target_len = jnp.array([8, 6], jnp.int32)       # unused on the eval path

    fwd = jax.jit(lambda a, b, c, d: autoencoder_forward(a, b, c, d, params))
    out, word_seq = fwd(input_tok, target_tok, input_len, target_len)
    jax.block_until_ready((out, word_seq))

    assert out.shape == (B, T_tgt - 1, DICT_SIZE) and out.dtype == jnp.float32
    assert word_seq.shape == (B, T_tgt - 1, 1) and word_seq.dtype == jnp.int32
    assert bool(jnp.all(jnp.isfinite(out)))
    assert bool(jnp.all((word_seq >= 0) & (word_seq < DICT_SIZE)))
    print("KERNEL_OK")
</pallas_src>

<mosaic_0001>
module attributes {stable_mosaic.version = 11 : i64} {
  func.func @autoencoder_kernel(%arg0: i32, %arg1: memref<8x1xi32, #tpu.memory_space<vmem>>, %arg2: memref<8x1xi32, #tpu.memory_space<vmem>>, %arg3: memref<64x384xf32, #tpu.memory_space<vmem>>, %arg4: memref<128x384xf32, #tpu.memory_space<vmem>>, %arg5: memref<1x128xf32, #tpu.memory_space<vmem>>, %arg6: memref<32x384xf32, #tpu.memory_space<vmem>>, %arg7: memref<1x384xf32, #tpu.memory_space<vmem>>, %arg8: memref<128x512xf32, #tpu.memory_space<vmem>>, %arg9: memref<1x512xf32, #tpu.memory_space<vmem>>, %arg10: memref<8x896xf32, #tpu.memory_space<vmem>>, %arg11: memref<8x7xi32, #tpu.memory_space<vmem>>) attributes {dimension_semantics = [#tpu.dimension_semantics<arbitrary>], iteration_bounds = array<i64: 1>, scalar_prefetch = 0 : i64, scratch_operands = 0 : i64, tpu.core_type = #tpu.core_type<tc>, window_params = [{pipeline_mode = #tpu.pipeline_mode<synchronous>, transform_indices = @transform_0, window_bounds = array<i64: 8, 1>}, {pipeline_mode = #tpu.pipeline_mode<synchronous>, transform_indices = @transform_1, window_bounds = array<i64: 8, 1>}, {pipeline_mode = #tpu.pipeline_mode<synchronous>, transform_indices = @transform_2, window_bounds = array<i64: 64, 384>}, {pipeline_mode = #tpu.pipeline_mode<synchronous>, transform_indices = @transform_3, window_bounds = array<i64: 128, 384>}, {pipeline_mode = #tpu.pipeline_mode<synchronous>, transform_indices = @transform_4, window_bounds = array<i64: 1, 128>}, {pipeline_mode = #tpu.pipeline_mode<synchronous>, transform_indices = @transform_5, window_bounds = array<i64: 32, 384>}, {pipeline_mode = #tpu.pipeline_mode<synchronous>, transform_indices = @transform_6, window_bounds = array<i64: 1, 384>}, {pipeline_mode = #tpu.pipeline_mode<synchronous>, transform_indices = @transform_7, window_bounds = array<i64: 128, 512>}, {pipeline_mode = #tpu.pipeline_mode<synchronous>, transform_indices = @transform_8, window_bounds = array<i64: 1, 512>}, {pipeline_mode = #tpu.pipeline_mode<synchronous>, transform_indices = @transform_9, window_bounds = array<i64: 8, 896>}, {pipeline_mode = #tpu.pipeline_mode<synchronous>, transform_indices = @transform_10, window_bounds = array<i64: 8, 7>}]} {
    %0 = tpu.iota {dimensions = array<i32: 1>} : vector<8x32xi32>
    %1 = tpu.iota {dimensions = array<i32: 1>} : vector<8x128xi32>
    %c0_i32 = arith.constant 0 : i32
    %2 = vector.broadcast %c0_i32 : i32 to vector<8x128xi32>
    %3 = arith.cmpi eq, %1, %2 : vector<8x128xi32>
    %4 = arith.extui %3 : vector<8x128xi1> to vector<8x128xi32>
    %5 = arith.sitofp %4 : vector<8x128xi32> to vector<8x128xf32>
    %6 = arith.sitofp %1 : vector<8x128xi32> to vector<8x128xf32>
    %cst = arith.constant -9.99999997E-7 : f32
    %7 = vector.broadcast %cst : f32 to vector<8x128xf32>
    %8 = arith.mulf %6, %7 : vector<8x128xf32>
    %c0 = arith.constant 0 : index
    %c0_0 = arith.constant 0 : index
    %9 = vector.load %arg4[%c0, %c0_0] : memref<128x384xf32, #tpu.memory_space<vmem>>, vector<128x384xf32>
    %c0_1 = arith.constant 0 : index
    %c0_2 = arith.constant 0 : index
    %10 = vector.load %arg5[%c0_1, %c0_2] : memref<1x128xf32, #tpu.memory_space<vmem>>, vector<1x128xf32>
    %11 = vector.shape_cast %10 : vector<1x128xf32> to vector<1x128xf32>
    %12 = vector.broadcast %11 : vector<1x128xf32> to vector<8x128xf32>
    %c0_3 = arith.constant 0 : index
    %c0_4 = arith.constant 0 : index
    %13 = vector.load %arg6[%c0_3, %c0_4] : memref<32x384xf32, #tpu.memory_space<vmem>>, vector<32x384xf32>
    %c0_5 = arith.constant 0 : index
    %c0_6 = arith.constant 0 : index
    %14 = vector.load %arg7[%c0_5, %c0_6] : memref<1x384xf32, #tpu.memory_space<vmem>>, vector<1x384xf32>
    %15 = vector.shape_cast %14 : vector<1x384xf32> to vector<1x384xf32>
    %16 = vector.broadcast %15 : vector<1x384xf32> to vector<8x384xf32>
    %c0_7 = arith.constant 0 : index
    %c0_8 = arith.constant 0 : index
    %17 = vector.load %arg8[%c0_7, %c0_8] : memref<128x512xf32, #tpu.memory_space<vmem>>, vector<128x512xf32>
    %c0_9 = arith.constant 0 : index
    %c0_10 = arith.constant 0 : index
    %18 = vector.load %arg9[%c0_9, %c0_10] : memref<1x512xf32, #tpu.memory_space<vmem>>, vector<1x512xf32>
    %19 = vector.shape_cast %18 : vector<1x512xf32> to vector<1x512xf32>
    %20 = vector.broadcast %19 : vector<1x512xf32> to vector<8x512xf32>
    %c0_11 = arith.constant 0 : index
    %c0_12 = arith.constant 0 : index
    %21 = vector.load %arg1[%c0_11, %c0_12] : memref<8x1xi32, #tpu.memory_space<vmem>>, vector<8x1xi32>
    %22 = vector.shape_cast %21 : vector<8x1xi32> to vector<8x1xi32>
    %23 = vector.broadcast %22 : vector<8x1xi32> to vector<8x128xi32>
    %cst_13 = arith.constant 0.000000e+00 : f32
    %24 = vector.broadcast %cst_13 : f32 to vector<8x128xf32>
    %c0_i32_14 = arith.constant 0 : i32
    %25 = vector.broadcast %c0_i32_14 : i32 to vector<8x128xi32>
    %26 = arith.cmpi sgt, %23, %25 : vector<8x128xi32>
    %c1_i32 = arith.constant 1 : i32
    %27 = vector.broadcast %c1_i32 : i32 to vector<8x128xi32>
    %28 = arith.cmpi sgt, %23, %27 : vector<8x128xi32>
    %c2_i32 = arith.constant 2 : i32
    %29 = vector.broadcast %c2_i32 : i32 to vector<8x128xi32>
    %30 = arith.cmpi sgt, %23, %29 : vector<8x128xi32>
    %c3_i32 = arith.constant 3 : i32
    %31 = vector.broadcast %c3_i32 : i32 to vector<8x128xi32>
    %32 = arith.cmpi sgt, %23, %31 : vector<8x128xi32>
    %c4_i32 = arith.constant 4 : i32
    %33 = vector.broadcast %c4_i32 : i32 to vector<8x128xi32>
    %34 = arith.cmpi sgt, %23, %33 : vector<8x128xi32>
    %c5_i32 = arith.constant 5 : i32
    %35 = vector.broadcast %c5_i32 : i32 to vector<8x128xi32>
    %36 = arith.cmpi sgt, %23, %35 : vector<8x128xi32>
    %c6_i32 = arith.constant 6 : i32
    %37 = vector.broadcast %c6_i32 : i32 to vector<8x128xi32>
    %38 = arith.cmpi sgt, %23, %37 : vector<8x128xi32>
    %c7_i32 = arith.constant 7 : i32
    %39 = vector.broadcast %c7_i32 : i32 to vector<8x128xi32>
    %40 = arith.cmpi sgt, %23, %39 : vector<8x128xi32>
    %c0_15 = arith.constant 0 : index
    %c0_16 = arith.constant 0 : index
    %41 = vector.load %arg3[%c0_15, %c0_16] : memref<64x384xf32, #tpu.memory_space<vmem>>, vector<8x384xf32>
    %cst_17 = arith.constant dense<0.000000e+00> : vector<8x384xf32>
    %42 = tpu.matmul %24, %9, %cst_17 {dimension_numbers = #tpu.dot_dimension_numbers<[1], [0], [0], [1], [0, 0, 1, 1], [], []>} : vector<8x128xf32>, vector<128x384xf32>, vector<8x384xf32> -> vector<8x384xf32>
    %43 = vector.extract_strided_slice %41 {offsets = [0, 0], sizes = [8, 128], strides = [1, 1]} : vector<8x384xf32> to vector<8x128xf32>
    %44 = vector.extract_strided_slice %42 {offsets = [0, 0], sizes = [8, 128], strides = [1, 1]} : vector<8x384xf32> to vector<8x128xf32>
    %45 = arith.addf %43, %44 : vector<8x128xf32>
    %46 = arith.negf %45 : vector<8x128xf32>
    %47 = math.exp %46 : vector<8x128xf32>
    %cst_18 = arith.constant 1.000000e+00 : f32
    %48 = vector.broadcast %cst_18 : f32 to vector<8x128xf32>
    %49 = arith.addf %48, %47 : vector<8x128xf32>
    %50 = arith.divf %48, %49 : vector<8x128xf32>
    %51 = vector.extract_strided_slice %41 {offsets = [0, 128], sizes = [8, 128], strides = [1, 1]} : vector<8x384xf32> to vector<8x128xf32>
    %52 = vector.extract_strided_slice %42 {offsets = [0, 128], sizes = [8, 128], strides = [1, 1]} : vector<8x384xf32> to vector<8x128xf32>
    %53 = arith.addf %51, %52 : vector<8x128xf32>
    %54 = arith.negf %53 : vector<8x128xf32>
    %55 = math.exp %54 : vector<8x128xf32>
    %cst_19 = arith.constant 1.000000e+00 : f32
    %56 = vector.broadcast %cst_19 : f32 to vector<8x128xf32>
    %57 = arith.addf %56, %55 : vector<8x128xf32>
    %58 = arith.divf %56, %57 : vector<8x128xf32>
    %59 = vector.extract_strided_slice %41 {offsets = [0, 256], sizes = [8, 128], strides = [1, 1]} : vector<8x384xf32> to vector<8x128xf32>
    %60 = vector.extract_strided_slice %42 {offsets = [0, 256], sizes = [8, 128], strides = [1, 1]} : vector<8x384xf32> to vector<8x128xf32>
    %61 = arith.addf %60, %12 : vector<8x128xf32>
    %62 = arith.mulf %50, %61 : vector<8x128xf32>
    %63 = arith.addf %59, %62 : vector<8x128xf32>
    %64 = math.tanh %63 : vector<8x128xf32>
    %cst_20 = arith.constant 1.000000e+00 : f32
    %65 = vector.broadcast %cst_20 : f32 to vector<8x128xf32>
    %66 = arith.subf %65, %58 : vector<8x128xf32>
    %67 = arith.mulf %66, %64 : vector<8x128xf32>
    %68 = arith.mulf %58, %24 : vector<8x128xf32>
    %69 = arith.addf %67, %68 : vector<8x128xf32>
    %70 = arith.select %26, %69, %24 : vector<8x128xi1>, vector<8x128xf32>
    %c8 = arith.constant 8 : index
    %c0_21 = arith.constant 0 : index
    %71 = vector.load %arg3[%c8, %c0_21] : memref<64x384xf32, #tpu.memory_space<vmem>>, vector<8x384xf32>
    %cst_22 = arith.constant dense<0.000000e+00> : vector<8x384xf32>
    %72 = tpu.matmul %70, %9, %cst_22 {dimension_numbers = #tpu.dot_dimension_numbers<[1], [0], [0], [1], [0, 0, 1, 1], [], []>} : vector<8x128xf32>, vector<128x384xf32>, vector<8x384xf32> -> vector<8x384xf32>
    %73 = vector.extract_strided_slice %71 {offsets = [0, 0], sizes = [8, 128], strides = [1, 1]} : vector<8x384xf32> to vector<8x128xf32>
    %74 = vector.extract_strided_slice %72 {offsets = [0, 0], sizes = [8, 128], strides = [1, 1]} : vector<8x384xf32> to vector<8x128xf32>
    %75 = arith.addf %73, %74 : vector<8x128xf32>
    %76 = arith.negf %75 : vector<8x128xf32>
    %77 = math.exp %76 : vector<8x128xf32>
    %cst_23 = arith.constant 1.000000e+00 : f32
    %78 = vector.broadcast %cst_23 : f32 to vector<8x128xf32>
    %79 = arith.addf %78, %77 : vector<8x128xf32>
    %80 = arith.divf %78, %79 : vector<8x128xf32>
    %81 = vector.extract_strided_slice %71 {offsets = [0, 128], sizes = [8, 128], strides = [1, 1]} : vector<8x384xf32> to vector<8x128xf32>
    %82 = vector.extract_strided_slice %72 {offsets = [0, 128], sizes = [8, 128], strides = [1, 1]} : vector<8x384xf32> to vector<8x128xf32>
    %83 = arith.addf %81, %82 : vector<8x128xf32>
    %84 = arith.negf %83 : vector<8x128xf32>
    %85 = math.exp %84 : vector<8x128xf32>
    %cst_24 = arith.constant 1.000000e+00 : f32
    %86 = vector.broadcast %cst_24 : f32 to vector<8x128xf32>
    %87 = arith.addf %86, %85 : vector<8x128xf32>
    %88 = arith.divf %86, %87 : vector<8x128xf32>
    %89 = vector.extract_strided_slice %71 {offsets = [0, 256], sizes = [8, 128], strides = [1, 1]} : vector<8x384xf32> to vector<8x128xf32>
    %90 = vector.extract_strided_slice %72 {offsets = [0, 256], sizes = [8, 128], strides = [1, 1]} : vector<8x384xf32> to vector<8x128xf32>
    %91 = arith.addf %90, %12 : vector<8x128xf32>
    %92 = arith.mulf %80, %91 : vector<8x128xf32>
    %93 = arith.addf %89, %92 : vector<8x128xf32>
    %94 = math.tanh %93 : vector<8x128xf32>
    %cst_25 = arith.constant 1.000000e+00 : f32
    %95 = vector.broadcast %cst_25 : f32 to vector<8x128xf32>
    %96 = arith.subf %95, %88 : vector<8x128xf32>
    %97 = arith.mulf %96, %94 : vector<8x128xf32>
    %98 = arith.mulf %88, %70 : vector<8x128xf32>
    %99 = arith.addf %97, %98 : vector<8x128xf32>
    %100 = arith.select %28, %99, %70 : vector<8x128xi1>, vector<8x128xf32>
    %c16 = arith.constant 16 : index
    %c0_26 = arith.constant 0 : index
    %101 = vector.load %arg3[%c16, %c0_26] : memref<64x384xf32, #tpu.memory_space<vmem>>, vector<8x384xf32>
    %cst_27 = arith.constant dense<0.000000e+00> : vector<8x384xf32>
    %102 = tpu.matmul %100, %9, %cst_27 {dimension_numbers = #tpu.dot_dimension_numbers<[1], [0], [0], [1], [0, 0, 1, 1], [], []>} : vector<8x128xf32>, vector<128x384xf32>, vector<8x384xf32> -> vector<8x384xf32>
    %103 = vector.extract_strided_slice %101 {offsets = [0, 0], sizes = [8, 128], strides = [1, 1]} : vector<8x384xf32> to vector<8x128xf32>
    %104 = vector.extract_strided_slice %102 {offsets = [0, 0], sizes = [8, 128], strides = [1, 1]} : vector<8x384xf32> to vector<8x128xf32>
    %105 = arith.addf %103, %104 : vector<8x128xf32>
    %106 = arith.negf %105 : vector<8x128xf32>
    %107 = math.exp %106 : vector<8x128xf32>
    %cst_28 = arith.constant 1.000000e+00 : f32
    %108 = vector.broadcast %cst_28 : f32 to vector<8x128xf32>
    %109 = arith.addf %108, %107 : vector<8x128xf32>
    %110 = arith.divf %108, %109 : vector<8x128xf32>
    %111 = vector.extract_strided_slice %101 {offsets = [0, 128], sizes = [8, 128], strides = [1, 1]} : vector<8x384xf32> to vector<8x128xf32>
    %112 = vector.extract_strided_slice %102 {offsets = [0, 128], sizes = [8, 128], strides = [1, 1]} : vector<8x384xf32> to vector<8x128xf32>
    %113 = arith.addf %111, %112 : vector<8x128xf32>
    %114 = arith.negf %113 : vector<8x128xf32>
    %115 = math.exp %114 : vector<8x128xf32>
    %cst_29 = arith.constant 1.000000e+00 : f32
    %116 = vector.broadcast %cst_29 : f32 to vector<8x128xf32>
    %117 = arith.addf %116, %115 : vector<8x128xf32>
    %118 = arith.divf %116, %117 : vector<8x128xf32>
    %119 = vector.extract_strided_slice %101 {offsets = [0, 256], sizes = [8, 128], strides = [1, 1]} : vector<8x384xf32> to vector<8x128xf32>
    %120 = vector.extract_strided_slice %102 {offsets = [0, 256], sizes = [8, 128], strides = [1, 1]} : vector<8x384xf32> to vector<8x128xf32>
    %121 = arith.addf %120, %12 : vector<8x128xf32>
    %122 = arith.mulf %110, %121 : vector<8x128xf32>
    %123 = arith.addf %119, %122 : vector<8x128xf32>
    %124 = math.tanh %123 : vector<8x128xf32>
    %cst_30 = arith.constant 1.000000e+00 : f32
    %125 = vector.broadcast %cst_30 : f32 to vector<8x128xf32>
    %126 = arith.subf %125, %118 : vector<8x128xf32>
    %127 = arith.mulf %126, %124 : vector<8x128xf32>
    %128 = arith.mulf %118, %100 : vector<8x128xf32>
    %129 = arith.addf %127, %128 : vector<8x128xf32>
    %130 = arith.select %30, %129, %100 : vector<8x128xi1>, vector<8x128xf32>
    %c24 = arith.constant 24 : index
    %c0_31 = arith.constant 0 : index
    %131 = vector.load %arg3[%c24, %c0_31] : memref<64x384xf32, #tpu.memory_space<vmem>>, vector<8x384xf32>
    %cst_32 = arith.constant dense<0.000000e+00> : vector<8x384xf32>
    %132 = tpu.matmul %130, %9, %cst_32 {dimension_numbers = #tpu.dot_dimension_numbers<[1], [0], [0], [1], [0, 0, 1, 1], [], []>} : vector<8x128xf32>, vector<128x384xf32>, vector<8x384xf32> -> vector<8x384xf32>
    %133 = vector.extract_strided_slice %131 {offsets = [0, 0], sizes = [8, 128], strides = [1, 1]} : vector<8x384xf32> to vector<8x128xf32>
    %134 = vector.extract_strided_slice %132 {offsets = [0, 0], sizes = [8, 128], strides = [1, 1]} : vector<8x384xf32> to vector<8x128xf32>
    %135 = arith.addf %133, %134 : vector<8x128xf32>
    %136 = arith.negf %135 : vector<8x128xf32>
    %137 = math.exp %136 : vector<8x128xf32>
    %cst_33 = arith.constant 1.000000e+00 : f32
    %138 = vector.broadcast %cst_33 : f32 to vector<8x128xf32>
    %139 = arith.addf %138, %137 : vector<8x128xf32>
    %140 = arith.divf %138, %139 : vector<8x128xf32>
    %141 = vector.extract_strided_slice %131 {offsets = [0, 128], sizes = [8, 128], strides = [1, 1]} : vector<8x384xf32> to vector<8x128xf32>
    %142 = vector.extract_strided_slice %132 {offsets = [0, 128], sizes = [8, 128], strides = [1, 1]} : vector<8x384xf32> to vector<8x128xf32>
    %143 = arith.addf %141, %142 : vector<8x128xf32>
    %144 = arith.negf %143 : vector<8x128xf32>
    %145 = math.exp %144 : vector<8x128xf32>
    %cst_34 = arith.constant 1.000000e+00 : f32
    %146 = vector.broadcast %cst_34 : f32 to vector<8x128xf32>
    %147 = arith.addf %146, %145 : vector<8x128xf32>
    %148 = arith.divf %146, %147 : vector<8x128xf32>
    %149 = vector.extract_strided_slice %131 {offsets = [0, 256], sizes = [8, 128], strides = [1, 1]} : vector<8x384xf32> to vector<8x128xf32>
    %150 = vector.extract_strided_slice %132 {offsets = [0, 256], sizes = [8, 128], strides = [1, 1]} : vector<8x384xf32> to vector<8x128xf32>
    %151 = arith.addf %150, %12 : vector<8x128xf32>
    %152 = arith.mulf %140, %151 : vector<8x128xf32>
    %153 = arith.addf %149, %152 : vector<8x128xf32>
    %154 = math.tanh %153 : vector<8x128xf32>
    %cst_35 = arith.constant 1.000000e+00 : f32
    %155 = vector.broadcast %cst_35 : f32 to vector<8x128xf32>
    %156 = arith.subf %155, %148 : vector<8x128xf32>
    %157 = arith.mulf %156, %154 : vector<8x128xf32>
    %158 = arith.mulf %148, %130 : vector<8x128xf32>
    %159 = arith.addf %157, %158 : vector<8x128xf32>
    %160 = arith.select %32, %159, %130 : vector<8x128xi1>, vector<8x128xf32>
    %c32 = arith.constant 32 : index
    %c0_36 = arith.constant 0 : index
    %161 = vector.load %arg3[%c32, %c0_36] : memref<64x384xf32, #tpu.memory_space<vmem>>, vector<8x384xf32>
    %cst_37 = arith.constant dense<0.000000e+00> : vector<8x384xf32>
    %162 = tpu.matmul %160, %9, %cst_37 {dimension_numbers = #tpu.dot_dimension_numbers<[1], [0], [0], [1], [0, 0, 1, 1], [], []>} : vector<8x128xf32>, vector<128x384xf32>, vector<8x384xf32> -> vector<8x384xf32>
    %163 = vector.extract_strided_slice %161 {offsets = [0, 0], sizes = [8, 128], strides = [1, 1]} : vector<8x384xf32> to vector<8x128xf32>
    %164 = vector.extract_strided_slice %162 {offsets = [0, 0], sizes = [8, 128], strides = [1, 1]} : vector<8x384xf32> to vector<8x128xf32>
    %165 = arith.addf %163, %164 : vector<8x128xf32>
    %166 = arith.negf %165 : vector<8x128xf32>
    %167 = math.exp %166 : vector<8x128xf32>
    %cst_38 = arith.constant 1.000000e+00 : f32
    %168 = vector.broadcast %cst_38 : f32 to vector<8x128xf32>
    %169 = arith.addf %168, %167 : vector<8x128xf32>
    %170 = arith.divf %168, %169 : vector<8x128xf32>
    %171 = vector.extract_strided_slice %161 {offsets = [0, 128], sizes = [8, 128], strides = [1, 1]} : vector<8x384xf32> to vector<8x128xf32>
    %172 = vector.extract_strided_slice %162 {offsets = [0, 128], sizes = [8, 128], strides = [1, 1]} : vector<8x384xf32> to vector<8x128xf32>
    %173 = arith.addf %171, %172 : vector<8x128xf32>
    %174 = arith.negf %173 : vector<8x128xf32>
    %175 = math.exp %174 : vector<8x128xf32>
    %cst_39 = arith.constant 1.000000e+00 : f32
    %176 = vector.broadcast %cst_39 : f32 to vector<8x128xf32>
    %177 = arith.addf %176, %175 : vector<8x128xf32>
    %178 = arith.divf %176, %177 : vector<8x128xf32>
    %179 = vector.extract_strided_slice %161 {offsets = [0, 256], sizes = [8, 128], strides = [1, 1]} : vector<8x384xf32> to vector<8x128xf32>
    %180 = vector.extract_strided_slice %162 {offsets = [0, 256], sizes = [8, 128], strides = [1, 1]} : vector<8x384xf32> to vector<8x128xf32>
    %181 = arith.addf %180, %12 : vector<8x128xf32>
    %182 = arith.mulf %170, %181 : vector<8x128xf32>
    %183 = arith.addf %179, %182 : vector<8x128xf32>
    %184 = math.tanh %183 : vector<8x128xf32>
    %cst_40 = arith.constant 1.000000e+00 : f32
    %185 = vector.broadcast %cst_40 : f32 to vector<8x128xf32>
    %186 = arith.subf %185, %178 : vector<8x128xf32>
    %187 = arith.mulf %186, %184 : vector<8x128xf32>
    %188 = arith.mulf %178, %160 : vector<8x128xf32>
    %189 = arith.addf %187, %188 : vector<8x128xf32>
    %190 = arith.select %34, %189, %160 : vector<8x128xi1>, vector<8x128xf32>
    %c40 = arith.constant 40 : index
    %c0_41 = arith.constant 0 : index
    %191 = vector.load %arg3[%c40, %c0_41] : memref<64x384xf32, #tpu.memory_space<vmem>>, vector<8x384xf32>
    %cst_42 = arith.constant dense<0.000000e+00> : vector<8x384xf32>
    %192 = tpu.matmul %190, %9, %cst_42 {dimension_numbers = #tpu.dot_dimension_numbers<[1], [0], [0], [1], [0, 0, 1, 1], [], []>} : vector<8x128xf32>, vector<128x384xf32>, vector<8x384xf32> -> vector<8x384xf32>
    %193 = vector.extract_strided_slice %191 {offsets = [0, 0], sizes = [8, 128], strides = [1, 1]} : vector<8x384xf32> to vector<8x128xf32>
    %194 = vector.extract_strided_slice %192 {offsets = [0, 0], sizes = [8, 128], strides = [1, 1]} : vector<8x384xf32> to vector<8x128xf32>
    %195 = arith.addf %193, %194 : vector<8x128xf32>
    %196 = arith.negf %195 : vector<8x128xf32>
    %197 = math.exp %196 : vector<8x128xf32>
    %cst_43 = arith.constant 1.000000e+00 : f32
    %198 = vector.broadcast %cst_43 : f32 to vector<8x128xf32>
    %199 = arith.addf %198, %197 : vector<8x128xf32>
    %200 = arith.divf %198, %199 : vector<8x128xf32>
    %201 = vector.extract_strided_slice %191 {offsets = [0, 128], sizes = [8, 128], strides = [1, 1]} : vector<8x384xf32> to vector<8x128xf32>
    %202 = vector.extract_strided_slice %192 {offsets = [0, 128], sizes = [8, 128], strides = [1, 1]} : vector<8x384xf32> to vector<8x128xf32>
    %203 = arith.addf %201, %202 : vector<8x128xf32>
    %204 = arith.negf %203 : vector<8x128xf32>
    %205 = math.exp %204 : vector<8x128xf32>
    %cst_44 = arith.constant 1.000000e+00 : f32
    %206 = vector.broadcast %cst_44 : f32 to vector<8x128xf32>
    %207 = arith.addf %206, %205 : vector<8x128xf32>
    %208 = arith.divf %206, %207 : vector<8x128xf32>
    %209 = vector.extract_strided_slice %191 {offsets = [0, 256], sizes = [8, 128], strides = [1, 1]} : vector<8x384xf32> to vector<8x128xf32>
    %210 = vector.extract_strided_slice %192 {offsets = [0, 256], sizes = [8, 128], strides = [1, 1]} : vector<8x384xf32> to vector<8x128xf32>
    %211 = arith.addf %210, %12 : vector<8x128xf32>
    %212 = arith.mulf %200, %211 : vector<8x128xf32>
    %213 = arith.addf %209, %212 : vector<8x128xf32>
    %214 = math.tanh %213 : vector<8x128xf32>
    %cst_45 = arith.constant 1.000000e+00 : f32
    %215 = vector.broadcast %cst_45 : f32 to vector<8x128xf32>
    %216 = arith.subf %215, %208 : vector<8x128xf32>
    %217 = arith.mulf %216, %214 : vector<8x128xf32>
    %218 = arith.mulf %208, %190 : vector<8x128xf32>
    %219 = arith.addf %217, %218 : vector<8x128xf32>
    %220 = arith.select %36, %219, %190 : vector<8x128xi1>, vector<8x128xf32>
    %c48 = arith.constant 48 : index
    %c0_46 = arith.constant 0 : index
    %221 = vector.load %arg3[%c48, %c0_46] : memref<64x384xf32, #tpu.memory_space<vmem>>, vector<8x384xf32>
    %cst_47 = arith.constant dense<0.000000e+00> : vector<8x384xf32>
    %222 = tpu.matmul %220, %9, %cst_47 {dimension_numbers = #tpu.dot_dimension_numbers<[1], [0], [0], [1], [0, 0, 1, 1], [], []>} : vector<8x128xf32>, vector<128x384xf32>, vector<8x384xf32> -> vector<8x384xf32>
    %223 = vector.extract_strided_slice %221 {offsets = [0, 0], sizes = [8, 128], strides = [1, 1]} : vector<8x384xf32> to vector<8x128xf32>
    %224 = vector.extract_strided_slice %222 {offsets = [0, 0], sizes = [8, 128], strides = [1, 1]} : vector<8x384xf32> to vector<8x128xf32>
    %225 = arith.addf %223, %224 : vector<8x128xf32>
    %226 = arith.negf %225 : vector<8x128xf32>
    %227 = math.exp %226 : vector<8x128xf32>
    %cst_48 = arith.constant 1.000000e+00 : f32
    %228 = vector.broadcast %cst_48 : f32 to vector<8x128xf32>
    %229 = arith.addf %228, %227 : vector<8x128xf32>
    %230 = arith.divf %228, %229 : vector<8x128xf32>
    %231 = vector.extract_strided_slice %221 {offsets = [0, 128], sizes = [8, 128], strides = [1, 1]} : vector<8x384xf32> to vector<8x128xf32>
    %232 = vector.extract_strided_slice %222 {offsets = [0, 128], sizes = [8, 128], strides = [1, 1]} : vector<8x384xf32> to vector<8x128xf32>
    %233 = arith.addf %231, %232 : vector<8x128xf32>
    %234 = arith.negf %233 : vector<8x128xf32>
    %235 = math.exp %234 : vector<8x128xf32>
    %cst_49 = arith.constant 1.000000e+00 : f32
    %236 = vector.broadcast %cst_49 : f32 to vector<8x128xf32>
    %237 = arith.addf %236, %235 : vector<8x128xf32>
    %238 = arith.divf %236, %237 : vector<8x128xf32>
    %239 = vector.extract_strided_slice %221 {offsets = [0, 256], sizes = [8, 128], strides = [1, 1]} : vector<8x384xf32> to vector<8x128xf32>
    %240 = vector.extract_strided_slice %222 {offsets = [0, 256], sizes = [8, 128], strides = [1, 1]} : vector<8x384xf32> to vector<8x128xf32>
    %241 = arith.addf %240, %12 : vector<8x128xf32>
    %242 = arith.mulf %230, %241 : vector<8x128xf32>
    %243 = arith.addf %239, %242 : vector<8x128xf32>
    %244 = math.tanh %243 : vector<8x128xf32>
    %cst_50 = arith.constant 1.000000e+00 : f32
    %245 = vector.broadcast %cst_50 : f32 to vector<8x128xf32>
    %246 = arith.subf %245, %238 : vector<8x128xf32>
    %247 = arith.mulf %246, %244 : vector<8x128xf32>
    %248 = arith.mulf %238, %220 : vector<8x128xf32>
    %249 = arith.addf %247, %248 : vector<8x128xf32>
    %250 = arith.select %38, %249, %220 : vector<8x128xi1>, vector<8x128xf32>
    %c56 = arith.constant 56 : index
    %c0_51 = arith.constant 0 : index
    %251 = vector.load %arg3[%c56, %c0_51] : memref<64x384xf32, #tpu.memory_space<vmem>>, vector<8x384xf32>
    %cst_52 = arith.constant dense<0.000000e+00> : vector<8x384xf32>
    %252 = tpu.matmul %250, %9, %cst_52 {dimension_numbers = #tpu.dot_dimension_numbers<[1], [0], [0], [1], [0, 0, 1, 1], [], []>} : vector<8x128xf32>, vector<128x384xf32>, vector<8x384xf32> -> vector<8x384xf32>
    %253 = vector.extract_strided_slice %251 {offsets = [0, 0], sizes = [8, 128], strides = [1, 1]} : vector<8x384xf32> to vector<8x128xf32>
    %254 = vector.extract_strided_slice %252 {offsets = [0, 0], sizes = [8, 128], strides = [1, 1]} : vector<8x384xf32> to vector<8x128xf32>
    %255 = arith.addf %253, %254 : vector<8x128xf32>
    %256 = arith.negf %255 : vector<8x128xf32>
    %257 = math.exp %256 : vector<8x128xf32>
    %cst_53 = arith.constant 1.000000e+00 : f32
    %258 = vector.broadcast %cst_53 : f32 to vector<8x128xf32>
    %259 = arith.addf %258, %257 : vector<8x128xf32>
    %260 = arith.divf %258, %259 : vector<8x128xf32>
    %261 = vector.extract_strided_slice %251 {offsets = [0, 128], sizes = [8, 128], strides = [1, 1]} : vector<8x384xf32> to vector<8x128xf32>
    %262 = vector.extract_strided_slice %252 {offsets = [0, 128], sizes = [8, 128], strides = [1, 1]} : vector<8x384xf32> to vector<8x128xf32>
    %263 = arith.addf %261, %262 : vector<8x128xf32>
    %264 = arith.negf %263 : vector<8x128xf32>
    %265 = math.exp %264 : vector<8x128xf32>
    %cst_54 = arith.constant 1.000000e+00 : f32
    %266 = vector.broadcast %cst_54 : f32 to vector<8x128xf32>
    %267 = arith.addf %266, %265 : vector<8x128xf32>
    %268 = arith.divf %266, %267 : vector<8x128xf32>
    %269 = vector.extract_strided_slice %251 {offsets = [0, 256], sizes = [8, 128], strides = [1, 1]} : vector<8x384xf32> to vector<8x128xf32>
    %270 = vector.extract_strided_slice %252 {offsets = [0, 256], sizes = [8, 128], strides = [1, 1]} : vector<8x384xf32> to vector<8x128xf32>
    %271 = arith.addf %270, %12 : vector<8x128xf32>
    %272 = arith.mulf %260, %271 : vector<8x128xf32>
    %273 = arith.addf %269, %272 : vector<8x128xf32>
    %274 = math.tanh %273 : vector<8x128xf32>
    %cst_55 = arith.constant 1.000000e+00 : f32
    %275 = vector.broadcast %cst_55 : f32 to vector<8x128xf32>
    %276 = arith.subf %275, %268 : vector<8x128xf32>
    %277 = arith.mulf %276, %274 : vector<8x128xf32>
    %278 = arith.mulf %268, %250 : vector<8x128xf32>
    %279 = arith.addf %277, %278 : vector<8x128xf32>
    %280 = arith.select %40, %279, %250 : vector<8x128xi1>, vector<8x128xf32>
    %cst_56 = arith.constant dense<0.000000e+00> : vector<8x512xf32>
    %281 = tpu.matmul %280, %17, %cst_56 {dimension_numbers = #tpu.dot_dimension_numbers<[1], [0], [0], [1], [0, 0, 1, 1], [], []>} : vector<8x128xf32>, vector<128x512xf32>, vector<8x512xf32> -> vector<8x512xf32>
    %282 = arith.addf %281, %20 : vector<8x512xf32>
    %c0_57 = arith.constant 0 : index
    %c0_58 = arith.constant 0 : index
    %283 = vector.load %arg2[%c0_57, %c0_58] : memref<8x1xi32, #tpu.memory_space<vmem>>, vector<8x1xi32>
    %284 = vector.broadcast %283 : vector<8x1xi32> to vector<8x32xi32>
    %285 = arith.cmpi eq, %0, %284 : vector<8x32xi32>
    %286 = arith.extui %285 : vector<8x32xi1> to vector<8x32xi32>
    %287 = arith.sitofp %286 : vector<8x32xi32> to vector<8x32xf32>
    %true = arith.constant true
    %288 = vector.broadcast %true : i1 to vector<8x1xi1>
    %cst_59 = arith.constant dense<0.000000e+00> : vector<8x384xf32>
    %289 = tpu.matmul %287, %13, %cst_59 {dimension_numbers = #tpu.dot_dimension_numbers<[1], [0], [0], [1], [0, 0, 1, 1], [], []>} : vector<8x32xf32>, vector<32x384xf32>, vector<8x384xf32> -> vector<8x384xf32>
    %290 = arith.addf %289, %16 : vector<8x384xf32>
    %291 = vector.extract_strided_slice %290 {offsets = [0, 0], sizes = [8, 128], strides = [1, 1]} : vector<8x384xf32> to vector<8x128xf32>
    %292 = vector.extract_strided_slice %282 {offsets = [0, 128], sizes = [8, 128], strides = [1, 1]} : vector<8x512xf32> to vector<8x128xf32>
    %293 = arith.addf %291, %292 : vector<8x128xf32>
    %294 = arith.negf %293 : vector<8x128xf32>
    %295 = math.exp %294 : vector<8x128xf32>
    %cst_60 = arith.constant 1.000000e+00 : f32
    %296 = vector.broadcast %cst_60 : f32 to vector<8x128xf32>
    %297 = arith.addf %296, %295 : vector<8x128xf32>
    %298 = arith.divf %296, %297 : vector<8x128xf32>
    %299 = vector.extract_strided_slice %290 {offsets = [0, 128], sizes = [8, 128], strides = [1, 1]} : vector<8x384xf32> to vector<8x128xf32>
    %300 = vector.extract_strided_slice %282 {offsets = [0, 256], sizes = [8, 128], strides = [1, 1]} : vector<8x512xf32> to vector<8x128xf32>
    %301 = arith.addf %299, %300 : vector<8x128xf32>
    %302 = arith.negf %301 : vector<8x128xf32>
    %303 = math.exp %302 : vector<8x128xf32>
    %cst_61 = arith.constant 1.000000e+00 : f32
    %304 = vector.broadcast %cst_61 : f32 to vector<8x128xf32>
    %305 = arith.addf %304, %303 : vector<8x128xf32>
    %306 = arith.divf %304, %305 : vector<8x128xf32>
    %307 = vector.extract_strided_slice %290 {offsets = [0, 256], sizes = [8, 128], strides = [1, 1]} : vector<8x384xf32> to vector<8x128xf32>
    %308 = vector.extract_strided_slice %282 {offsets = [0, 384], sizes = [8, 128], strides = [1, 1]} : vector<8x512xf32> to vector<8x128xf32>
    %309 = arith.mulf %298, %308 : vector<8x128xf32>
    %310 = arith.addf %307, %309 : vector<8x128xf32>
    %311 = math.tanh %310 : vector<8x128xf32>
    %cst_62 = arith.constant 1.000000e+00 : f32
    %312 = vector.broadcast %cst_62 : f32 to vector<8x128xf32>
    %313 = arith.subf %312, %306 : vector<8x128xf32>
    %314 = arith.mulf %313, %311 : vector<8x128xf32>
    %315 = arith.mulf %306, %280 : vector<8x128xf32>
    %316 = arith.addf %314, %315 : vector<8x128xf32>
    %cst_63 = arith.constant dense<0.000000e+00> : vector<8x512xf32>
    %317 = tpu.matmul %316, %17, %cst_63 {dimension_numbers = #tpu.dot_dimension_numbers<[1], [0], [0], [1], [0, 0, 1, 1], [], []>} : vector<8x128xf32>, vector<128x512xf32>, vector<8x512xf32> -> vector<8x512xf32>
    %318 = arith.addf %317, %20 : vector<8x512xf32>
    %319 = vector.extract_strided_slice %318 {offsets = [0, 0], sizes = [8, 128], strides = [1, 1]} : vector<8x512xf32> to vector<8x128xf32>
    %320 = arith.addf %319, %8 : vector<8x128xf32>
    %cst_64 = arith.constant dense<0xFF800000> : vector<8xf32>
    %321 = vector.multi_reduction <maximumf>, %320, %cst_64 [1] : vector<8x128xf32> to vector<8xf32>
    %322 = vector.shape_cast %321 : vector<8xf32> to vector<8x1xf32>
    %323 = vector.broadcast %322 : vector<8x1xf32> to vector<8x128xf32>
    %324 = arith.cmpf oeq, %320, %323 : vector<8x128xf32>
    %325 = vector.extract_strided_slice %324 {offsets = [0, 0], sizes = [8, 32], strides = [1, 1]} : vector<8x128xi1> to vector<8x32xi1>
    %326 = arith.extui %325 : vector<8x32xi1> to vector<8x32xi32>
    %327 = arith.sitofp %326 : vector<8x32xi32> to vector<8x32xf32>
    %c128_i32 = arith.constant 128 : i32
    %328 = vector.broadcast %c128_i32 : i32 to vector<8x128xi32>
    %329 = arith.select %324, %1, %328 : vector<8x128xi1>, vector<8x128xi32>
    %cst_65 = arith.constant dense<2147483647> : vector<8xi32>
    %330 = vector.multi_reduction <minsi>, %329, %cst_65 [1] : vector<8x128xi32> to vector<8xi32>
    %331 = vector.shape_cast %330 : vector<8xi32> to vector<8x1xi32>
    %332 = vector.shape_cast %288 : vector<8x1xi1> to vector<8x1xi1>
    %333 = vector.broadcast %332 : vector<8x1xi1> to vector<8x128xi1>
    %334 = arith.select %333, %319, %5 : vector<8x128xi1>, vector<8x128xf32>
    %c0_66 = arith.constant 0 : index
    %c0_67 = arith.constant 0 : index
    %335 = vector.load %arg10[%c0_66, %c0_67] : memref<8x896xf32, #tpu.memory_space<vmem>>, vector<8x128xf32>
    tpu.vector_store %arg10[%c0_66, %c0_67], %334 {strides = array<i32>} : memref<8x896xf32, #tpu.memory_space<vmem>>, vector<8x128xf32>,
    %c0_i32_68 = arith.constant 0 : i32
    %336 = vector.broadcast %c0_i32_68 : i32 to vector<8x1xi32>
    %337 = arith.select %288, %331, %336 : vector<8x1xi1>, vector<8x1xi32>
    %c27_i32 = arith.constant 27 : i32
    %338 = vector.broadcast %c27_i32 : i32 to vector<8x1xi32>
    %339 = arith.cmpi ne, %331, %338 : vector<8x1xi32>
    %340 = arith.andi %288, %339 : vector<8x1xi1>
    %cst_69 = arith.constant dense<0.000000e+00> : vector<8x384xf32>
    %341 = tpu.matmul %327, %13, %cst_69 {dimension_numbers = #tpu.dot_dimension_numbers<[1], [0], [0], [1], [0, 0, 1, 1], [], []>} : vector<8x32xf32>, vector<32x384xf32>, vector<8x384xf32> -> vector<8x384xf32>
    %342 = arith.addf %341, %16 : vector<8x384xf32>
    %343 = vector.extract_strided_slice %342 {offsets = [0, 0], sizes = [8, 128], strides = [1, 1]} : vector<8x384xf32> to vector<8x128xf32>
    %344 = vector.extract_strided_slice %318 {offsets = [0, 128], sizes = [8, 128], strides = [1, 1]} : vector<8x512xf32> to vector<8x128xf32>
    %345 = arith.addf %343, %344 : vector<8x128xf32>
    %346 = arith.negf %345 : vector<8x128xf32>
    %347 = math.exp %346 : vector<8x128xf32>
    %cst_70 = arith.constant 1.000000e+00 : f32
    %348 = vector.broadcast %cst_70 : f32 to vector<8x128xf32>
    %349 = arith.addf %348, %347 : vector<8x128xf32>
    %350 = arith.divf %348, %349 : vector<8x128xf32>
    %351 = vector.extract_strided_slice %342 {offsets = [0, 128], sizes = [8, 128], strides = [1, 1]} : vector<8x384xf32> to vector<8x128xf32>
    %352 = vector.extract_strided_slice %318 {offsets = [0, 256], sizes = [8, 128], strides = [1, 1]} : vector<8x512xf32> to vector<8x128xf32>
    %353 = arith.addf %351, %352 : vector<8x128xf32>
    %354 = arith.negf %353 : vector<8x128xf32>
    %355 = math.exp %354 : vector<8x128xf32>
    %cst_71 = arith.constant 1.000000e+00 : f32
    %356 = vector.broadcast %cst_71 : f32 to vector<8x128xf32>
    %357 = arith.addf %356, %355 : vector<8x128xf32>
    %358 = arith.divf %356, %357 : vector<8x128xf32>
    %359 = vector.extract_strided_slice %342 {offsets = [0, 256], sizes = [8, 128], strides = [1, 1]} : vector<8x384xf32> to vector<8x128xf32>
    %360 = vector.extract_strided_slice %318 {offsets = [0, 384], sizes = [8, 128], strides = [1, 1]} : vector<8x512xf32> to vector<8x128xf32>
    %361 = arith.mulf %350, %360 : vector<8x128xf32>
    %362 = arith.addf %359, %361 : vector<8x128xf32>
    %363 = math.tanh %362 : vector<8x128xf32>
    %cst_72 = arith.constant 1.000000e+00 : f32
    %364 = vector.broadcast %cst_72 : f32 to vector<8x128xf32>
    %365 = arith.subf %364, %358 : vector<8x128xf32>
    %366 = arith.mulf %365, %363 : vector<8x128xf32>
    %367 = arith.mulf %358, %316 : vector<8x128xf32>
    %368 = arith.addf %366, %367 : vector<8x128xf32>
    %cst_73 = arith.constant dense<0.000000e+00> : vector<8x512xf32>
    %369 = tpu.matmul %368, %17, %cst_73 {dimension_numbers = #tpu.dot_dimension_numbers<[1], [0], [0], [1], [0, 0, 1, 1], [], []>} : vector<8x128xf32>, vector<128x512xf32>, vector<8x512xf32> -> vector<8x512xf32>
    %370 = arith.addf %369, %20 : vector<8x512xf32>
    %371 = vector.extract_strided_slice %370 {offsets = [0, 0], sizes = [8, 128], strides = [1, 1]} : vector<8x512xf32> to vector<8x128xf32>
    %372 = arith.addf %371, %8 : vector<8x128xf32>
    %cst_74 = arith.constant dense<0xFF800000> : vector<8xf32>
    %373 = vector.multi_reduction <maximumf>, %372, %cst_74 [1] : vector<8x128xf32> to vector<8xf32>
    %374 = vector.shape_cast %373 : vector<8xf32> to vector<8x1xf32>
    %375 = vector.broadcast %374 : vector<8x1xf32> to vector<8x128xf32>
    %376 = arith.cmpf oeq, %372, %375 : vector<8x128xf32>
    %377 = vector.extract_strided_slice %376 {offsets = [0, 0], sizes = [8, 32], strides = [1, 1]} : vector<8x128xi1> to vector<8x32xi1>
    %378 = arith.extui %377 : vector<8x32xi1> to vector<8x32xi32>
    %379 = arith.sitofp %378 : vector<8x32xi32> to vector<8x32xf32>
    %c128_i32_75 = arith.constant 128 : i32
    %380 = vector.broadcast %c128_i32_75 : i32 to vector<8x128xi32>
    %381 = arith.select %376, %1, %380 : vector<8x128xi1>, vector<8x128xi32>
    %cst_76 = arith.constant dense<2147483647> : vector<8xi32>
    %382 = vector.multi_reduction <minsi>, %381, %cst_76 [1] : vector<8x128xi32> to vector<8xi32>
    %383 = vector.shape_cast %382 : vector<8xi32> to vector<8x1xi32>
    %384 = vector.shape_cast %340 : vector<8x1xi1> to vector<8x1xi1>
    %385 = vector.broadcast %384 : vector<8x1xi1> to vector<8x128xi1>
    %386 = arith.select %385, %371, %5 : vector<8x128xi1>, vector<8x128xf32>
    %c0_77 = arith.constant 0 : index
    %c128 = arith.constant 128 : index
    %387 = vector.load %arg10[%c0_77, %c128] : memref<8x896xf32, #tpu.memory_space<vmem>>, vector<8x128xf32>
    tpu.vector_store %arg10[%c0_77, %c128], %386 {strides = array<i32>} : memref<8x896xf32, #tpu.memory_space<vmem>>, vector<8x128xf32>,
    %c0_i32_78 = arith.constant 0 : i32
    %388 = vector.broadcast %c0_i32_78 : i32 to vector<8x1xi32>
    %389 = arith.select %340, %383, %388 : vector<8x1xi1>, vector<8x1xi32>
    %c27_i32_79 = arith.constant 27 : i32
    %390 = vector.broadcast %c27_i32_79 : i32 to vector<8x1xi32>
    %391 = arith.cmpi ne, %383, %390 : vector<8x1xi32>
    %392 = arith.andi %340, %391 : vector<8x1xi1>
    %cst_80 = arith.constant dense<0.000000e+00> : vector<8x384xf32>
    %393 = tpu.matmul %379, %13, %cst_80 {dimension_numbers = #tpu.dot_dimension_numbers<[1], [0], [0], [1], [0, 0, 1, 1], [], []>} : vector<8x32xf32>, vector<32x384xf32>, vector<8x384xf32> -> vector<8x384xf32>
    %394 = arith.addf %393, %16 : vector<8x384xf32>
    %395 = vector.extract_strided_slice %394 {offsets = [0, 0], sizes = [8, 128], strides = [1, 1]} : vector<8x384xf32> to vector<8x128xf32>
    %396 = vector.extract_strided_slice %370 {offsets = [0, 128], sizes = [8, 128], strides = [1, 1]} : vector<8x512xf32> to vector<8x128xf32>
    %397 = arith.addf %395, %396 : vector<8x128xf32>
    %398 = arith.negf %397 : vector<8x128xf32>
    %399 = math.exp %398 : vector<8x128xf32>
    %cst_81 = arith.constant 1.000000e+00 : f32
    %400 = vector.broadcast %cst_81 : f32 to vector<8x128xf32>
    %401 = arith.addf %400, %399 : vector<8x128xf32>
    %402 = arith.divf %400, %401 : vector<8x128xf32>
    %403 = vector.extract_strided_slice %394 {offsets = [0, 128], sizes = [8, 128], strides = [1, 1]} : vector<8x384xf32> to vector<8x128xf32>
    %404 = vector.extract_strided_slice %370 {offsets = [0, 256], sizes = [8, 128], strides = [1, 1]} : vector<8x512xf32> to vector<8x128xf32>
    %405 = arith.addf %403, %404 : vector<8x128xf32>
    %406 = arith.negf %405 : vector<8x128xf32>
    %407 = math.exp %406 : vector<8x128xf32>
    %cst_82 = arith.constant 1.000000e+00 : f32
    %408 = vector.broadcast %cst_82 : f32 to vector<8x128xf32>
    %409 = arith.addf %408, %407 : vector<8x128xf32>
    %410 = arith.divf %408, %409 : vector<8x128xf32>
    %411 = vector.extract_strided_slice %394 {offsets = [0, 256], sizes = [8, 128], strides = [1, 1]} : vector<8x384xf32> to vector<8x128xf32>
    %412 = vector.extract_strided_slice %370 {offsets = [0, 384], sizes = [8, 128], strides = [1, 1]} : vector<8x512xf32> to vector<8x128xf32>
    %413 = arith.mulf %402, %412 : vector<8x128xf32>
    %414 = arith.addf %411, %413 : vector<8x128xf32>
    %415 = math.tanh %414 : vector<8x128xf32>
    %cst_83 = arith.constant 1.000000e+00 : f32
    %416 = vector.broadcast %cst_83 : f32 to vector<8x128xf32>
    %417 = arith.subf %416, %410 : vector<8x128xf32>
    %418 = arith.mulf %417, %415 : vector<8x128xf32>
    %419 = arith.mulf %410, %368 : vector<8x128xf32>
    %420 = arith.addf %418, %419 : vector<8x128xf32>
    %cst_84 = arith.constant dense<0.000000e+00> : vector<8x512xf32>
    %421 = tpu.matmul %420, %17, %cst_84 {dimension_numbers = #tpu.dot_dimension_numbers<[1], [0], [0], [1], [0, 0, 1, 1], [], []>} : vector<8x128xf32>, vector<128x512xf32>, vector<8x512xf32> -> vector<8x512xf32>
    %422 = arith.addf %421, %20 : vector<8x512xf32>
    %423 = vector.extract_strided_slice %422 {offsets = [0, 0], sizes = [8, 128], strides = [1, 1]} : vector<8x512xf32> to vector<8x128xf32>
    %424 = arith.addf %423, %8 : vector<8x128xf32>
    %cst_85 = arith.constant dense<0xFF800000> : vector<8xf32>
    %425 = vector.multi_reduction <maximumf>, %424, %cst_85 [1] : vector<8x128xf32> to vector<8xf32>
    %426 = vector.shape_cast %425 : vector<8xf32> to vector<8x1xf32>
    %427 = vector.broadcast %426 : vector<8x1xf32> to vector<8x128xf32>
    %428 = arith.cmpf oeq, %424, %427 : vector<8x128xf32>
    %429 = vector.extract_strided_slice %428 {offsets = [0, 0], sizes = [8, 32], strides = [1, 1]} : vector<8x128xi1> to vector<8x32xi1>
    %430 = arith.extui %429 : vector<8x32xi1> to vector<8x32xi32>
    %431 = arith.sitofp %430 : vector<8x32xi32> to vector<8x32xf32>
    %c128_i32_86 = arith.constant 128 : i32
    %432 = vector.broadcast %c128_i32_86 : i32 to vector<8x128xi32>
    %433 = arith.select %428, %1, %432 : vector<8x128xi1>, vector<8x128xi32>
    %cst_87 = arith.constant dense<2147483647> : vector<8xi32>
    %434 = vector.multi_reduction <minsi>, %433, %cst_87 [1] : vector<8x128xi32> to vector<8xi32>
    %435 = vector.shape_cast %434 : vector<8xi32> to vector<8x1xi32>
    %436 = vector.shape_cast %392 : vector<8x1xi1> to vector<8x1xi1>
    %437 = vector.broadcast %436 : vector<8x1xi1> to vector<8x128xi1>
    %438 = arith.select %437, %423, %5 : vector<8x128xi1>, vector<8x128xf32>
    %c0_88 = arith.constant 0 : index
    %c256 = arith.constant 256 : index
    %439 = vector.load %arg10[%c0_88, %c256] : memref<8x896xf32, #tpu.memory_space<vmem>>, vector<8x128xf32>
    tpu.vector_store %arg10[%c0_88, %c256], %438 {strides = array<i32>} : memref<8x896xf32, #tpu.memory_space<vmem>>, vector<8x128xf32>,
    %c0_i32_89 = arith.constant 0 : i32
    %440 = vector.broadcast %c0_i32_89 : i32 to vector<8x1xi32>
    %441 = arith.select %392, %435, %440 : vector<8x1xi1>, vector<8x1xi32>
    %c27_i32_90 = arith.constant 27 : i32
    %442 = vector.broadcast %c27_i32_90 : i32 to vector<8x1xi32>
    %443 = arith.cmpi ne, %435, %442 : vector<8x1xi32>
    %444 = arith.andi %392, %443 : vector<8x1xi1>
    %cst_91 = arith.constant dense<0.000000e+00> : vector<8x384xf32>
    %445 = tpu.matmul %431, %13, %cst_91 {dimension_numbers = #tpu.dot_dimension_numbers<[1], [0], [0], [1], [0, 0, 1, 1], [], []>} : vector<8x32xf32>, vector<32x384xf32>, vector<8x384xf32> -> vector<8x384xf32>
    %446 = arith.addf %445, %16 : vector<8x384xf32>
    %447 = vector.extract_strided_slice %446 {offsets = [0, 0], sizes = [8, 128], strides = [1, 1]} : vector<8x384xf32> to vector<8x128xf32>
    %448 = vector.extract_strided_slice %422 {offsets = [0, 128], sizes = [8, 128], strides = [1, 1]} : vector<8x512xf32> to vector<8x128xf32>
    %449 = arith.addf %447, %448 : vector<8x128xf32>
    %450 = arith.negf %449 : vector<8x128xf32>
    %451 = math.exp %450 : vector<8x128xf32>
    %cst_92 = arith.constant 1.000000e+00 : f32
    %452 = vector.broadcast %cst_92 : f32 to vector<8x128xf32>
    %453 = arith.addf %452, %451 : vector<8x128xf32>
    %454 = arith.divf %452, %453 : vector<8x128xf32>
    %455 = vector.extract_strided_slice %446 {offsets = [0, 128], sizes = [8, 128], strides = [1, 1]} : vector<8x384xf32> to vector<8x128xf32>
    %456 = vector.extract_strided_slice %422 {offsets = [0, 256], sizes = [8, 128], strides = [1, 1]} : vector<8x512xf32> to vector<8x128xf32>
    %457 = arith.addf %455, %456 : vector<8x128xf32>
    %458 = arith.negf %457 : vector<8x128xf32>
    %459 = math.exp %458 : vector<8x128xf32>
    %cst_93 = arith.constant 1.000000e+00 : f32
    %460 = vector.broadcast %cst_93 : f32 to vector<8x128xf32>
    %461 = arith.addf %460, %459 : vector<8x128xf32>
    %462 = arith.divf %460, %461 : vector<8x128xf32>
    %463 = vector.extract_strided_slice %446 {offsets = [0, 256], sizes = [8, 128], strides = [1, 1]} : vector<8x384xf32> to vector<8x128xf32>
    %464 = vector.extract_strided_slice %422 {offsets = [0, 384], sizes = [8, 128], strides = [1, 1]} : vector<8x512xf32> to vector<8x128xf32>
    %465 = arith.mulf %454, %464 : vector<8x128xf32>
    %466 = arith.addf %463, %465 : vector<8x128xf32>
    %467 = math.tanh %466 : vector<8x128xf32>
    %cst_94 = arith.constant 1.000000e+00 : f32
    %468 = vector.broadcast %cst_94 : f32 to vector<8x128xf32>
    %469 = arith.subf %468, %462 : vector<8x128xf32>
    %470 = arith.mulf %469, %467 : vector<8x128xf32>
    %471 = arith.mulf %462, %420 : vector<8x128xf32>
    %472 = arith.addf %470, %471 : vector<8x128xf32>
    %cst_95 = arith.constant dense<0.000000e+00> : vector<8x512xf32>
    %473 = tpu.matmul %472, %17, %cst_95 {dimension_numbers = #tpu.dot_dimension_numbers<[1], [0], [0], [1], [0, 0, 1, 1], [], []>} : vector<8x128xf32>, vector<128x512xf32>, vector<8x512xf32> -> vector<8x512xf32>
    %474 = arith.addf %473, %20 : vector<8x512xf32>
    %475 = vector.extract_strided_slice %474 {offsets = [0, 0], sizes = [8, 128], strides = [1, 1]} : vector<8x512xf32> to vector<8x128xf32>
    %476 = arith.addf %475, %8 : vector<8x128xf32>
    %cst_96 = arith.constant dense<0xFF800000> : vector<8xf32>
    %477 = vector.multi_reduction <maximumf>, %476, %cst_96 [1] : vector<8x128xf32> to vector<8xf32>
    %478 = vector.shape_cast %477 : vector<8xf32> to vector<8x1xf32>
    %479 = vector.broadcast %478 : vector<8x1xf32> to vector<8x128xf32>
    %480 = arith.cmpf oeq, %476, %479 : vector<8x128xf32>
    %481 = vector.extract_strided_slice %480 {offsets = [0, 0], sizes = [8, 32], strides = [1, 1]} : vector<8x128xi1> to vector<8x32xi1>
    %482 = arith.extui %481 : vector<8x32xi1> to vector<8x32xi32>
    %483 = arith.sitofp %482 : vector<8x32xi32> to vector<8x32xf32>
    %c128_i32_97 = arith.constant 128 : i32
    %484 = vector.broadcast %c128_i32_97 : i32 to vector<8x128xi32>
    %485 = arith.select %480, %1, %484 : vector<8x128xi1>, vector<8x128xi32>
    %cst_98 = arith.constant dense<2147483647> : vector<8xi32>
    %486 = vector.multi_reduction <minsi>, %485, %cst_98 [1] : vector<8x128xi32> to vector<8xi32>
    %487 = vector.shape_cast %486 : vector<8xi32> to vector<8x1xi32>
    %488 = vector.shape_cast %444 : vector<8x1xi1> to vector<8x1xi1>
    %489 = vector.broadcast %488 : vector<8x1xi1> to vector<8x128xi1>
    %490 = arith.select %489, %475, %5 : vector<8x128xi1>, vector<8x128xf32>
    %c0_99 = arith.constant 0 : index
    %c384 = arith.constant 384 : index
    %491 = vector.load %arg10[%c0_99, %c384] : memref<8x896xf32, #tpu.memory_space<vmem>>, vector<8x128xf32>
    tpu.vector_store %arg10[%c0_99, %c384], %490 {strides = array<i32>} : memref<8x896xf32, #tpu.memory_space<vmem>>, vector<8x128xf32>,
    %c0_i32_100 = arith.constant 0 : i32
    %492 = vector.broadcast %c0_i32_100 : i32 to vector<8x1xi32>
    %493 = arith.select %444, %487, %492 : vector<8x1xi1>, vector<8x1xi32>
    %c27_i32_101 = arith.constant 27 : i32
    %494 = vector.broadcast %c27_i32_101 : i32 to vector<8x1xi32>
    %495 = arith.cmpi ne, %487, %494 : vector<8x1xi32>
    %496 = arith.andi %444, %495 : vector<8x1xi1>
    %cst_102 = arith.constant dense<0.000000e+00> : vector<8x384xf32>
    %497 = tpu.matmul %483, %13, %cst_102 {dimension_numbers = #tpu.dot_dimension_numbers<[1], [0], [0], [1], [0, 0, 1, 1], [], []>} : vector<8x32xf32>, vector<32x384xf32>, vector<8x384xf32> -> vector<8x384xf32>
    %498 = arith.addf %497, %16 : vector<8x384xf32>
    %499 = vector.extract_strided_slice %498 {offsets = [0, 0], sizes = [8, 128], strides = [1, 1]} : vector<8x384xf32> to vector<8x128xf32>
    %500 = vector.extract_strided_slice %474 {offsets = [0, 128], sizes = [8, 128], strides = [1, 1]} : vector<8x512xf32> to vector<8x128xf32>
    %501 = arith.addf %499, %500 : vector<8x128xf32>
    %502 = arith.negf %501 : vector<8x128xf32>
    %503 = math.exp %502 : vector<8x128xf32>
    %cst_103 = arith.constant 1.000000e+00 : f32
    %504 = vector.broadcast %cst_103 : f32 to vector<8x128xf32>
    %505 = arith.addf %504, %503 : vector<8x128xf32>
    %506 = arith.divf %504, %505 : vector<8x128xf32>
    %507 = vector.extract_strided_slice %498 {offsets = [0, 128], sizes = [8, 128], strides = [1, 1]} : vector<8x384xf32> to vector<8x128xf32>
    %508 = vector.extract_strided_slice %474 {offsets = [0, 256], sizes = [8, 128], strides = [1, 1]} : vector<8x512xf32> to vector<8x128xf32>
    %509 = arith.addf %507, %508 : vector<8x128xf32>
    %510 = arith.negf %509 : vector<8x128xf32>
    %511 = math.exp %510 : vector<8x128xf32>
    %cst_104 = arith.constant 1.000000e+00 : f32
    %512 = vector.broadcast %cst_104 : f32 to vector<8x128xf32>
    %513 = arith.addf %512, %511 : vector<8x128xf32>
    %514 = arith.divf %512, %513 : vector<8x128xf32>
    %515 = vector.extract_strided_slice %498 {offsets = [0, 256], sizes = [8, 128], strides = [1, 1]} : vector<8x384xf32> to vector<8x128xf32>
    %516 = vector.extract_strided_slice %474 {offsets = [0, 384], sizes = [8, 128], strides = [1, 1]} : vector<8x512xf32> to vector<8x128xf32>
    %517 = arith.mulf %506, %516 : vector<8x128xf32>
    %518 = arith.addf %515, %517 : vector<8x128xf32>
    %519 = math.tanh %518 : vector<8x128xf32>
    %cst_105 = arith.constant 1.000000e+00 : f32
    %520 = vector.broadcast %cst_105 : f32 to vector<8x128xf32>
    %521 = arith.subf %520, %514 : vector<8x128xf32>
    %522 = arith.mulf %521, %519 : vector<8x128xf32>
    %523 = arith.mulf %514, %472 : vector<8x128xf32>
    %524 = arith.addf %522, %523 : vector<8x128xf32>
    %cst_106 = arith.constant dense<0.000000e+00> : vector<8x512xf32>
    %525 = tpu.matmul %524, %17, %cst_106 {dimension_numbers = #tpu.dot_dimension_numbers<[1], [0], [0], [1], [0, 0, 1, 1], [], []>} : vector<8x128xf32>, vector<128x512xf32>, vector<8x512xf32> -> vector<8x512xf32>
    %526 = arith.addf %525, %20 : vector<8x512xf32>
    %527 = vector.extract_strided_slice %526 {offsets = [0, 0], sizes = [8, 128], strides = [1, 1]} : vector<8x512xf32> to vector<8x128xf32>
    %528 = arith.addf %527, %8 : vector<8x128xf32>
    %cst_107 = arith.constant dense<0xFF800000> : vector<8xf32>
    %529 = vector.multi_reduction <maximumf>, %528, %cst_107 [1] : vector<8x128xf32> to vector<8xf32>
    %530 = vector.shape_cast %529 : vector<8xf32> to vector<8x1xf32>
    %531 = vector.broadcast %530 : vector<8x1xf32> to vector<8x128xf32>
    %532 = arith.cmpf oeq, %528, %531 : vector<8x128xf32>
    %533 = vector.extract_strided_slice %532 {offsets = [0, 0], sizes = [8, 32], strides = [1, 1]} : vector<8x128xi1> to vector<8x32xi1>
    %534 = arith.extui %533 : vector<8x32xi1> to vector<8x32xi32>
    %535 = arith.sitofp %534 : vector<8x32xi32> to vector<8x32xf32>
    %c128_i32_108 = arith.constant 128 : i32
    %536 = vector.broadcast %c128_i32_108 : i32 to vector<8x128xi32>
    %537 = arith.select %532, %1, %536 : vector<8x128xi1>, vector<8x128xi32>
    %cst_109 = arith.constant dense<2147483647> : vector<8xi32>
    %538 = vector.multi_reduction <minsi>, %537, %cst_109 [1] : vector<8x128xi32> to vector<8xi32>
    %539 = vector.shape_cast %538 : vector<8xi32> to vector<8x1xi32>
    %540 = vector.shape_cast %496 : vector<8x1xi1> to vector<8x1xi1>
    %541 = vector.broadcast %540 : vector<8x1xi1> to vector<8x128xi1>
    %542 = arith.select %541, %527, %5 : vector<8x128xi1>, vector<8x128xf32>
    %c0_110 = arith.constant 0 : index
    %c512 = arith.constant 512 : index
    %543 = vector.load %arg10[%c0_110, %c512] : memref<8x896xf32, #tpu.memory_space<vmem>>, vector<8x128xf32>
    tpu.vector_store %arg10[%c0_110, %c512], %542 {strides = array<i32>} : memref<8x896xf32, #tpu.memory_space<vmem>>, vector<8x128xf32>,
    %c0_i32_111 = arith.constant 0 : i32
    %544 = vector.broadcast %c0_i32_111 : i32 to vector<8x1xi32>
    %545 = arith.select %496, %539, %544 : vector<8x1xi1>, vector<8x1xi32>
    %c27_i32_112 = arith.constant 27 : i32
    %546 = vector.broadcast %c27_i32_112 : i32 to vector<8x1xi32>
    %547 = arith.cmpi ne, %539, %546 : vector<8x1xi32>
    %548 = arith.andi %496, %547 : vector<8x1xi1>
    %cst_113 = arith.constant dense<0.000000e+00> : vector<8x384xf32>
    %549 = tpu.matmul %535, %13, %cst_113 {dimension_numbers = #tpu.dot_dimension_numbers<[1], [0], [0], [1], [0, 0, 1, 1], [], []>} : vector<8x32xf32>, vector<32x384xf32>, vector<8x384xf32> -> vector<8x384xf32>
    %550 = arith.addf %549, %16 : vector<8x384xf32>
    %551 = vector.extract_strided_slice %550 {offsets = [0, 0], sizes = [8, 128], strides = [1, 1]} : vector<8x384xf32> to vector<8x128xf32>
    %552 = vector.extract_strided_slice %526 {offsets = [0, 128], sizes = [8, 128], strides = [1, 1]} : vector<8x512xf32> to vector<8x128xf32>
    %553 = arith.addf %551, %552 : vector<8x128xf32>
    %554 = arith.negf %553 : vector<8x128xf32>
    %555 = math.exp %554 : vector<8x128xf32>
    %cst_114 = arith.constant 1.000000e+00 : f32
    %556 = vector.broadcast %cst_114 : f32 to vector<8x128xf32>
    %557 = arith.addf %556, %555 : vector<8x128xf32>
    %558 = arith.divf %556, %557 : vector<8x128xf32>
    %559 = vector.extract_strided_slice %550 {offsets = [0, 128], sizes = [8, 128], strides = [1, 1]} : vector<8x384xf32> to vector<8x128xf32>
    %560 = vector.extract_strided_slice %526 {offsets = [0, 256], sizes = [8, 128], strides = [1, 1]} : vector<8x512xf32> to vector<8x128xf32>
    %561 = arith.addf %559, %560 : vector<8x128xf32>
    %562 = arith.negf %561 : vector<8x128xf32>
    %563 = math.exp %562 : vector<8x128xf32>
    %cst_115 = arith.constant 1.000000e+00 : f32
    %564 = vector.broadcast %cst_115 : f32 to vector<8x128xf32>
    %565 = arith.addf %564, %563 : vector<8x128xf32>
    %566 = arith.divf %564, %565 : vector<8x128xf32>
    %567 = vector.extract_strided_slice %550 {offsets = [0, 256], sizes = [8, 128], strides = [1, 1]} : vector<8x384xf32> to vector<8x128xf32>
    %568 = vector.extract_strided_slice %526 {offsets = [0, 384], sizes = [8, 128], strides = [1, 1]} : vector<8x512xf32> to vector<8x128xf32>
    %569 = arith.mulf %558, %568 : vector<8x128xf32>
    %570 = arith.addf %567, %569 : vector<8x128xf32>
    %571 = math.tanh %570 : vector<8x128xf32>
    %cst_116 = arith.constant 1.000000e+00 : f32
    %572 = vector.broadcast %cst_116 : f32 to vector<8x128xf32>
    %573 = arith.subf %572, %566 : vector<8x128xf32>
    %574 = arith.mulf %573, %571 : vector<8x128xf32>
    %575 = arith.mulf %566, %524 : vector<8x128xf32>
    %576 = arith.addf %574, %575 : vector<8x128xf32>
    %cst_117 = arith.constant dense<0.000000e+00> : vector<8x512xf32>
    %577 = tpu.matmul %576, %17, %cst_117 {dimension_numbers = #tpu.dot_dimension_numbers<[1], [0], [0], [1], [0, 0, 1, 1], [], []>} : vector<8x128xf32>, vector<128x512xf32>, vector<8x512xf32> -> vector<8x512xf32>
    %578 = arith.addf %577, %20 : vector<8x512xf32>
    %579 = vector.extract_strided_slice %578 {offsets = [0, 0], sizes = [8, 128], strides = [1, 1]} : vector<8x512xf32> to vector<8x128xf32>
    %580 = arith.addf %579, %8 : vector<8x128xf32>
    %cst_118 = arith.constant dense<0xFF800000> : vector<8xf32>
    %581 = vector.multi_reduction <maximumf>, %580, %cst_118 [1] : vector<8x128xf32> to vector<8xf32>
    %582 = vector.shape_cast %581 : vector<8xf32> to vector<8x1xf32>
    %583 = vector.broadcast %582 : vector<8x1xf32> to vector<8x128xf32>
    %584 = arith.cmpf oeq, %580, %583 : vector<8x128xf32>
    %585 = vector.extract_strided_slice %584 {offsets = [0, 0], sizes = [8, 32], strides = [1, 1]} : vector<8x128xi1> to vector<8x32xi1>
    %586 = arith.extui %585 : vector<8x32xi1> to vector<8x32xi32>
    %587 = arith.sitofp %586 : vector<8x32xi32> to vector<8x32xf32>
    %c128_i32_119 = arith.constant 128 : i32
    %588 = vector.broadcast %c128_i32_119 : i32 to vector<8x128xi32>
    %589 = arith.select %584, %1, %588 : vector<8x128xi1>, vector<8x128xi32>
    %cst_120 = arith.constant dense<2147483647> : vector<8xi32>
    %590 = vector.multi_reduction <minsi>, %589, %cst_120 [1] : vector<8x128xi32> to vector<8xi32>
    %591 = vector.shape_cast %590 : vector<8xi32> to vector<8x1xi32>
    %592 = vector.shape_cast %548 : vector<8x1xi1> to vector<8x1xi1>
    %593 = vector.broadcast %592 : vector<8x1xi1> to vector<8x128xi1>
    %594 = arith.select %593, %579, %5 : vector<8x128xi1>, vector<8x128xf32>
    %c0_121 = arith.constant 0 : index
    %c640 = arith.constant 640 : index
    %595 = vector.load %arg10[%c0_121, %c640] : memref<8x896xf32, #tpu.memory_space<vmem>>, vector<8x128xf32>
    tpu.vector_store %arg10[%c0_121, %c640], %594 {strides = array<i32>} : memref<8x896xf32, #tpu.memory_space<vmem>>, vector<8x128xf32>,
    %c0_i32_122 = arith.constant 0 : i32
    %596 = vector.broadcast %c0_i32_122 : i32 to vector<8x1xi32>
    %597 = arith.select %548, %591, %596 : vector<8x1xi1>, vector<8x1xi32>
    %c27_i32_123 = arith.constant 27 : i32
    %598 = vector.broadcast %c27_i32_123 : i32 to vector<8x1xi32>
    %599 = arith.cmpi ne, %591, %598 : vector<8x1xi32>
    %600 = arith.andi %548, %599 : vector<8x1xi1>
    %cst_124 = arith.constant dense<0.000000e+00> : vector<8x384xf32>
    %601 = tpu.matmul %587, %13, %cst_124 {dimension_numbers = #tpu.dot_dimension_numbers<[1], [0], [0], [1], [0, 0, 1, 1], [], []>} : vector<8x32xf32>, vector<32x384xf32>, vector<8x384xf32> -> vector<8x384xf32>
    %602 = arith.addf %601, %16 : vector<8x384xf32>
    %603 = vector.extract_strided_slice %602 {offsets = [0, 0], sizes = [8, 128], strides = [1, 1]} : vector<8x384xf32> to vector<8x128xf32>
    %604 = vector.extract_strided_slice %578 {offsets = [0, 128], sizes = [8, 128], strides = [1, 1]} : vector<8x512xf32> to vector<8x128xf32>
    %605 = arith.addf %603, %604 : vector<8x128xf32>
    %606 = arith.negf %605 : vector<8x128xf32>
    %607 = math.exp %606 : vector<8x128xf32>
    %cst_125 = arith.constant 1.000000e+00 : f32
    %608 = vector.broadcast %cst_125 : f32 to vector<8x128xf32>
    %609 = arith.addf %608, %607 : vector<8x128xf32>
    %610 = arith.divf %608, %609 : vector<8x128xf32>
    %611 = vector.extract_strided_slice %602 {offsets = [0, 128], sizes = [8, 128], strides = [1, 1]} : vector<8x384xf32> to vector<8x128xf32>
    %612 = vector.extract_strided_slice %578 {offsets = [0, 256], sizes = [8, 128], strides = [1, 1]} : vector<8x512xf32> to vector<8x128xf32>
    %613 = arith.addf %611, %612 : vector<8x128xf32>
    %614 = arith.negf %613 : vector<8x128xf32>
    %615 = math.exp %614 : vector<8x128xf32>
    %cst_126 = arith.constant 1.000000e+00 : f32
    %616 = vector.broadcast %cst_126 : f32 to vector<8x128xf32>
    %617 = arith.addf %616, %615 : vector<8x128xf32>
    %618 = arith.divf %616, %617 : vector<8x128xf32>
    %619 = vector.extract_strided_slice %602 {offsets = [0, 256], sizes = [8, 128], strides = [1, 1]} : vector<8x384xf32> to vector<8x128xf32>
    %620 = vector.extract_strided_slice %578 {offsets = [0, 384], sizes = [8, 128], strides = [1, 1]} : vector<8x512xf32> to vector<8x128xf32>
    %621 = arith.mulf %610, %620 : vector<8x128xf32>
    %622 = arith.addf %619, %621 : vector<8x128xf32>
    %623 = math.tanh %622 : vector<8x128xf32>
    %cst_127 = arith.constant 1.000000e+00 : f32
    %624 = vector.broadcast %cst_127 : f32 to vector<8x128xf32>
    %625 = arith.subf %624, %618 : vector<8x128xf32>
    %626 = arith.mulf %625, %623 : vector<8x128xf32>
    %627 = arith.mulf %618, %576 : vector<8x128xf32>
    %628 = arith.addf %626, %627 : vector<8x128xf32>
    %cst_128 = arith.constant dense<0.000000e+00> : vector<8x512xf32>
    %629 = tpu.matmul %628, %17, %cst_128 {dimension_numbers = #tpu.dot_dimension_numbers<[1], [0], [0], [1], [0, 0, 1, 1], [], []>} : vector<8x128xf32>, vector<128x512xf32>, vector<8x512xf32> -> vector<8x512xf32>
    %630 = arith.addf %629, %20 : vector<8x512xf32>
    %631 = vector.extract_strided_slice %630 {offsets = [0, 0], sizes = [8, 128], strides = [1, 1]} : vector<8x512xf32> to vector<8x128xf32>
    %632 = arith.addf %631, %8 : vector<8x128xf32>
    %cst_129 = arith.constant dense<0xFF800000> : vector<8xf32>
    %633 = vector.multi_reduction <maximumf>, %632, %cst_129 [1] : vector<8x128xf32> to vector<8xf32>
    %634 = vector.shape_cast %633 : vector<8xf32> to vector<8x1xf32>
    %635 = vector.broadcast %634 : vector<8x1xf32> to vector<8x128xf32>
    %636 = arith.cmpf oeq, %632, %635 : vector<8x128xf32>
    %c128_i32_130 = arith.constant 128 : i32
    %637 = vector.broadcast %c128_i32_130 : i32 to vector<8x128xi32>
    %638 = arith.select %636, %1, %637 : vector<8x128xi1>, vector<8x128xi32>
    %cst_131 = arith.constant dense<2147483647> : vector<8xi32>
    %639 = vector.multi_reduction <minsi>, %638, %cst_131 [1] : vector<8x128xi32> to vector<8xi32>
    %640 = vector.shape_cast %639 : vector<8xi32> to vector<8x1xi32>
    %641 = vector.shape_cast %600 : vector<8x1xi1> to vector<8x1xi1>
    %642 = vector.broadcast %641 : vector<8x1xi1> to vector<8x128xi1>
    %643 = arith.select %642, %631, %5 : vector<8x128xi1>, vector<8x128xf32>
    %c0_132 = arith.constant 0 : index
    %c768 = arith.constant 768 : index
    %644 = vector.load %arg10[%c0_132, %c768] : memref<8x896xf32, #tpu.memory_space<vmem>>, vector<8x128xf32>
    tpu.vector_store %arg10[%c0_132, %c768], %643 {strides = array<i32>} : memref<8x896xf32, #tpu.memory_space<vmem>>, vector<8x128xf32>,
    %c0_i32_133 = arith.constant 0 : i32
    %645 = vector.broadcast %c0_i32_133 : i32 to vector<8x1xi32>
    %646 = arith.select %600, %640, %645 : vector<8x1xi1>, vector<8x1xi32>
    %647 = tpu.concatenate %337, %389, %441, %493, %545, %597, %646 in 1 : vector<8x1xi32>, vector<8x1xi32>, vector<8x1xi32>, vector<8x1xi32>, vector<8x1xi32>, vector<8x1xi32>, vector<8x1xi32> -> vector<8x7xi32>
    %c0_134 = arith.constant 0 : index
    %c0_135 = arith.constant 0 : index
    %648 = vector.load %arg11[%c0_134, %c0_135] : memref<8x7xi32, #tpu.memory_space<vmem>>, vector<8x7xi32>
    tpu.vector_store %arg11[%c0_134, %c0_135], %647 {strides = array<i32>} : memref<8x7xi32, #tpu.memory_space<vmem>>, vector<8x7xi32>,
    return
  }
  func.func @transform_0(%arg0: i32) -> (i32, i32) {
    %c0_i32 = arith.constant 0 : i32
    %c0_i32_0 = arith.constant 0 : i32
    %c0_i32_1 = arith.constant 0 : i32
    return %c0_i32, %c0_i32_0 : i32, i32
  }
  func.func @transform_1(%arg0: i32) -> (i32, i32) {
    %c0_i32 = arith.constant 0 : i32
    %c0_i32_0 = arith.constant 0 : i32
    %c0_i32_1 = arith.constant 0 : i32
    return %c0_i32, %c0_i32_0 : i32, i32
  }
  func.func @transform_2(%arg0: i32) -> (i32, i32) {
    %c0_i32 = arith.constant 0 : i32
    %c0_i32_0 = arith.constant 0 : i32
    %c0_i32_1 = arith.constant 0 : i32
    return %c0_i32, %c0_i32_0 : i32, i32
  }
  func.func @transform_3(%arg0: i32) -> (i32, i32) {
    %c0_i32 = arith.constant 0 : i32
    %c0_i32_0 = arith.constant 0 : i32
    %c0_i32_1 = arith.constant 0 : i32
    return %c0_i32, %c0_i32_0 : i32, i32
  }
  func.func @transform_4(%arg0: i32) -> (i32, i32) {
    %c0_i32 = arith.constant 0 : i32
    %c0_i32_0 = arith.constant 0 : i32
    %c0_i32_1 = arith.constant 0 : i32
    return %c0_i32, %c0_i32_0 : i32, i32
  }
  func.func @transform_5(%arg0: i32) -> (i32, i32) {
    %c0_i32 = arith.constant 0 : i32
    %c0_i32_0 = arith.constant 0 : i32
    %c0_i32_1 = arith.constant 0 : i32
    return %c0_i32, %c0_i32_0 : i32, i32
  }
  func.func @transform_6(%arg0: i32) -> (i32, i32) {
    %c0_i32 = arith.constant 0 : i32
    %c0_i32_0 = arith.constant 0 : i32
    %c0_i32_1 = arith.constant 0 : i32
    return %c0_i32, %c0_i32_0 : i32, i32
  }
  func.func @transform_7(%arg0: i32) -> (i32, i32) {
    %c0_i32 = arith.constant 0 : i32
    %c0_i32_0 = arith.constant 0 : i32
    %c0_i32_1 = arith.constant 0 : i32
    return %c0_i32, %c0_i32_0 : i32, i32
  }
  func.func @transform_8(%arg0: i32) -> (i32, i32) {
    %c0_i32 = arith.constant 0 : i32
    %c0_i32_0 = arith.constant 0 : i32
    %c0_i32_1 = arith.constant 0 : i32
    return %c0_i32, %c0_i32_0 : i32, i32
  }
  func.func @transform_9(%arg0: i32) -> (i32, i32) {
    %c0_i32 = arith.constant 0 : i32
    %c0_i32_0 = arith.constant 0 : i32
    %c0_i32_1 = arith.constant 0 : i32
    return %c0_i32, %c0_i32_0 : i32, i32
  }
  func.func @transform_10(%arg0: i32) -> (i32, i32) {
    %c0_i32 = arith.constant 0 : i32
    %c0_i32_0 = arith.constant 0 : i32
    %c0_i32_1 = arith.constant 0 : i32
    return %c0_i32, %c0_i32_0 : i32, i32
  }
}

</mosaic_0001>

<llo_original>
// kernel: _lambda_.1
$region0: #{_lambda_.1}
  #allocation0 [shape = 'u32[]', space=smem, size = 0x4, offset = 0x4, fixed_abs, tag = 'smem constant byte address 0x4 - core index']
  #allocation1 [shape = 'u32[72,128]{1,0:T(1,128)}', space=vmem, size = 0x9000, scoped, tag = 'internal scratch']
  %s0 = inlined_call_operand.vmem [shape: s32[8,1], index: 0, kind: input, shape index: {}]
  %s1 = inlined_call_operand.vmem [shape: s32[8,1], index: 1, kind: input, shape index: {}]
  %s2 = inlined_call_operand.vmem [shape: f32[64,384], index: 2, kind: input, shape index: {}]
  %s3 = inlined_call_operand.vmem [shape: f32[128,384], index: 3, kind: input, shape index: {}]
  %s4 = inlined_call_operand.vmem [shape: f32[1,128], index: 4, kind: input, shape index: {}]
  %s5 = inlined_call_operand.vmem [shape: f32[32,384], index: 5, kind: input, shape index: {}]
  %s6 = inlined_call_operand.vmem [shape: f32[1,384], index: 6, kind: input, shape index: {}]
  %s7 = inlined_call_operand.vmem [shape: f32[128,512], index: 7, kind: input, shape index: {}]
  %s8 = inlined_call_operand.vmem [shape: f32[1,512], index: 8, kind: input, shape index: {}]
  %s9 = inlined_call_operand.vmem [shape: f32[8,896], index: 9, kind: output, shape index: {0}]
  %s10 = inlined_call_operand.vmem [shape: s32[8,7], index: 10, kind: output, shape index: {1}]
  %11 = xla_tuple %s9, %s10
  %s12 = sld [smem:[#allocation0]]
  $region54: #{_lambda_.1} parent=0
    _
  %s14 = ssub.s32 1, %s12
  %s15 = scalar_select 0, %s14, %s12
  // Predicated region
  $region2: #{_lambda_.1} parent=0 // pred_check
    _
  $region3: #{_lambda_.1} parent=0 // pred_check_branch
    %17 = sbr.rel (0) target = $region5
  $region4: #{_lambda_.1} parent=0 // pred_region
    _
  $region5: #{_lambda_.1} parent=0 // pred_fallthru
    _
  // Predicated region
  $region6: #{_lambda_.1} parent=0 // pred_check
    _
  $region7: #{_lambda_.1} parent=0 // pred_check_branch
    %19 = sbr.rel (0) target = $region9
  $region8: #{_lambda_.1} parent=0 // pred_region
    _
  $region9: #{_lambda_.1} parent=0 // pred_fallthru
    _
  // Predicated region
  $region10: #{_lambda_.1} parent=0 // pred_check
    _
  $region11: #{_lambda_.1} parent=0 // pred_check_branch
    %21 = sbr.rel (0) target = $region13
  $region12: #{_lambda_.1} parent=0 // pred_region
    _
  $region13: #{_lambda_.1} parent=0 // pred_fallthru
    _
  // Predicated region
  $region14: #{_lambda_.1} parent=0 // pred_check
    _
  $region15: #{_lambda_.1} parent=0 // pred_check_branch
    %23 = sbr.rel (0) target = $region17
  $region16: #{_lambda_.1} parent=0 // pred_region
    _
  $region17: #{_lambda_.1} parent=0 // pred_fallthru
    _
  // Predicated region
  $region18: #{_lambda_.1} parent=0 // pred_check
    _
  $region19: #{_lambda_.1} parent=0 // pred_check_branch
    %25 = sbr.rel (0) target = $region21
  $region20: #{_lambda_.1} parent=0 // pred_region
    _
  $region21: #{_lambda_.1} parent=0 // pred_fallthru
    _
  // Predicated region
  $region22: #{_lambda_.1} parent=0 // pred_check
    _
  $region23: #{_lambda_.1} parent=0 // pred_check_branch
    %27 = sbr.rel (0) target = $region25
  $region24: #{_lambda_.1} parent=0 // pred_region
    _
  $region25: #{_lambda_.1} parent=0 // pred_fallthru
    _
  // Predicated region
  $region26: #{_lambda_.1} parent=0 // pred_check
    _
  $region27: #{_lambda_.1} parent=0 // pred_check_branch
    %29 = sbr.rel (0) target = $region29
  $region28: #{_lambda_.1} parent=0 // pred_region
    _
  $region29: #{_lambda_.1} parent=0 // pred_fallthru
    _
  // Predicated region
  $region30: #{_lambda_.1} parent=0 // pred_check
    _
  $region31: #{_lambda_.1} parent=0 // pred_check_branch
    %31 = sbr.rel (0) target = $region33
  $region32: #{_lambda_.1} parent=0 // pred_region
    _
  $region33: #{_lambda_.1} parent=0 // pred_fallthru
    _
  // Predicated region
  $region34: #{_lambda_.1} parent=0 // pred_check
    _
  $region35: #{_lambda_.1} parent=0 // pred_check_branch
    %33 = sbr.rel (0) target = $region37
  $region36: #{_lambda_.1} parent=0 // pred_region
    _
  $region37: #{_lambda_.1} parent=0 // pred_fallthru
    _
  %v34 = vlaneseq
  %v35 = vand.u32 %v34, 127
  %vm36 = vcmp.eq.s32.totalorder %v35, 0
  %v37 = vsel %vm36, 1, 0
  %v38 = vcvt.s32.f32 %v37
  %v39 = vcvt.s32.f32 %v35
  %v40 = vmul.f32 %v39, -1e-06
  %v41 = vld [vmem:[%s3] sm:$0xff]
  %v42 = vld [vmem:[%s3 + $0x8] sm:$0xff]
  %v43 = vld [vmem:[%s3 + $0x10] sm:$0xff]
  %v44 = vld [vmem:[%s3 + $0x18] sm:$0xff]
  %v45 = vld [vmem:[%s3 + $0x20] sm:$0xff]
  %v46 = vld [vmem:[%s3 + $0x28] sm:$0xff]
  %v47 = vld [vmem:[%s3 + $0x30] sm:$0xff]
  %v48 = vld [vmem:[%s3 + $0x38] sm:$0xff]
  %v49 = vld [vmem:[%s3 + $0x40] sm:$0xff]
  %v50 = vld [vmem:[%s3 + $0x48] sm:$0xff]
  %v51 = vld [vmem:[%s3 + $0x50] sm:$0xff]
  %v52 = vld [vmem:[%s3 + $0x58] sm:$0xff]
  %v53 = vld [vmem:[%s3 + $0x60] sm:$0xff]
  %v54 = vld [vmem:[%s3 + $0x68] sm:$0xff]
  %v55 = vld [vmem:[%s3 + $0x70] sm:$0xff]
  %v56 = vld [vmem:[%s3 + $0x78] sm:$0xff]
  %v57 = vld [vmem:[%s3 + $0x80] sm:$0xff]
  %v58 = vld [vmem:[%s3 + $0x88] sm:$0xff]
  %v59 = vld [vmem:[%s3 + $0x90] sm:$0xff]
  %v60 = vld [vmem:[%s3 + $0x98] sm:$0xff]
  %v61 = vld [vmem:[%s3 + $0xa0] sm:$0xff]
  %v62 = vld [vmem:[%s3 + $0xa8] sm:$0xff]
  %v63 = vld [vmem:[%s3 + $0xb0] sm:$0xff]
  %v64 = vld [vmem:[%s3 + $0xb8] sm:$0xff]
  %v65 = vld [vmem:[%s3 + $0xc0] sm:$0xff]
  %v66 = vld [vmem:[%s3 + $0xc8] sm:$0xff]
  %v67 = vld [vmem:[%s3 + $0xd0] sm:$0xff]
  %v68 = vld [vmem:[%s3 + $0xd8] sm:$0xff]
  %v69 = vld [vmem:[%s3 + $0xe0] sm:$0xff]
  %v70 = vld [vmem:[%s3 + $0xe8] sm:$0xff]
  %v71 = vld [vmem:[%s3 + $0xf0] sm:$0xff]
  %v72 = vld [vmem:[%s3 + $0xf8] sm:$0xff]
  %v73 = vld [vmem:[%s3 + $0x100] sm:$0xff]
  %v74 = vld [vmem:[%s3 + $0x108] sm:$0xff]
  %v75 = vld [vmem:[%s3 + $0x110] sm:$0xff]
  %v76 = vld [vmem:[%s3 + $0x118] sm:$0xff]
  %v77 = vld [vmem:[%s3 + $0x120] sm:$0xff]
  %v78 = vld [vmem:[%s3 + $0x128] sm:$0xff]
  %v79 = vld [vmem:[%s3 + $0x130] sm:$0xff]
  %v80 = vld [vmem:[%s3 + $0x138] sm:$0xff]
  %v81 = vld [vmem:[%s3 + $0x140] sm:$0xff]
  %v82 = vld [vmem:[%s3 + $0x148] sm:$0xff]
  %v83 = vld [vmem:[%s3 + $0x150] sm:$0xff]
  %v84 = vld [vmem:[%s3 + $0x158] sm:$0xff]
  %v85 = vld [vmem:[%s3 + $0x160] sm:$0xff]
  %v86 = vld [vmem:[%s3 + $0x168] sm:$0xff]
  %v87 = vld [vmem:[%s3 + $0x170] sm:$0xff]
  %v88 = vld [vmem:[%s3 + $0x178] sm:$0xff]
  %v89 = vld [vmem:[%s4] sm:$0x1]
  %v91 = vperm.slane %v89, 0
  %v93 = vld [vmem:[%s5] sm:$0xff]
  %v94 = vld [vmem:[%s5 + $0x8] sm:$0xff]
  %v95 = vld [vmem:[%s5 + $0x10] sm:$0xff]
  %v96 = vld [vmem:[%s5 + $0x18] sm:$0xff]
  %v97 = vld [vmem:[%s5 + $0x20] sm:$0xff]
  %v98 = vld [vmem:[%s5 + $0x28] sm:$0xff]
  %v99 = vld [vmem:[%s5 + $0x30] sm:$0xff]
  %v100 = vld [vmem:[%s5 + $0x38] sm:$0xff]
  %v101 = vld [vmem:[%s5 + $0x40] sm:$0xff]
  %v102 = vld [vmem:[%s5 + $0x48] sm:$0xff]
  %v103 = vld [vmem:[%s5 + $0x50] sm:$0xff]
  %v104 = vld [vmem:[%s5 + $0x58] sm:$0xff]
  %v105 = vld [vmem:[%s6] sm:$0x7]
  %v107 = vperm.slane %v105, 0
  %v108 = vperm.slane %v105, 1
  %v109 = vperm.slane %v105, 2
  %v113 = vld [vmem:[%s7] sm:$0xff]
  %v114 = vld [vmem:[%s7 + $0x8] sm:$0xff]
  %v115 = vld [vmem:[%s7 + $0x10] sm:$0xff]
  %v116 = vld [vmem:[%s7 + $0x18] sm:$0xff]
  %v117 = vld [vmem:[%s7 + $0x20] sm:$0xff]
  %v118 = vld [vmem:[%s7 + $0x28] sm:$0xff]
  %v119 = vld [vmem:[%s7 + $0x30] sm:$0xff]
  %v120 = vld [vmem:[%s7 + $0x38] sm:$0xff]
  %v121 = vld [vmem:[%s7 + $0x40] sm:$0xff]
  %v122 = vld [vmem:[%s7 + $0x48] sm:$0xff]
  %v123 = vld [vmem:[%s7 + $0x50] sm:$0xff]
  %v124 = vld [vmem:[%s7 + $0x58] sm:$0xff]
  %v125 = vld [vmem:[%s7 + $0x60] sm:$0xff]
  %v126 = vld [vmem:[%s7 + $0x68] sm:$0xff]
  %v127 = vld [vmem:[%s7 + $0x70] sm:$0xff]
  %v128 = vld [vmem:[%s7 + $0x78] sm:$0xff]
  %v129 = vld [vmem:[%s7 + $0x80] sm:$0xff]
  %v130 = vld [vmem:[%s7 + $0x88] sm:$0xff]
  %v131 = vld [vmem:[%s7 + $0x90] sm:$0xff]
  %v132 = vld [vmem:[%s7 + $0x98] sm:$0xff]
  %v133 = vld [vmem:[%s7 + $0xa0] sm:$0xff]
  %v134 = vld [vmem:[%s7 + $0xa8] sm:$0xff]
  %v135 = vld [vmem:[%s7 + $0xb0] sm:$0xff]
  %v136 = vld [vmem:[%s7 + $0xb8] sm:$0xff]
  %v137 = vld [vmem:[%s7 + $0xc0] sm:$0xff]
  %v138 = vld [vmem:[%s7 + $0xc8] sm:$0xff]
  %v139 = vld [vmem:[%s7 + $0xd0] sm:$0xff]
  %v140 = vld [vmem:[%s7 + $0xd8] sm:$0xff]
  %v141 = vld [vmem:[%s7 + $0xe0] sm:$0xff]
  %v142 = vld [vmem:[%s7 + $0xe8] sm:$0xff]
  %v143 = vld [vmem:[%s7 + $0xf0] sm:$0xff]
  %v144 = vld [vmem:[%s7 + $0xf8] sm:$0xff]
  %v145 = vld [vmem:[%s7 + $0x100] sm:$0xff]
  %v146 = vld [vmem:[%s7 + $0x108] sm:$0xff]
  %v147 = vld [vmem:[%s7 + $0x110] sm:$0xff]
  %v148 = vld [vmem:[%s7 + $0x118] sm:$0xff]
  %v149 = vld [vmem:[%s7 + $0x120] sm:$0xff]
  %v150 = vld [vmem:[%s7 + $0x128] sm:$0xff]
  %v151 = vld [vmem:[%s7 + $0x130] sm:$0xff]
  %v152 = vld [vmem:[%s7 + $0x138] sm:$0xff]
  %v153 = vld [vmem:[%s7 + $0x140] sm:$0xff]
  %v154 = vld [vmem:[%s7 + $0x148] sm:$0xff]
  %v155 = vld [vmem:[%s7 + $0x150] sm:$0xff]
  %v156 = vld [vmem:[%s7 + $0x158] sm:$0xff]
  %v157 = vld [vmem:[%s7 + $0x160] sm:$0xff]
  %v158 = vld [vmem:[%s7 + $0x168] sm:$0xff]
  %v159 = vld [vmem:[%s7 + $0x170] sm:$0xff]
  %v160 = vld [vmem:[%s7 + $0x178] sm:$0xff]
  %v161 = vld [vmem:[%s7 + $0x180] sm:$0xff]
  %v162 = vld [vmem:[%s7 + $0x188] sm:$0xff]
  %v163 = vld [vmem:[%s7 + $0x190] sm:$0xff]
  %v164 = vld [vmem:[%s7 + $0x198] sm:$0xff]
  %v165 = vld [vmem:[%s7 + $0x1a0] sm:$0xff]
  %v166 = vld [vmem:[%s7 + $0x1a8] sm:$0xff]
  %v167 = vld [vmem:[%s7 + $0x1b0] sm:$0xff]
  %v168 = vld [vmem:[%s7 + $0x1b8] sm:$0xff]
  %v169 = vld [vmem:[%s7 + $0x1c0] sm:$0xff]
  %v170 = vld [vmem:[%s7 + $0x1c8] sm:$0xff]
  %v171 = vld [vmem:[%s7 + $0x1d0] sm:$0xff]
  %v172 = vld [vmem:[%s7 + $0x1d8] sm:$0xff]
  %v173 = vld [vmem:[%s7 + $0x1e0] sm:$0xff]
  %v174 = vld [vmem:[%s7 + $0x1e8] sm:$0xff]
  %v175 = vld [vmem:[%s7 + $0x1f0] sm:$0xff]
  %v176 = vld [vmem:[%s7 + $0x1f8] sm:$0xff]
  %v177 = vld [vmem:[%s8] sm:$0xf]
  %v179 = vperm.slane %v177, 0
  %v180 = vperm.slane %v177, 1
  %v181 = vperm.slane %v177, 2
  %v182 = vperm.slane %v177, 3
  %v187 = vld [vmem:[%s0] sm:$0xff]
  %188 = vset.pattern.permute.xlu0 0
  %189 = vperm.xlu0 %188, %v187
  %v190 = vpop.permute.xlu0 %189
  %vm191 = vcmp.gt.s32.totalorder %v190, 0
  %vm192 = vcmp.gt.s32.totalorder %v190, 1
  %vm193 = vcmp.gt.s32.totalorder %v190, 2
  %vm194 = vcmp.gt.s32.totalorder %v190, 3
  %vm195 = vcmp.gt.s32.totalorder %v190, 4
  %vm196 = vcmp.gt.s32.totalorder %v190, 5
  %vm197 = vcmp.gt.s32.totalorder %v190, 6
  %vm198 = vcmp.gt.s32.totalorder %v190, 7
  %v199 = vld [vmem:[%s2] sm:$0xff]
  %v200 = vld [vmem:[%s2 + $0x8] sm:$0xff]
  %v201 = vld [vmem:[%s2 + $0x10] sm:$0xff]
  %202 = vmatpush.msra.mxu0 %v86
  %203 = vmatpush.msra.mxu0 %v83
  %204 = vmatpush.msra.mxu0 %v80
  %205 = vmatpush.msra.mxu0 %v77
  %206 = vmatpush.msra.mxu0 %v74
  %207 = vmatpush.msra.mxu0 %v71
  %208 = vmatpush.msra.mxu0 %v68
  %209 = vmatpush.msra.mxu0 %v65
  %210 = vmatpush.msra.mxu0 %v62
  %211 = vmatpush.msra.mxu0 %v59
  %212 = vmatpush.msra.mxu0 %v56
  %213 = vmatpush.msra.mxu0 %v53
  %214 = vmatpush.msra.mxu0 %v50
  %215 = vmatpush.msra.mxu0 %v47
  %216 = vmatpush.msra.mxu0 %v44
  %217 = vmatpush.msra.mxu0 %v41
  %218 = vmatmul.f32.gmra.mxu0 0.0
  %v219 = vpop.f32.mrf.mxu0
  %v220 = vadd.f32 0.0, %v219
  %221 = vdwg.mxu0
  %222 = vmatpush.msra.mxu0 %v87
  %223 = vmatpush.msra.mxu0 %v84
  %224 = vmatpush.msra.mxu0 %v81
  %225 = vmatpush.msra.mxu0 %v78
  %226 = vmatpush.msra.mxu0 %v75
  %227 = vmatpush.msra.mxu0 %v72
  %228 = vmatpush.msra.mxu0 %v69
  %229 = vmatpush.msra.mxu0 %v66
  %230 = vmatpush.msra.mxu0 %v63
  %231 = vmatpush.msra.mxu0 %v60
  %232 = vmatpush.msra.mxu0 %v57
  %233 = vmatpush.msra.mxu0 %v54
  %234 = vmatpush.msra.mxu0 %v51
  %235 = vmatpush.msra.mxu0 %v48
  %236 = vmatpush.msra.mxu0 %v45
  %237 = vmatpush.msra.mxu0 %v42
  %238 = vmatmul.f32.gmra.mxu0 0.0
  %v239 = vpop.f32.mrf.mxu0
  %v240 = vadd.f32 0.0, %v239
  %241 = vdwg.mxu0
  %242 = vmatpush.msra.mxu0 %v88
  %243 = vmatpush.msra.mxu0 %v85
  %244 = vmatpush.msra.mxu0 %v82
  %245 = vmatpush.msra.mxu0 %v79
  %246 = vmatpush.msra.mxu0 %v76
  %247 = vmatpush.msra.mxu0 %v73
  %248 = vmatpush.msra.mxu0 %v70
  %249 = vmatpush.msra.mxu0 %v67
  %250 = vmatpush.msra.mxu0 %v64
  %251 = vmatpush.msra.mxu0 %v61
  %252 = vmatpush.msra.mxu0 %v58
  %253 = vmatpush.msra.mxu0 %v55
  %254 = vmatpush.msra.mxu0 %v52
  %255 = vmatpush.msra.mxu0 %v49
  %256 = vmatpush.msra.mxu0 %v46
  %257 = vmatpush.msra.mxu0 %v43
  %258 = vmatmul.f32.gmra.mxu0 0.0
  %v259 = vpop.f32.mrf.mxu0
  %v260 = vadd.f32 0.0, %v259
  %261 = vdwg.mxu0
  %v262 = vadd.f32 %v199, %v220
  %v263 = vxor.u32 %v262, 2147483648
  %v264 = vmul.f32 %v263, 1.442695
  %v265 = vpow.pop %v264
  %v266 = vadd.f32 %v265, 1.0
  %v267 = vrcp.pop %v266
  %v268 = vmul.f32 %v266, %v267
  %v269 = vsub.f32 1.0, %v268
  %v270 = vmul.f32 %v267, %v269
  %v271 = vadd.f32 %v267, %v270
  %vm272 = vweird.f32 %v266
  %vm273 = vweird.f32 %v267
  %vm274 = vmor %vm272, %vm273
  %v275 = vsel %vm274, %v267, %v271
  %v276 = vand.u32 2147483647, %v266
  %vm277 = vcmp.eq.f32.partialorder %v276, 8.507059e+37
  %v278 = vand.u32 %v266, 2147483648
  %v279 = vor.u32 1.1754944e-38, %v278
  %v280 = vsel %vm277, %v279, %v275
  %v281 = vmul.f32 1.0, %v280
  %v282 = vadd.f32 %v200, %v240
  %v283 = vxor.u32 %v282, 2147483648
  %v284 = vmul.f32 %v283, 1.442695
  %v285 = vpow.pop %v284
  %v286 = vadd.f32 %v285, 1.0
  %v287 = vrcp.pop %v286
  %v288 = vmul.f32 %v286, %v287
  %v289 = vsub.f32 1.0, %v288
  %v290 = vmul.f32 %v287, %v289
  %v291 = vadd.f32 %v287, %v290
  %vm292 = vweird.f32 %v286
  %vm293 = vweird.f32 %v287
  %vm294 = vmor %vm292, %vm293
  %v295 = vsel %vm294, %v287, %v291
  %v296 = vand.u32 2147483647, %v286
  %vm297 = vcmp.eq.f32.partialorder %v296, 8.507059e+37
  %v298 = vand.u32 %v286, 2147483648
  %v299 = vor.u32 1.1754944e-38, %v298
  %v300 = vsel %vm297, %v299, %v295
  %v301 = vmul.f32 1.0, %v300
  %v302 = vadd.f32 %v260, %v91
  %v303 = vmul.f32 %v281, %v302
  %v304 = vadd.f32 %v201, %v303
  %v305 = vtanh.pop %v304
  %v306 = vsub.f32 1.0, %v301
  %v307 = vmul.f32 %v306, %v305
  %v308 = vmul.f32 %v301, 0.0
  %v309 = vadd.f32 %v307, %v308
  %v310 = vsel %vm191, %v309, 0.0
  %v311 = vld [vmem:[%s2 + $0x18] sm:$0xff]
  %v312 = vld [vmem:[%s2 + $0x20] sm:$0xff]
  %v313 = vld [vmem:[%s2 + $0x28] sm:$0xff]
  %314 = vmatpush.msra.mxu0 %v86
  %315 = vmatpush.msra.mxu0 %v83
  %316 = vmatpush.msra.mxu0 %v80
  %317 = vmatpush.msra.mxu0 %v77
  %318 = vmatpush.msra.mxu0 %v74
  %319 = vmatpush.msra.mxu0 %v71
  %320 = vmatpush.msra.mxu0 %v68
  %321 = vmatpush.msra.mxu0 %v65
  %322 = vmatpush.msra.mxu0 %v62
  %323 = vmatpush.msra.mxu0 %v59
  %324 = vmatpush.msra.mxu0 %v56
  %325 = vmatpush.msra.mxu0 %v53
  %326 = vmatpush.msra.mxu0 %v50
  %327 = vmatpush.msra.mxu0 %v47
  %328 = vmatpush.msra.mxu0 %v44
  %329 = vmatpush.msra.mxu0 %v41
  %330 = vmatmul.f32.gmra.mxu0 %v310
  %v331 = vpop.f32.mrf.mxu0
  %v332 = vadd.f32 0.0, %v331
  %333 = vdwg.mxu0
  %334 = vmatpush.msra.mxu0 %v87
  %335 = vmatpush.msra.mxu0 %v84
  %336 = vmatpush.msra.mxu0 %v81
  %337 = vmatpush.msra.mxu0 %v78
  %338 = vmatpush.msra.mxu0 %v75
  %339 = vmatpush.msra.mxu0 %v72
  %340 = vmatpush.msra.mxu0 %v69
  %341 = vmatpush.msra.mxu0 %v66
  %342 = vmatpush.msra.mxu0 %v63
  %343 = vmatpush.msra.mxu0 %v60
  %344 = vmatpush.msra.mxu0 %v57
  %345 = vmatpush.msra.mxu0 %v54
  %346 = vmatpush.msra.mxu0 %v51
  %347 = vmatpush.msra.mxu0 %v48
  %348 = vmatpush.msra.mxu0 %v45
  %349 = vmatpush.msra.mxu0 %v42
  %350 = vmatmul.f32.gmra.mxu0 %v310
  %v351 = vpop.f32.mrf.mxu0
  %v352 = vadd.f32 0.0, %v351
  %353 = vdwg.mxu0
  %354 = vmatpush.msra.mxu0 %v88
  %355 = vmatpush.msra.mxu0 %v85
  %356 = vmatpush.msra.mxu0 %v82
  %357 = vmatpush.msra.mxu0 %v79
  %358 = vmatpush.msra.mxu0 %v76
  %359 = vmatpush.msra.mxu0 %v73
  %360 = vmatpush.msra.mxu0 %v70
  %361 = vmatpush.msra.mxu0 %v67
  %362 = vmatpush.msra.mxu0 %v64
  %363 = vmatpush.msra.mxu0 %v61
  %364 = vmatpush.msra.mxu0 %v58
  %365 = vmatpush.msra.mxu0 %v55
  %366 = vmatpush.msra.mxu0 %v52
  %367 = vmatpush.msra.mxu0 %v49
  %368 = vmatpush.msra.mxu0 %v46
  %369 = vmatpush.msra.mxu0 %v43
  %370 = vmatmul.f32.gmra.mxu0 %v310
  %v371 = vpop.f32.mrf.mxu0
  %v372 = vadd.f32 0.0, %v371
  %373 = vdwg.mxu0
  %v374 = vadd.f32 %v311, %v332
  %v375 = vxor.u32 %v374, 2147483648
  %v376 = vmul.f32 %v375, 1.442695
  %v377 = vpow.pop %v376
  %v378 = vadd.f32 %v377, 1.0
  %v379 = vrcp.pop %v378
  %v380 = vmul.f32 %v378, %v379
  %v381 = vsub.f32 1.0, %v380
  %v382 = vmul.f32 %v379, %v381
  %v383 = vadd.f32 %v379, %v382
  %vm384 = vweird.f32 %v378
  %vm385 = vweird.f32 %v379
  %vm386 = vmor %vm384, %vm385
  %v387 = vsel %vm386, %v379, %v383
  %v388 = vand.u32 2147483647, %v378
  %vm389 = vcmp.eq.f32.partialorder %v388, 8.507059e+37
  %v390 = vand.u32 %v378, 2147483648
  %v391 = vor.u32 1.1754944e-38, %v390
  %v392 = vsel %vm389, %v391, %v387
  %v393 = vmul.f32 1.0, %v392
  %v394 = vadd.f32 %v312, %v352
  %v395 = vxor.u32 %v394, 2147483648
  %v396 = vmul.f32 %v395, 1.442695
  %v397 = vpow.pop %v396
  %v398 = vadd.f32 %v397, 1.0
  %v399 = vrcp.pop %v398
  %v400 = vmul.f32 %v398, %v399
  %v401 = vsub.f32 1.0, %v400
  %v402 = vmul.f32 %v399, %v401
  %v403 = vadd.f32 %v399, %v402
  %vm404 = vweird.f32 %v398
  %vm405 = vweird.f32 %v399
  %vm406 = vmor %vm404, %vm405
  %v407 = vsel %vm406, %v399, %v403
  %v408 = vand.u32 2147483647, %v398
  %vm409 = vcmp.eq.f32.partialorder %v408, 8.507059e+37
  %v410 = vand.u32 %v398, 2147483648
  %v411 = vor.u32 1.1754944e-38, %v410
  %v412 = vsel %vm409, %v411, %v407
  %v413 = vmul.f32 1.0, %v412
  %v414 = vadd.f32 %v372, %v91
  %v415 = vmul.f32 %v393, %v414
  %v416 = vadd.f32 %v313, %v415
  %v417 = vtanh.pop %v416
  %v418 = vsub.f32 1.0, %v413
  %v419 = vmul.f32 %v418, %v417
  %v420 = vmul.f32 %v413, %v310
  %v421 = vadd.f32 %v419, %v420
  %v422 = vsel %vm192, %v421, %v310
  %v423 = vld [vmem:[%s2 + $0x30] sm:$0xff]
  %v424 = vld [vmem:[%s2 + $0x38] sm:$0xff]
  %v425 = vld [vmem:[%s2 + $0x40] sm:$0xff]
  %426 = vmatpush.msra.mxu0 %v86
  %427 = vmatpush.msra.mxu0 %v83
  %428 = vmatpush.msra.mxu0 %v80
  %429 = vmatpush.msra.mxu0 %v77
  %430 = vmatpush.msra.mxu0 %v74
  %431 = vmatpush.msra.mxu0 %v71
  %432 = vmatpush.msra.mxu0 %v68
  %433 = vmatpush.msra.mxu0 %v65
  %434 = vmatpush.msra.mxu0 %v62
  %435 = vmatpush.msra.mxu0 %v59
  %436 = vmatpush.msra.mxu0 %v56
  %437 = vmatpush.msra.mxu0 %v53
  %438 = vmatpush.msra.mxu0 %v50
  %439 = vmatpush.msra.mxu0 %v47
  %440 = vmatpush.msra.mxu0 %v44
  %441 = vmatpush.msra.mxu0 %v41
  %442 = vmatmul.f32.gmra.mxu0 %v422
  %v443 = vpop.f32.mrf.mxu0
  %v444 = vadd.f32 0.0, %v443
  %445 = vdwg.mxu0
  %446 = vmatpush.msra.mxu0 %v87
  %447 = vmatpush.msra.mxu0 %v84
  %448 = vmatpush.msra.mxu0 %v81
  %449 = vmatpush.msra.mxu0 %v78
  %450 = vmatpush.msra.mxu0 %v75
  %451 = vmatpush.msra.mxu0 %v72
  %452 = vmatpush.msra.mxu0 %v69
  %453 = vmatpush.msra.mxu0 %v66
  %454 = vmatpush.msra.mxu0 %v63
  %455 = vmatpush.msra.mxu0 %v60
  %456 = vmatpush.msra.mxu0 %v57
  %457 = vmatpush.msra.mxu0 %v54
  %458 = vmatpush.msra.mxu0 %v51
  %459 = vmatpush.msra.mxu0 %v48
  %460 = vmatpush.msra.mxu0 %v45
  %461 = vmatpush.msra.mxu0 %v42
  %462 = vmatmul.f32.gmra.mxu0 %v422
  %v463 = vpop.f32.mrf.mxu0
  %v464 = vadd.f32 0.0, %v463
  %465 = vdwg.mxu0
  %466 = vmatpush.msra.mxu0 %v88
  %467 = vmatpush.msra.mxu0 %v85
  %468 = vmatpush.msra.mxu0 %v82
  %469 = vmatpush.msra.mxu0 %v79
  %470 = vmatpush.msra.mxu0 %v76
  %471 = vmatpush.msra.mxu0 %v73
  %472 = vmatpush.msra.mxu0 %v70
  %473 = vmatpush.msra.mxu0 %v67
  %474 = vmatpush.msra.mxu0 %v64
  %475 = vmatpush.msra.mxu0 %v61
  %476 = vmatpush.msra.mxu0 %v58
  %477 = vmatpush.msra.mxu0 %v55
  %478 = vmatpush.msra.mxu0 %v52
  %479 = vmatpush.msra.mxu0 %v49
  %480 = vmatpush.msra.mxu0 %v46
  %481 = vmatpush.msra.mxu0 %v43
  %482 = vmatmul.f32.gmra.mxu0 %v422
  %v483 = vpop.f32.mrf.mxu0
  %v484 = vadd.f32 0.0, %v483
  %485 = vdwg.mxu0
  %v486 = vadd.f32 %v423, %v444
  %v487 = vxor.u32 %v486, 2147483648
  %v488 = vmul.f32 %v487, 1.442695
  %v489 = vpow.pop %v488
  %v490 = vadd.f32 %v489, 1.0
  %v491 = vrcp.pop %v490
  %v492 = vmul.f32 %v490, %v491
  %v493 = vsub.f32 1.0, %v492
  %v494 = vmul.f32 %v491, %v493
  %v495 = vadd.f32 %v491, %v494
  %vm496 = vweird.f32 %v490
  %vm497 = vweird.f32 %v491
  %vm498 = vmor %vm496, %vm497
  %v499 = vsel %vm498, %v491, %v495
  %v500 = vand.u32 2147483647, %v490
  %vm501 = vcmp.eq.f32.partialorder %v500, 8.507059e+37
  %v502 = vand.u32 %v490, 2147483648
  %v503 = vor.u32 1.1754944e-38, %v502
  %v504 = vsel %vm501, %v503, %v499
  %v505 = vmul.f32 1.0, %v504
  %v506 = vadd.f32 %v424, %v464
  %v507 = vxor.u32 %v506, 2147483648
  %v508 = vmul.f32 %v507, 1.442695
  %v509 = vpow.pop %v508
  %v510 = vadd.f32 %v509, 1.0
  %v511 = vrcp.pop %v510
  %v512 = vmul.f32 %v510, %v511
  %v513 = vsub.f32 1.0, %v512
  %v514 = vmul.f32 %v511, %v513
  %v515 = vadd.f32 %v511, %v514
  %vm516 = vweird.f32 %v510
  %vm517 = vweird.f32 %v511
  %vm518 = vmor %vm516, %vm517
  %v519 = vsel %vm518, %v511, %v515
  %v520 = vand.u32 2147483647, %v510
  %vm521 = vcmp.eq.f32.partialorder %v520, 8.507059e+37
  %v522 = vand.u32 %v510, 2147483648
  %v523 = vor.u32 1.1754944e-38, %v522
  %v524 = vsel %vm521, %v523, %v519
  %v525 = vmul.f32 1.0, %v524
  %v526 = vadd.f32 %v484, %v91
  %v527 = vmul.f32 %v505, %v526
  %v528 = vadd.f32 %v425, %v527
  %v529 = vtanh.pop %v528
  %v530 = vsub.f32 1.0, %v525
  %v531 = vmul.f32 %v530, %v529
  %v532 = vmul.f32 %v525, %v422
  %v533 = vadd.f32 %v531, %v532
  %v534 = vsel %vm193, %v533, %v422
  %v535 = vld [vmem:[%s2 + $0x48] sm:$0xff]
  %v536 = vld [vmem:[%s2 + $0x50] sm:$0xff]
  %v537 = vld [vmem:[%s2 + $0x58] sm:$0xff]
  %538 = vmatpush.msra.mxu0 %v86
  %539 = vmatpush.msra.mxu0 %v83
  %540 = vmatpush.msra.mxu0 %v80
  %541 = vmatpush.msra.mxu0 %v77
  %542 = vmatpush.msra.mxu0 %v74
  %543 = vmatpush.msra.mxu0 %v71
  %544 = vmatpush.msra.mxu0 %v68
  %545 = vmatpush.msra.mxu0 %v65
  %546 = vmatpush.msra.mxu0 %v62
  %547 = vmatpush.msra.mxu0 %v59
  %548 = vmatpush.msra.mxu0 %v56
  %549 = vmatpush.msra.mxu0 %v53
  %550 = vmatpush.msra.mxu0 %v50
  %551 = vmatpush.msra.mxu0 %v47
  %552 = vmatpush.msra.mxu0 %v44
  %553 = vmatpush.msra.mxu0 %v41
  %554 = vmatmul.f32.gmra.mxu0 %v534
  %v555 = vpop.f32.mrf.mxu0
  %v556 = vadd.f32 0.0, %v555
  %557 = vdwg.mxu0
  %558 = vmatpush.msra.mxu0 %v87
  %559 = vmatpush.msra.mxu0 %v84
  %560 = vmatpush.msra.mxu0 %v81
  %561 = vmatpush.msra.mxu0 %v78
  %562 = vmatpush.msra.mxu0 %v75
  %563 = vmatpush.msra.mxu0 %v72
  %564 = vmatpush.msra.mxu0 %v69
  %565 = vmatpush.msra.mxu0 %v66
  %566 = vmatpush.msra.mxu0 %v63
  %567 = vmatpush.msra.mxu0 %v60
  %568 = vmatpush.msra.mxu0 %v57
  %569 = vmatpush.msra.mxu0 %v54
  %570 = vmatpush.msra.mxu0 %v51
  %571 = vmatpush.msra.mxu0 %v48
  %572 = vmatpush.msra.mxu0 %v45
  %573 = vmatpush.msra.mxu0 %v42
  %574 = vmatmul.f32.gmra.mxu0 %v534
  %v575 = vpop.f32.mrf.mxu0
  %v576 = vadd.f32 0.0, %v575
  %577 = vdwg.mxu0
  %578 = vmatpush.msra.mxu0 %v88
  %579 = vmatpush.msra.mxu0 %v85
  %580 = vmatpush.msra.mxu0 %v82
  %581 = vmatpush.msra.mxu0 %v79
  %582 = vmatpush.msra.mxu0 %v76
  %583 = vmatpush.msra.mxu0 %v73
  %584 = vmatpush.msra.mxu0 %v70
  %585 = vmatpush.msra.mxu0 %v67
  %586 = vmatpush.msra.mxu0 %v64
  %587 = vmatpush.msra.mxu0 %v61
  %588 = vmatpush.msra.mxu0 %v58
  %589 = vmatpush.msra.mxu0 %v55
  %590 = vmatpush.msra.mxu0 %v52
  %591 = vmatpush.msra.mxu0 %v49
  %592 = vmatpush.msra.mxu0 %v46
  %593 = vmatpush.msra.mxu0 %v43
  %594 = vmatmul.f32.gmra.mxu0 %v534
  %v595 = vpop.f32.mrf.mxu0
  %v596 = vadd.f32 0.0, %v595
  %597 = vdwg.mxu0
  %v598 = vadd.f32 %v535, %v556
  %v599 = vxor.u32 %v598, 2147483648
  %v600 = vmul.f32 %v599, 1.442695
  %v601 = vpow.pop %v600
  %v602 = vadd.f32 %v601, 1.0
  %v603 = vrcp.pop %v602
  %v604 = vmul.f32 %v602, %v603
  %v605 = vsub.f32 1.0, %v604
  %v606 = vmul.f32 %v603, %v605
  %v607 = vadd.f32 %v603, %v606
  %vm608 = vweird.f32 %v602
  %vm609 = vweird.f32 %v603
  %vm610 = vmor %vm608, %vm609
  %v611 = vsel %vm610, %v603, %v607
  %v612 = vand.u32 2147483647, %v602
  %vm613 = vcmp.eq.f32.partialorder %v612, 8.507059e+37
  %v614 = vand.u32 %v602, 2147483648
  %v615 = vor.u32 1.1754944e-38, %v614
  %v616 = vsel %vm613, %v615, %v611
  %v617 = vmul.f32 1.0, %v616
  %v618 = vadd.f32 %v536, %v576
  %v619 = vxor.u32 %v618, 2147483648
  %v620 = vmul.f32 %v619, 1.442695
  %v621 = vpow.pop %v620
  %v622 = vadd.f32 %v621, 1.0
  %v623 = vrcp.pop %v622
  %v624 = vmul.f32 %v622, %v623
  %v625 = vsub.f32 1.0, %v624
  %v626 = vmul.f32 %v623, %v625
  %v627 = vadd.f32 %v623, %v626
  %vm628 = vweird.f32 %v622
  %vm629 = vweird.f32 %v623
  %vm630 = vmor %vm628, %vm629
  %v631 = vsel %vm630, %v623, %v627
  %v632 = vand.u32 2147483647, %v622
  %vm633 = vcmp.eq.f32.partialorder %v632, 8.507059e+37
  %v634 = vand.u32 %v622, 2147483648
  %v635 = vor.u32 1.1754944e-38, %v634
  %v636 = vsel %vm633, %v635, %v631
  %v637 = vmul.f32 1.0, %v636
  %v638 = vadd.f32 %v596, %v91
  %v639 = vmul.f32 %v617, %v638
  %v640 = vadd.f32 %v537, %v639
  %v641 = vtanh.pop %v640
  %v642 = vsub.f32 1.0, %v637
  %v643 = vmul.f32 %v642, %v641
  %v644 = vmul.f32 %v637, %v534
  %v645 = vadd.f32 %v643, %v644
  %v646 = vsel %vm194, %v645, %v534
  %v647 = vld [vmem:[%s2 + $0x60] sm:$0xff]
  %v648 = vld [vmem:[%s2 + $0x68] sm:$0xff]
  %v649 = vld [vmem:[%s2 + $0x70] sm:$0xff]
  %650 = vmatpush.msra.mxu0 %v86
  %651 = vmatpush.msra.mxu0 %v83
  %652 = vmatpush.msra.mxu0 %v80
  %653 = vmatpush.msra.mxu0 %v77
  %654 = vmatpush.msra.mxu0 %v74
  %655 = vmatpush.msra.mxu0 %v71
  %656 = vmatpush.msra.mxu0 %v68
  %657 = vmatpush.msra.mxu0 %v65
  %658 = vmatpush.msra.mxu0 %v62
  %659 = vmatpush.msra.mxu0 %v59
  %660 = vmatpush.msra.mxu0 %v56
  %661 = vmatpush.msra.mxu0 %v53
  %662 = vmatpush.msra.mxu0 %v50
  %663 = vmatpush.msra.mxu0 %v47
  %664 = vmatpush.msra.mxu0 %v44
  %665 = vmatpush.msra.mxu0 %v41
  %666 = vmatmul.f32.gmra.mxu0 %v646
  %v667 = vpop.f32.mrf.mxu0
  %v668 = vadd.f32 0.0, %v667
  %669 = vdwg.mxu0
  %670 = vmatpush.msra.mxu0 %v87
  %671 = vmatpush.msra.mxu0 %v84
  %672 = vmatpush.msra.mxu0 %v81
  %673 = vmatpush.msra.mxu0 %v78
  %674 = vmatpush.msra.mxu0 %v75
  %675 = vmatpush.msra.mxu0 %v72
  %676 = vmatpush.msra.mxu0 %v69
  %677 = vmatpush.msra.mxu0 %v66
  %678 = vmatpush.msra.mxu0 %v63
  %679 = vmatpush.msra.mxu0 %v60
  %680 = vmatpush.msra.mxu0 %v57
  %681 = vmatpush.msra.mxu0 %v54
  %682 = vmatpush.msra.mxu0 %v51
  %683 = vmatpush.msra.mxu0 %v48
  %684 = vmatpush.msra.mxu0 %v45
  %685 = vmatpush.msra.mxu0 %v42
  %686 = vmatmul.f32.gmra.mxu0 %v646
  %v687 = vpop.f32.mrf.mxu0
  %v688 = vadd.f32 0.0, %v687
  %689 = vdwg.mxu0
  %690 = vmatpush.msra.mxu0 %v88
  %691 = vmatpush.msra.mxu0 %v85
  %692 = vmatpush.msra.mxu0 %v82
  %693 = vmatpush.msra.mxu0 %v79
  %694 = vmatpush.msra.mxu0 %v76
  %695 = vmatpush.msra.mxu0 %v73
  %696 = vmatpush.msra.mxu0 %v70
  %697 = vmatpush.msra.mxu0 %v67
  %698 = vmatpush.msra.mxu0 %v64
  %699 = vmatpush.msra.mxu0 %v61
  %700 = vmatpush.msra.mxu0 %v58
  %701 = vmatpush.msra.mxu0 %v55
  %702 = vmatpush.msra.mxu0 %v52
  %703 = vmatpush.msra.mxu0 %v49
  %704 = vmatpush.msra.mxu0 %v46
  %705 = vmatpush.msra.mxu0 %v43
  %706 = vmatmul.f32.gmra.mxu0 %v646
  %v707 = vpop.f32.mrf.mxu0
  %v708 = vadd.f32 0.0, %v707
  %709 = vdwg.mxu0
  %v710 = vadd.f32 %v647, %v668
  %v711 = vxor.u32 %v710, 2147483648
  %v712 = vmul.f32 %v711, 1.442695
  %v713 = vpow.pop %v712
  %v714 = vadd.f32 %v713, 1.0
  %v715 = vrcp.pop %v714
  %v716 = vmul.f32 %v714, %v715
  %v717 = vsub.f32 1.0, %v716
  %v718 = vmul.f32 %v715, %v717
  %v719 = vadd.f32 %v715, %v718
  %vm720 = vweird.f32 %v714
  %vm721 = vweird.f32 %v715
  %vm722 = vmor %vm720, %vm721
  %v723 = vsel %vm722, %v715, %v719
  %v724 = vand.u32 2147483647, %v714
  %vm725 = vcmp.eq.f32.partialorder %v724, 8.507059e+37
  %v726 = vand.u32 %v714, 2147483648
  %v727 = vor.u32 1.1754944e-38, %v726
  %v728 = vsel %vm725, %v727, %v723
  %v729 = vmul.f32 1.0, %v728
  %v730 = vadd.f32 %v648, %v688
  %v731 = vxor.u32 %v730, 2147483648
  %v732 = vmul.f32 %v731, 1.442695
  %v733 = vpow.pop %v732
  %v734 = vadd.f32 %v733, 1.0
  %v735 = vrcp.pop %v734
  %v736 = vmul.f32 %v734, %v735
  %v737 = vsub.f32 1.0, %v736
  %v738 = vmul.f32 %v735, %v737
  %v739 = vadd.f32 %v735, %v738
  %vm740 = vweird.f32 %v734
  %vm741 = vweird.f32 %v735
  %vm742 = vmor %vm740, %vm741
  %v743 = vsel %vm742, %v735, %v739
  %v744 = vand.u32 2147483647, %v734
  %vm745 = vcmp.eq.f32.partialorder %v744, 8.507059e+37
  %v746 = vand.u32 %v734, 2147483648
  %v747 = vor.u32 1.1754944e-38, %v746
  %v748 = vsel %vm745, %v747, %v743
  %v749 = vmul.f32 1.0, %v748
  %v750 = vadd.f32 %v708, %v91
  %v751 = vmul.f32 %v729, %v750
  %v752 = vadd.f32 %v649, %v751
  %v753 = vtanh.pop %v752
  %v754 = vsub.f32 1.0, %v749
  %v755 = vmul.f32 %v754, %v753
  %v756 = vmul.f32 %v749, %v646
  %v757 = vadd.f32 %v755, %v756
  %v758 = vsel %vm195, %v757, %v646
  %v759 = vld [vmem:[%s2 + $0x78] sm:$0xff]
  %v760 = vld [vmem:[%s2 + $0x80] sm:$0xff]
  %v761 = vld [vmem:[%s2 + $0x88] sm:$0xff]
  %762 = vmatpush.msra.mxu0 %v86
  %763 = vmatpush.msra.mxu0 %v83
  %764 = vmatpush.msra.mxu0 %v80
  %765 = vmatpush.msra.mxu0 %v77
  %766 = vmatpush.msra.mxu0 %v74
  %767 = vmatpush.msra.mxu0 %v71
  %768 = vmatpush.msra.mxu0 %v68
  %769 = vmatpush.msra.mxu0 %v65
  %770 = vmatpush.msra.mxu0 %v62
  %771 = vmatpush.msra.mxu0 %v59
  %772 = vmatpush.msra.mxu0 %v56
  %773 = vmatpush.msra.mxu0 %v53
  %774 = vmatpush.msra.mxu0 %v50
  %775 = vmatpush.msra.mxu0 %v47
  %776 = vmatpush.msra.mxu0 %v44
  %777 = vmatpush.msra.mxu0 %v41
  %778 = vmatmul.f32.gmra.mxu0 %v758
  %v779 = vpop.f32.mrf.mxu0
  %v780 = vadd.f32 0.0, %v779
  %781 = vdwg.mxu0
  %782 = vmatpush.msra.mxu0 %v87
  %783 = vmatpush.msra.mxu0 %v84
  %784 = vmatpush.msra.mxu0 %v81
  %785 = vmatpush.msra.mxu0 %v78
  %786 = vmatpush.msra.mxu0 %v75
  %787 = vmatpush.msra.mxu0 %v72
  %788 = vmatpush.msra.mxu0 %v69
  %789 = vmatpush.msra.mxu0 %v66
  %790 = vmatpush.msra.mxu0 %v63
  %791 = vmatpush.msra.mxu0 %v60
  %792 = vmatpush.msra.mxu0 %v57
  %793 = vmatpush.msra.mxu0 %v54
  %794 = vmatpush.msra.mxu0 %v51
  %795 = vmatpush.msra.mxu0 %v48
  %796 = vmatpush.msra.mxu0 %v45
  %797 = vmatpush.msra.mxu0 %v42
  %798 = vmatmul.f32.gmra.mxu0 %v758
  %v799 = vpop.f32.mrf.mxu0
  %v800 = vadd.f32 0.0, %v799
  %801 = vdwg.mxu0
  %802 = vmatpush.msra.mxu0 %v88
  %803 = vmatpush.msra.mxu0 %v85
  %804 = vmatpush.msra.mxu0 %v82
  %805 = vmatpush.msra.mxu0 %v79
  %806 = vmatpush.msra.mxu0 %v76
  %807 = vmatpush.msra.mxu0 %v73
  %808 = vmatpush.msra.mxu0 %v70
  %809 = vmatpush.msra.mxu0 %v67
  %810 = vmatpush.msra.mxu0 %v64
  %811 = vmatpush.msra.mxu0 %v61
  %812 = vmatpush.msra.mxu0 %v58
  %813 = vmatpush.msra.mxu0 %v55
  %814 = vmatpush.msra.mxu0 %v52
  %815 = vmatpush.msra.mxu0 %v49
  %816 = vmatpush.msra.mxu0 %v46
  %817 = vmatpush.msra.mxu0 %v43
  %818 = vmatmul.f32.gmra.mxu0 %v758
  %v819 = vpop.f32.mrf.mxu0
  %v820 = vadd.f32 0.0, %v819
  %821 = vdwg.mxu0
  %v822 = vadd.f32 %v759, %v780
  %v823 = vxor.u32 %v822, 2147483648
  %v824 = vmul.f32 %v823, 1.442695
  %v825 = vpow.pop %v824
  %v826 = vadd.f32 %v825, 1.0
  %v827 = vrcp.pop %v826
  %v828 = vmul.f32 %v826, %v827
  %v829 = vsub.f32 1.0, %v828
  %v830 = vmul.f32 %v827, %v829
  %v831 = vadd.f32 %v827, %v830
  %vm832 = vweird.f32 %v826
  %vm833 = vweird.f32 %v827
  %vm834 = vmor %vm832, %vm833
  %v835 = vsel %vm834, %v827, %v831
  %v836 = vand.u32 2147483647, %v826
  %vm837 = vcmp.eq.f32.partialorder %v836, 8.507059e+37
  %v838 = vand.u32 %v826, 2147483648
  %v839 = vor.u32 1.1754944e-38, %v838
  %v840 = vsel %vm837, %v839, %v835
  %v841 = vmul.f32 1.0, %v840
  %v842 = vadd.f32 %v760, %v800
  %v843 = vxor.u32 %v842, 2147483648
  %v844 = vmul.f32 %v843, 1.442695
  %v845 = vpow.pop %v844
  %v846 = vadd.f32 %v845, 1.0
  %v847 = vrcp.pop %v846
  %v848 = vmul.f32 %v846, %v847
  %v849 = vsub.f32 1.0, %v848
  %v850 = vmul.f32 %v847, %v849
  %v851 = vadd.f32 %v847, %v850
  %vm852 = vweird.f32 %v846
  %vm853 = vweird.f32 %v847
  %vm854 = vmor %vm852, %vm853
  %v855 = vsel %vm854, %v847, %v851
  %v856 = vand.u32 2147483647, %v846
  %vm857 = vcmp.eq.f32.partialorder %v856, 8.507059e+37
  %v858 = vand.u32 %v846, 2147483648
  %v859 = vor.u32 1.1754944e-38, %v858
  %v860 = vsel %vm857, %v859, %v855
  %v861 = vmul.f32 1.0, %v860
  %v862 = vadd.f32 %v820, %v91
  %v863 = vmul.f32 %v841, %v862
  %v864 = vadd.f32 %v761, %v863
  %v865 = vtanh.pop %v864
  %v866 = vsub.f32 1.0, %v861
  %v867 = vmul.f32 %v866, %v865
  %v868 = vmul.f32 %v861, %v758
  %v869 = vadd.f32 %v867, %v868
  %v870 = vsel %vm196, %v869, %v758
  %v871 = vld [vmem:[%s2 + $0x90] sm:$0xff]
  %v872 = vld [vmem:[%s2 + $0x98] sm:$0xff]
  %v873 = vld [vmem:[%s2 + $0xa0] sm:$0xff]
  %874 = vmatpush.msra.mxu0 %v86
  %875 = vmatpush.msra.mxu0 %v83
  %876 = vmatpush.msra.mxu0 %v80
  %877 = vmatpush.msra.mxu0 %v77
  %878 = vmatpush.msra.mxu0 %v74
  %879 = vmatpush.msra.mxu0 %v71
  %880 = vmatpush.msra.mxu0 %v68
  %881 = vmatpush.msra.mxu0 %v65
  %882 = vmatpush.msra.mxu0 %v62
  %883 = vmatpush.msra.mxu0 %v59
  %884 = vmatpush.msra.mxu0 %v56
  %885 = vmatpush.msra.mxu0 %v53
  %886 = vmatpush.msra.mxu0 %v50
  %887 = vmatpush.msra.mxu0 %v47
  %888 = vmatpush.msra.mxu0 %v44
  %889 = vmatpush.msra.mxu0 %v41
  %890 = vmatmul.f32.gmra.mxu0 %v870
  %v891 = vpop.f32.mrf.mxu0
  %v892 = vadd.f32 0.0, %v891
  %893 = vdwg.mxu0
  %894 = vmatpush.msra.mxu0 %v87
  %895 = vmatpush.msra.mxu0 %v84
  %896 = vmatpush.msra.mxu0 %v81
  %897 = vmatpush.msra.mxu0 %v78
  %898 = vmatpush.msra.mxu0 %v75
  %899 = vmatpush.msra.mxu0 %v72
  %900 = vmatpush.msra.mxu0 %v69
  %901 = vmatpush.msra.mxu0 %v66
  %902 = vmatpush.msra.mxu0 %v63
  %903 = vmatpush.msra.mxu0 %v60
  %904 = vmatpush.msra.mxu0 %v57
  %905 = vmatpush.msra.mxu0 %v54
  %906 = vmatpush.msra.mxu0 %v51
  %907 = vmatpush.msra.mxu0 %v48
  %908 = vmatpush.msra.mxu0 %v45
  %909 = vmatpush.msra.mxu0 %v42
  %910 = vmatmul.f32.gmra.mxu0 %v870
  %v911 = vpop.f32.mrf.mxu0
  %v912 = vadd.f32 0.0, %v911
  %913 = vdwg.mxu0
  %914 = vmatpush.msra.mxu0 %v88
  %915 = vmatpush.msra.mxu0 %v85
  %916 = vmatpush.msra.mxu0 %v82
  %917 = vmatpush.msra.mxu0 %v79
  %918 = vmatpush.msra.mxu0 %v76
  %919 = vmatpush.msra.mxu0 %v73
  %920 = vmatpush.msra.mxu0 %v70
  %921 = vmatpush.msra.mxu0 %v67
  %922 = vmatpush.msra.mxu0 %v64
  %923 = vmatpush.msra.mxu0 %v61
  %924 = vmatpush.msra.mxu0 %v58
  %925 = vmatpush.msra.mxu0 %v55
  %926 = vmatpush.msra.mxu0 %v52
  %927 = vmatpush.msra.mxu0 %v49
  %928 = vmatpush.msra.mxu0 %v46
  %929 = vmatpush.msra.mxu0 %v43
  %930 = vmatmul.f32.gmra.mxu0 %v870
  %v931 = vpop.f32.mrf.mxu0
  %v932 = vadd.f32 0.0, %v931
  %933 = vdwg.mxu0
  %v934 = vadd.f32 %v871, %v892
  %v935 = vxor.u32 %v934, 2147483648
  %v936 = vmul.f32 %v935, 1.442695
  %v937 = vpow.pop %v936
  %v938 = vadd.f32 %v937, 1.0
  %v939 = vrcp.pop %v938
  %v940 = vmul.f32 %v938, %v939
  %v941 = vsub.f32 1.0, %v940
  %v942 = vmul.f32 %v939, %v941
  %v943 = vadd.f32 %v939, %v942
  %vm944 = vweird.f32 %v938
  %vm945 = vweird.f32 %v939
  %vm946 = vmor %vm944, %vm945
  %v947 = vsel %vm946, %v939, %v943
  %v948 = vand.u32 2147483647, %v938
  %vm949 = vcmp.eq.f32.partialorder %v948, 8.507059e+37
  %v950 = vand.u32 %v938, 2147483648
  %v951 = vor.u32 1.1754944e-38, %v950
  %v952 = vsel %vm949, %v951, %v947
  %v953 = vmul.f32 1.0, %v952
  %v954 = vadd.f32 %v872, %v912
  %v955 = vxor.u32 %v954, 2147483648
  %v956 = vmul.f32 %v955, 1.442695
  %v957 = vpow.pop %v956
  %v958 = vadd.f32 %v957, 1.0
  %v959 = vrcp.pop %v958
  %v960 = vmul.f32 %v958, %v959
  %v961 = vsub.f32 1.0, %v960
  %v962 = vmul.f32 %v959, %v961
  %v963 = vadd.f32 %v959, %v962
  %vm964 = vweird.f32 %v958
  %vm965 = vweird.f32 %v959
  %vm966 = vmor %vm964, %vm965
  %v967 = vsel %vm966, %v959, %v963
  %v968 = vand.u32 2147483647, %v958
  %vm969 = vcmp.eq.f32.partialorder %v968, 8.507059e+37
  %v970 = vand.u32 %v958, 2147483648
  %v971 = vor.u32 1.1754944e-38, %v970
  %v972 = vsel %vm969, %v971, %v967
  %v973 = vmul.f32 1.0, %v972
  %v974 = vadd.f32 %v932, %v91
  %v975 = vmul.f32 %v953, %v974
  %v976 = vadd.f32 %v873, %v975
  %v977 = vtanh.pop %v976
  %v978 = vsub.f32 1.0, %v973
  %v979 = vmul.f32 %v978, %v977
  %v980 = vmul.f32 %v973, %v870
  %v981 = vadd.f32 %v979, %v980
  %v982 = vsel %vm197, %v981, %v870
  %v983 = vld [vmem:[%s2 + $0xa8] sm:$0xff]
  %v984 = vld [vmem:[%s2 + $0xb0] sm:$0xff]
  %v985 = vld [vmem:[%s2 + $0xb8] sm:$0xff]
  %986 = vmatpush.msra.mxu0 %v86
  %987 = vmatpush.msra.mxu0 %v83
  %988 = vmatpush.msra.mxu0 %v80
  %989 = vmatpush.msra.mxu0 %v77
  %990 = vmatpush.msra.mxu0 %v74
  %991 = vmatpush.msra.mxu0 %v71
  %992 = vmatpush.msra.mxu0 %v68
  %993 = vmatpush.msra.mxu0 %v65
  %994 = vmatpush.msra.mxu0 %v62
  %995 = vmatpush.msra.mxu0 %v59
  %996 = vmatpush.msra.mxu0 %v56
  %997 = vmatpush.msra.mxu0 %v53
  %998 = vmatpush.msra.mxu0 %v50
  %999 = vmatpush.msra.mxu0 %v47
  %1000 = vmatpush.msra.mxu0 %v44
  %1001 = vmatpush.msra.mxu0 %v41
  %1002 = vmatmul.f32.gmra.mxu0 %v982
  %v1003 = vpop.f32.mrf.mxu0
  %v1004 = vadd.f32 0.0, %v1003
  %1005 = vdwg.mxu0
  %1006 = vmatpush.msra.mxu0 %v87
  %1007 = vmatpush.msra.mxu0 %v84
  %1008 = vmatpush.msra.mxu0 %v81
  %1009 = vmatpush.msra.mxu0 %v78
  %1010 = vmatpush.msra.mxu0 %v75
  %1011 = vmatpush.msra.mxu0 %v72
  %1012 = vmatpush.msra.mxu0 %v69
  %1013 = vmatpush.msra.mxu0 %v66
  %1014 = vmatpush.msra.mxu0 %v63
  %1015 = vmatpush.msra.mxu0 %v60
  %1016 = vmatpush.msra.mxu0 %v57
  %1017 = vmatpush.msra.mxu0 %v54
  %1018 = vmatpush.msra.mxu0 %v51
  %1019 = vmatpush.msra.mxu0 %v48
  %1020 = vmatpush.msra.mxu0 %v45
  %1021 = vmatpush.msra.mxu0 %v42
  %1022 = vmatmul.f32.gmra.mxu0 %v982
  %v1023 = vpop.f32.mrf.mxu0
  %v1024 = vadd.f32 0.0, %v1023
  %1025 = vdwg.mxu0
  %1026 = vmatpush.msra.mxu0 %v88
  %1027 = vmatpush.msra.mxu0 %v85
  %1028 = vmatpush.msra.mxu0 %v82
  %1029 = vmatpush.msra.mxu0 %v79
  %1030 = vmatpush.msra.mxu0 %v76
  %1031 = vmatpush.msra.mxu0 %v73
  %1032 = vmatpush.msra.mxu0 %v70
  %1033 = vmatpush.msra.mxu0 %v67
  %1034 = vmatpush.msra.mxu0 %v64
  %1035 = vmatpush.msra.mxu0 %v61
  %1036 = vmatpush.msra.mxu0 %v58
  %1037 = vmatpush.msra.mxu0 %v55
  %1038 = vmatpush.msra.mxu0 %v52
  %1039 = vmatpush.msra.mxu0 %v49
  %1040 = vmatpush.msra.mxu0 %v46
  %1041 = vmatpush.msra.mxu0 %v43
  %1042 = vmatmul.f32.gmra.mxu0 %v982
  %v1043 = vpop.f32.mrf.mxu0
  %v1044 = vadd.f32 0.0, %v1043
  %1045 = vdwg.mxu0
  %v1046 = vadd.f32 %v983, %v1004
  %v1047 = vxor.u32 %v1046, 2147483648
  %v1048 = vmul.f32 %v1047, 1.442695
  %v1049 = vpow.pop %v1048
  %v1050 = vadd.f32 %v1049, 1.0
  %v1051 = vrcp.pop %v1050
  %v1052 = vmul.f32 %v1050, %v1051
  %v1053 = vsub.f32 1.0, %v1052
  %v1054 = vmul.f32 %v1051, %v1053
  %v1055 = vadd.f32 %v1051, %v1054
  %vm1056 = vweird.f32 %v1050
  %vm1057 = vweird.f32 %v1051
  %vm1058 = vmor %vm1056, %vm1057
  %v1059 = vsel %vm1058, %v1051, %v1055
  %v1060 = vand.u32 2147483647, %v1050
  %vm1061 = vcmp.eq.f32.partialorder %v1060, 8.507059e+37
  %v1062 = vand.u32 %v1050, 2147483648
  %v1063 = vor.u32 1.1754944e-38, %v1062
  %v1064 = vsel %vm1061, %v1063, %v1059
  %v1065 = vmul.f32 1.0, %v1064
  %v1066 = vadd.f32 %v984, %v1024
  %v1067 = vxor.u32 %v1066, 2147483648
  %v1068 = vmul.f32 %v1067, 1.442695
  %v1069 = vpow.pop %v1068
  %v1070 = vadd.f32 %v1069, 1.0
  %v1071 = vrcp.pop %v1070
  %v1072 = vmul.f32 %v1070, %v1071
  %v1073 = vsub.f32 1.0, %v1072
  %v1074 = vmul.f32 %v1071, %v1073
  %v1075 = vadd.f32 %v1071, %v1074
  %vm1076 = vweird.f32 %v1070
  %vm1077 = vweird.f32 %v1071
  %vm1078 = vmor %vm1076, %vm1077
  %v1079 = vsel %vm1078, %v1071, %v1075
  %v1080 = vand.u32 2147483647, %v1070
  %vm1081 = vcmp.eq.f32.partialorder %v1080, 8.507059e+37
  %v1082 = vand.u32 %v1070, 2147483648
  %v1083 = vor.u32 1.1754944e-38, %v1082
  %v1084 = vsel %vm1081, %v1083, %v1079
  %v1085 = vmul.f32 1.0, %v1084
  %v1086 = vadd.f32 %v1044, %v91
  %v1087 = vmul.f32 %v1065, %v1086
  %v1088 = vadd.f32 %v985, %v1087
  %v1089 = vtanh.pop %v1088
  %v1090 = vsub.f32 1.0, %v1085
  %v1091 = vmul.f32 %v1090, %v1089
  %v1092 = vmul.f32 %v1085, %v982
  %v1093 = vadd.f32 %v1091, %v1092
  %v1094 = vsel %vm198, %v1093, %v982
  %1095 = vmatpush.msra.mxu0 %v174
  %1096 = vmatpush.msra.mxu0 %v170
  %1097 = vmatpush.msra.mxu0 %v166
  %1098 = vmatpush.msra.mxu0 %v162
  %1099 = vmatpush.msra.mxu0 %v158
  %1100 = vmatpush.msra.mxu0 %v154
  %1101 = vmatpush.msra.mxu0 %v150
  %1102 = vmatpush.msra.mxu0 %v146
  %1103 = vmatpush.msra.mxu0 %v142
  %1104 = vmatpush.msra.mxu0 %v138
  %1105 = vmatpush.msra.mxu0 %v134
  %1106 = vmatpush.msra.mxu0 %v130
  %1107 = vmatpush.msra.mxu0 %v126
  %1108 = vmatpush.msra.mxu0 %v122
  %1109 = vmatpush.msra.mxu0 %v118
  %1110 = vmatpush.msra.mxu0 %v114
  %1111 = vmatmul.f32.gmra.mxu0 %v1094
  %v1112 = vpop.f32.mrf.mxu0
  %v1113 = vadd.f32 %v180, %v1112
  %1114 = vdwg.mxu0
  %1115 = vmatpush.msra.mxu0 %v175
  %1116 = vmatpush.msra.mxu0 %v171
  %1117 = vmatpush.msra.mxu0 %v167
  %1118 = vmatpush.msra.mxu0 %v163
  %1119 = vmatpush.msra.mxu0 %v159
  %1120 = vmatpush.msra.mxu0 %v155
  %1121 = vmatpush.msra.mxu0 %v151
  %1122 = vmatpush.msra.mxu0 %v147
  %1123 = vmatpush.msra.mxu0 %v143
  %1124 = vmatpush.msra.mxu0 %v139
  %1125 = vmatpush.msra.mxu0 %v135
  %1126 = vmatpush.msra.mxu0 %v131
  %1127 = vmatpush.msra.mxu0 %v127
  %1128 = vmatpush.msra.mxu0 %v123
  %1129 = vmatpush.msra.mxu0 %v119
  %1130 = vmatpush.msra.mxu0 %v115
  %1131 = vmatmul.f32.gmra.mxu0 %v1094
  %v1132 = vpop.f32.mrf.mxu0
  %v1133 = vadd.f32 %v181, %v1132
  %1134 = vdwg.mxu0
  %1135 = vmatpush.msra.mxu0 %v176
  %1136 = vmatpush.msra.mxu0 %v172
  %1137 = vmatpush.msra.mxu0 %v168
  %1138 = vmatpush.msra.mxu0 %v164
  %1139 = vmatpush.msra.mxu0 %v160
  %1140 = vmatpush.msra.mxu0 %v156
  %1141 = vmatpush.msra.mxu0 %v152
  %1142 = vmatpush.msra.mxu0 %v148
  %1143 = vmatpush.msra.mxu0 %v144
  %1144 = vmatpush.msra.mxu0 %v140
  %1145 = vmatpush.msra.mxu0 %v136
  %1146 = vmatpush.msra.mxu0 %v132
  %1147 = vmatpush.msra.mxu0 %v128
  %1148 = vmatpush.msra.mxu0 %v124
  %1149 = vmatpush.msra.mxu0 %v120
  %1150 = vmatpush.msra.mxu0 %v116
  %1151 = vmatmul.f32.gmra.mxu0 %v1094
  %v1152 = vpop.f32.mrf.mxu0
  %v1153 = vadd.f32 %v182, %v1152
  %1154 = vdwg.mxu0
  %v1155 = vld [vmem:[%s1] sm:$0xff]
  %1156 = vset.pattern.permute.xlu0 0
  %1157 = vperm.xlu0 %1156, %v1155
  %v1158 = vpop.permute.xlu0 %1157
  %vm1159 = vcmp.eq.s32.totalorder %v35, %v1158
  %v1160 = vsel %vm1159, 1, 0
  %v1161 = vcvt.s32.f32 %v1160
  %vm1162 = vcmask 261120
  %v1164 = vsel %vm1162, %v1161, 0
  %1166 = vmatpush.msra.mxu0 0.0
  %1167 = vmatpush.msra.mxu0 0.0
  %1168 = vmatpush.msra.mxu0 0.0
  %1169 = vmatpush.msra.mxu0 0.0
  %1170 = vmatpush.msra.mxu0 0.0
  %1171 = vmatpush.msra.mxu0 0.0
  %1172 = vmatpush.msra.mxu0 0.0
  %1173 = vmatpush.msra.mxu0 0.0
  %1174 = vmatpush.msra.mxu0 0.0
  %1175 = vmatpush.msra.mxu0 0.0
  %1176 = vmatpush.msra.mxu0 0.0
  %1177 = vmatpush.msra.mxu0 0.0
  %1178 = vmatpush.msra.mxu0 %v102
  %1179 = vmatpush.msra.mxu0 %v99
  %1180 = vmatpush.msra.mxu0 %v96
  %1181 = vmatpush.msra.mxu0 %v93
  %1182 = vmatmul.f32.gmra.mxu0 %v1164
  %v1183 = vpop.f32.mrf.mxu0
  %v1184 = vadd.f32 %v107, %v1183
  %1185 = vdwg.mxu0
  %1186 = vmatpush.msra.mxu0 0.0
  %1187 = vmatpush.msra.mxu0 0.0
  %1188 = vmatpush.msra.mxu0 0.0
  %1189 = vmatpush.msra.mxu0 0.0
  %1190 = vmatpush.msra.mxu0 0.0
  %1191 = vmatpush.msra.mxu0 0.0
  %1192 = vmatpush.msra.mxu0 0.0
  %1193 = vmatpush.msra.mxu0 0.0
  %1194 = vmatpush.msra.mxu0 0.0
  %1195 = vmatpush.msra.mxu0 0.0
  %1196 = vmatpush.msra.mxu0 0.0
  %1197 = vmatpush.msra.mxu0 0.0
  %1198 = vmatpush.msra.mxu0 %v103
  %1199 = vmatpush.msra.mxu0 %v100
  %1200 = vmatpush.msra.mxu0 %v97
  %1201 = vmatpush.msra.mxu0 %v94
  %1202 = vmatmul.f32.gmra.mxu0 %v1164
  %v1203 = vpop.f32.mrf.mxu0
  %v1204 = vadd.f32 %v108, %v1203
  %1205 = vdwg.mxu0
  %1206 = vmatpush.msra.mxu0 0.0
  %1207 = vmatpush.msra.mxu0 0.0
  %1208 = vmatpush.msra.mxu0 0.0
  %1209 = vmatpush.msra.mxu0 0.0
  %1210 = vmatpush.msra.mxu0 0.0
  %1211 = vmatpush.msra.mxu0 0.0
  %1212 = vmatpush.msra.mxu0 0.0
  %1213 = vmatpush.msra.mxu0 0.0
  %1214 = vmatpush.msra.mxu0 0.0
  %1215 = vmatpush.msra.mxu0 0.0
  %1216 = vmatpush.msra.mxu0 0.0
  %1217 = vmatpush.msra.mxu0 0.0
  %1218 = vmatpush.msra.mxu0 %v104
  %1219 = vmatpush.msra.mxu0 %v101
  %1220 = vmatpush.msra.mxu0 %v98
  %1221 = vmatpush.msra.mxu0 %v95
  %1222 = vmatmul.f32.gmra.mxu0 %v1164
  %v1223 = vpop.f32.mrf.mxu0
  %v1224 = vadd.f32 %v109, %v1223
  %1225 = vdwg.mxu0
  %v1226 = vadd.f32 %v1184, %v1113
  %v1227 = vxor.u32 %v1226, 2147483648
  %v1228 = vmul.f32 %v1227, 1.442695
  %v1229 = vpow.pop %v1228
  %v1230 = vadd.f32 %v1229, 1.0
  %v1231 = vrcp.pop %v1230
  %v1232 = vmul.f32 %v1230, %v1231
  %v1233 = vsub.f32 1.0, %v1232
  %v1234 = vmul.f32 %v1231, %v1233
  %v1235 = vadd.f32 %v1231, %v1234
  %vm1236 = vweird.f32 %v1230
  %vm1237 = vweird.f32 %v1231
  %vm1238 = vmor %vm1236, %vm1237
  %v1239 = vsel %vm1238, %v1231, %v1235
  %v1240 = vand.u32 2147483647, %v1230
  %vm1241 = vcmp.eq.f32.partialorder %v1240, 8.507059e+37
  %v1242 = vand.u32 %v1230, 2147483648
  %v1243 = vor.u32 1.1754944e-38, %v1242
  %v1244 = vsel %vm1241, %v1243, %v1239
  %v1245 = vmul.f32 1.0, %v1244
  %v1246 = vadd.f32 %v1204, %v1133
  %v1247 = vxor.u32 %v1246, 2147483648
  %v1248 = vmul.f32 %v1247, 1.442695
  %v1249 = vpow.pop %v1248
  %v1250 = vadd.f32 %v1249, 1.0
  %v1251 = vrcp.pop %v1250
  %v1252 = vmul.f32 %v1250, %v1251
  %v1253 = vsub.f32 1.0, %v1252
  %v1254 = vmul.f32 %v1251, %v1253
  %v1255 = vadd.f32 %v1251, %v1254
  %vm1256 = vweird.f32 %v1250
  %vm1257 = vweird.f32 %v1251
  %vm1258 = vmor %vm1256, %vm1257
  %v1259 = vsel %vm1258, %v1251, %v1255
  %v1260 = vand.u32 2147483647, %v1250
  %vm1261 = vcmp.eq.f32.partialorder %v1260, 8.507059e+37
  %v1262 = vand.u32 %v1250, 2147483648
  %v1263 = vor.u32 1.1754944e-38, %v1262
  %v1264 = vsel %vm1261, %v1263, %v1259
  %v1265 = vmul.f32 1.0, %v1264
  %v1266 = vmul.f32 %v1245, %v1153
  %v1267 = vadd.f32 %v1224, %v1266
  %v1268 = vtanh.pop %v1267
  %v1269 = vsub.f32 1.0, %v1265
  %v1270 = vmul.f32 %v1269, %v1268
  %v1271 = vmul.f32 %v1265, %v1094
  %v1272 = vadd.f32 %v1270, %v1271
  %1273 = vmatpush.msra.mxu0 %v173
  %1274 = vmatpush.msra.mxu0 %v169
  %1275 = vmatpush.msra.mxu0 %v165
  %1276 = vmatpush.msra.mxu0 %v161
  %1277 = vmatpush.msra.mxu0 %v157
  %1278 = vmatpush.msra.mxu0 %v153
  %1279 = vmatpush.msra.mxu0 %v149
  %1280 = vmatpush.msra.mxu0 %v145
  %1281 = vmatpush.msra.mxu0 %v141
  %1282 = vmatpush.msra.mxu0 %v137
  %1283 = vmatpush.msra.mxu0 %v133
  %1284 = vmatpush.msra.mxu0 %v129
  %1285 = vmatpush.msra.mxu0 %v125
  %1286 = vmatpush.msra.mxu0 %v121
  %1287 = vmatpush.msra.mxu0 %v117
  %1288 = vmatpush.msra.mxu0 %v113
  %1289 = vmatmul.f32.gmra.mxu0 %v1272
  %v1290 = vpop.f32.mrf.mxu0
  %v1291 = vadd.f32 %v179, %v1290
  %1292 = vdwg.mxu0
  %1293 = vmatpush.msra.mxu0 %v174
  %1294 = vmatpush.msra.mxu0 %v170
  %1295 = vmatpush.msra.mxu0 %v166
  %1296 = vmatpush.msra.mxu0 %v162
  %1297 = vmatpush.msra.mxu0 %v158
  %1298 = vmatpush.msra.mxu0 %v154
  %1299 = vmatpush.msra.mxu0 %v150
  %1300 = vmatpush.msra.mxu0 %v146
  %1301 = vmatpush.msra.mxu0 %v142
  %1302 = vmatpush.msra.mxu0 %v138
  %1303 = vmatpush.msra.mxu0 %v134
  %1304 = vmatpush.msra.mxu0 %v130
  %1305 = vmatpush.msra.mxu0 %v126
  %1306 = vmatpush.msra.mxu0 %v122
  %1307 = vmatpush.msra.mxu0 %v118
  %1308 = vmatpush.msra.mxu0 %v114
  %1309 = vmatmul.f32.gmra.mxu0 %v1272
  %v1310 = vpop.f32.mrf.mxu0
  %v1311 = vadd.f32 %v180, %v1310
  %1312 = vdwg.mxu0
  %1313 = vmatpush.msra.mxu0 %v175
  %1314 = vmatpush.msra.mxu0 %v171
  %1315 = vmatpush.msra.mxu0 %v167
  %1316 = vmatpush.msra.mxu0 %v163
  %1317 = vmatpush.msra.mxu0 %v159
  %1318 = vmatpush.msra.mxu0 %v155
  %1319 = vmatpush.msra.mxu0 %v151
  %1320 = vmatpush.msra.mxu0 %v147
  %1321 = vmatpush.msra.mxu0 %v143
  %1322 = vmatpush.msra.mxu0 %v139
  %1323 = vmatpush.msra.mxu0 %v135
  %1324 = vmatpush.msra.mxu0 %v131
  %1325 = vmatpush.msra.mxu0 %v127
  %1326 = vmatpush.msra.mxu0 %v123
  %1327 = vmatpush.msra.mxu0 %v119
  %1328 = vmatpush.msra.mxu0 %v115
  %1329 = vmatmul.f32.gmra.mxu0 %v1272
  %v1330 = vpop.f32.mrf.mxu0
  %v1331 = vadd.f32 %v181, %v1330
  %1332 = vdwg.mxu0
  %1333 = vmatpush.msra.mxu0 %v176
  %1334 = vmatpush.msra.mxu0 %v172
  %1335 = vmatpush.msra.mxu0 %v168
  %1336 = vmatpush.msra.mxu0 %v164
  %1337 = vmatpush.msra.mxu0 %v160
  %1338 = vmatpush.msra.mxu0 %v156
  %1339 = vmatpush.msra.mxu0 %v152
  %1340 = vmatpush.msra.mxu0 %v148
  %1341 = vmatpush.msra.mxu0 %v144
  %1342 = vmatpush.msra.mxu0 %v140
  %1343 = vmatpush.msra.mxu0 %v136
  %1344 = vmatpush.msra.mxu0 %v132
  %1345 = vmatpush.msra.mxu0 %v128
  %1346 = vmatpush.msra.mxu0 %v124
  %1347 = vmatpush.msra.mxu0 %v120
  %1348 = vmatpush.msra.mxu0 %v116
  %1349 = vmatmul.f32.gmra.mxu0 %v1272
  %v1350 = vpop.f32.mrf.mxu0
  %v1351 = vadd.f32 %v182, %v1350
  %1352 = vdwg.mxu0
  %v1353 = vadd.f32 %v1291, %v40
  %1354 = vmax.xlane.f32.xlu0 %v1353
  %v1355 = vpop.xlane.xlu0 %1354
  %vm1356 = vcmp.eq.f32.partialorder %v1353, %v1355
  %v1357 = vsel %vm1356, 1, 0
  %v1358 = vcvt.s32.f32 %v1357
  %v1359 = vsel %vm1356, %v35, 128
  %v1360 = vand.u32 %v1359, 65535
  %v1361 = vshra.s32 %v1359, 16
  %v1362 = vcvt.s32.f32 %v1360
  %v1363 = vcvt.s32.f32 %v1361
  %1364 = vmin.xlane.f32.xlu0 %v1363
  %v1365 = vpop.xlane.xlu0 %1364
  %vm1366 = vcmp.eq.f32.partialorder %v1363, %v1365
  %v1367 = vsel %vm1366, %v1362, inf
  %1368 = vmin.xlane.f32.xlu0 %v1367
  %v1369 = vpop.xlane.xlu0 %1368
  %v1370 = vcvt.f32.s32 %v1369
  %v1371 = vcvt.f32.s32 %v1365
  %v1372 = vshll.u32 %v1371, 16
  %v1373 = vadd.s32 %v1372, %v1370
  %1374 = vst [vmem:[%s9] sm:$0xff] %v1291
  %vm1375 = vcmp.ne.s32.totalorder %v1373, 27
  %v1377 = vsel %vm1162, %v1358, 0
  %1379 = vmatpush.msra.mxu0 0.0
  %1380 = vmatpush.msra.mxu0 0.0
  %1381 = vmatpush.msra.mxu0 0.0
  %1382 = vmatpush.msra.mxu0 0.0
  %1383 = vmatpush.msra.mxu0 0.0
  %1384 = vmatpush.msra.mxu0 0.0
  %1385 = vmatpush.msra.mxu0 0.0
  %1386 = vmatpush.msra.mxu0 0.0
  %1387 = vmatpush.msra.mxu0 0.0
  %1388 = vmatpush.msra.mxu0 0.0
  %1389 = vmatpush.msra.mxu0 0.0
  %1390 = vmatpush.msra.mxu0 0.0
  %1391 = vmatpush.msra.mxu0 %v102
  %1392 = vmatpush.msra.mxu0 %v99
  %1393 = vmatpush.msra.mxu0 %v96
  %1394 = vmatpush.msra.mxu0 %v93
  %1395 = vmatmul.f32.gmra.mxu0 %v1377
  %v1396 = vpop.f32.mrf.mxu0
  %v1397 = vadd.f32 %v107, %v1396
  %1398 = vdwg.mxu0
  %1399 = vmatpush.msra.mxu0 0.0
  %1400 = vmatpush.msra.mxu0 0.0
  %1401 = vmatpush.msra.mxu0 0.0
  %1402 = vmatpush.msra.mxu0 0.0
  %1403 = vmatpush.msra.mxu0 0.0
  %1404 = vmatpush.msra.mxu0 0.0
  %1405 = vmatpush.msra.mxu0 0.0
  %1406 = vmatpush.msra.mxu0 0.0
  %1407 = vmatpush.msra.mxu0 0.0
  %1408 = vmatpush.msra.mxu0 0.0
  %1409 = vmatpush.msra.mxu0 0.0
  %1410 = vmatpush.msra.mxu0 0.0
  %1411 = vmatpush.msra.mxu0 %v103
  %1412 = vmatpush.msra.mxu0 %v100
  %1413 = vmatpush.msra.mxu0 %v97
  %1414 = vmatpush.msra.mxu0 %v94
  %1415 = vmatmul.f32.gmra.mxu0 %v1377
  %v1416 = vpop.f32.mrf.mxu0
  %v1417 = vadd.f32 %v108, %v1416
  %1418 = vdwg.mxu0
  %1419 = vmatpush.msra.mxu0 0.0
  %1420 = vmatpush.msra.mxu0 0.0
  %1421 = vmatpush.msra.mxu0 0.0
  %1422 = vmatpush.msra.mxu0 0.0
  %1423 = vmatpush.msra.mxu0 0.0
  %1424 = vmatpush.msra.mxu0 0.0
  %1425 = vmatpush.msra.mxu0 0.0
  %1426 = vmatpush.msra.mxu0 0.0
  %1427 = vmatpush.msra.mxu0 0.0
  %1428 = vmatpush.msra.mxu0 0.0
  %1429 = vmatpush.msra.mxu0 0.0
  %1430 = vmatpush.msra.mxu0 0.0
  %1431 = vmatpush.msra.mxu0 %v104
  %1432 = vmatpush.msra.mxu0 %v101
  %1433 = vmatpush.msra.mxu0 %v98
  %1434 = vmatpush.msra.mxu0 %v95
  %1435 = vmatmul.f32.gmra.mxu0 %v1377
  %v1436 = vpop.f32.mrf.mxu0
  %v1437 = vadd.f32 %v109, %v1436
  %1438 = vdwg.mxu0
  %v1439 = vadd.f32 %v1397, %v1311
  %v1440 = vxor.u32 %v1439, 2147483648
  %v1441 = vmul.f32 %v1440, 1.442695
  %v1442 = vpow.pop %v1441
  %v1443 = vadd.f32 %v1442, 1.0
  %v1444 = vrcp.pop %v1443
  %v1445 = vmul.f32 %v1443, %v1444
  %v1446 = vsub.f32 1.0, %v1445
  %v1447 = vmul.f32 %v1444, %v1446
  %v1448 = vadd.f32 %v1444, %v1447
  %vm1449 = vweird.f32 %v1443
  %vm1450 = vweird.f32 %v1444
  %vm1451 = vmor %vm1449, %vm1450
  %v1452 = vsel %vm1451, %v1444, %v1448
  %v1453 = vand.u32 2147483647, %v1443
  %vm1454 = vcmp.eq.f32.partialorder %v1453, 8.507059e+37
  %v1455 = vand.u32 %v1443, 2147483648
  %v1456 = vor.u32 1.1754944e-38, %v1455
  %v1457 = vsel %vm1454, %v1456, %v1452
  %v1458 = vmul.f32 1.0, %v1457
  %v1459 = vadd.f32 %v1417, %v1331
  %v1460 = vxor.u32 %v1459, 2147483648
  %v1461 = vmul.f32 %v1460, 1.442695
  %v1462 = vpow.pop %v1461
  %v1463 = vadd.f32 %v1462, 1.0
  %v1464 = vrcp.pop %v1463
  %v1465 = vmul.f32 %v1463, %v1464
  %v1466 = vsub.f32 1.0, %v1465
  %v1467 = vmul.f32 %v1464, %v1466
  %v1468 = vadd.f32 %v1464, %v1467
  %vm1469 = vweird.f32 %v1463
  %vm1470 = vweird.f32 %v1464
  %vm1471 = vmor %vm1469, %vm1470
  %v1472 = vsel %vm1471, %v1464, %v1468
  %v1473 = vand.u32 2147483647, %v1463
  %vm1474 = vcmp.eq.f32.partialorder %v1473, 8.507059e+37
  %v1475 = vand.u32 %v1463, 2147483648
  %v1476 = vor.u32 1.1754944e-38, %v1475
  %v1477 = vsel %vm1474, %v1476, %v1472
  %v1478 = vmul.f32 1.0, %v1477
  %v1479 = vmul.f32 %v1458, %v1351
  %v1480 = vadd.f32 %v1437, %v1479
  %v1481 = vtanh.pop %v1480
  %v1482 = vsub.f32 1.0, %v1478
  %v1483 = vmul.f32 %v1482, %v1481
  %v1484 = vmul.f32 %v1478, %v1272
  %v1485 = vadd.f32 %v1483, %v1484
  %1486 = vmatpush.msra.mxu0 %v173
  %1487 = vmatpush.msra.mxu0 %v169
  %1488 = vmatpush.msra.mxu0 %v165
  %1489 = vmatpush.msra.mxu0 %v161
  %1490 = vmatpush.msra.mxu0 %v157
  %1491 = vmatpush.msra.mxu0 %v153
  %1492 = vmatpush.msra.mxu0 %v149
  %1493 = vmatpush.msra.mxu0 %v145
  %1494 = vmatpush.msra.mxu0 %v141
  %1495 = vmatpush.msra.mxu0 %v137
  %1496 = vmatpush.msra.mxu0 %v133
  %1497 = vmatpush.msra.mxu0 %v129
  %1498 = vmatpush.msra.mxu0 %v125
  %1499 = vmatpush.msra.mxu0 %v121
  %1500 = vmatpush.msra.mxu0 %v117
  %1501 = vmatpush.msra.mxu0 %v113
  %1502 = vmatmul.f32.gmra.mxu0 %v1485
  %v1503 = vpop.f32.mrf.mxu0
  %v1504 = vadd.f32 %v179, %v1503
  %1505 = vdwg.mxu0
  %1506 = vmatpush.msra.mxu0 %v174
  %1507 = vmatpush.msra.mxu0 %v170
  %1508 = vmatpush.msra.mxu0 %v166
  %1509 = vmatpush.msra.mxu0 %v162
  %1510 = vmatpush.msra.mxu0 %v158
  %1511 = vmatpush.msra.mxu0 %v154
  %1512 = vmatpush.msra.mxu0 %v150
  %1513 = vmatpush.msra.mxu0 %v146
  %1514 = vmatpush.msra.mxu0 %v142
  %1515 = vmatpush.msra.mxu0 %v138
  %1516 = vmatpush.msra.mxu0 %v134
  %1517 = vmatpush.msra.mxu0 %v130
  %1518 = vmatpush.msra.mxu0 %v126
  %1519 = vmatpush.msra.mxu0 %v122
  %1520 = vmatpush.msra.mxu0 %v118
  %1521 = vmatpush.msra.mxu0 %v114
  %1522 = vmatmul.f32.gmra.mxu0 %v1485
  %v1523 = vpop.f32.mrf.mxu0
  %v1524 = vadd.f32 %v180, %v1523
  %1525 = vdwg.mxu0
  %1526 = vmatpush.msra.mxu0 %v175
  %1527 = vmatpush.msra.mxu0 %v171
  %1528 = vmatpush.msra.mxu0 %v167
  %1529 = vmatpush.msra.mxu0 %v163
  %1530 = vmatpush.msra.mxu0 %v159
  %1531 = vmatpush.msra.mxu0 %v155
  %1532 = vmatpush.msra.mxu0 %v151
  %1533 = vmatpush.msra.mxu0 %v147
  %1534 = vmatpush.msra.mxu0 %v143
  %1535 = vmatpush.msra.mxu0 %v139
  %1536 = vmatpush.msra.mxu0 %v135
  %1537 = vmatpush.msra.mxu0 %v131
  %1538 = vmatpush.msra.mxu0 %v127
  %1539 = vmatpush.msra.mxu0 %v123
  %1540 = vmatpush.msra.mxu0 %v119
  %1541 = vmatpush.msra.mxu0 %v115
  %1542 = vmatmul.f32.gmra.mxu0 %v1485
  %v1543 = vpop.f32.mrf.mxu0
  %v1544 = vadd.f32 %v181, %v1543
  %1545 = vdwg.mxu0
  %1546 = vmatpush.msra.mxu0 %v176
  %1547 = vmatpush.msra.mxu0 %v172
  %1548 = vmatpush.msra.mxu0 %v168
  %1549 = vmatpush.msra.mxu0 %v164
  %1550 = vmatpush.msra.mxu0 %v160
  %1551 = vmatpush.msra.mxu0 %v156
  %1552 = vmatpush.msra.mxu0 %v152
  %1553 = vmatpush.msra.mxu0 %v148
  %1554 = vmatpush.msra.mxu0 %v144
  %1555 = vmatpush.msra.mxu0 %v140
  %1556 = vmatpush.msra.mxu0 %v136
  %1557 = vmatpush.msra.mxu0 %v132
  %1558 = vmatpush.msra.mxu0 %v128
  %1559 = vmatpush.msra.mxu0 %v124
  %1560 = vmatpush.msra.mxu0 %v120
  %1561 = vmatpush.msra.mxu0 %v116
  %1562 = vmatmul.f32.gmra.mxu0 %v1485
  %v1563 = vpop.f32.mrf.mxu0
  %v1564 = vadd.f32 %v182, %v1563
  %1565 = vdwg.mxu0
  %v1566 = vadd.f32 %v1504, %v40
  %1567 = vmax.xlane.f32.xlu0 %v1566
  %v1568 = vpop.xlane.xlu0 %1567
  %vm1569 = vcmp.eq.f32.partialorder %v1566, %v1568
  %v1570 = vsel %vm1569, 1, 0
  %v1571 = vcvt.s32.f32 %v1570
  %v1572 = vsel %vm1569, %v35, 128
  %v1573 = vand.u32 %v1572, 65535
  %v1574 = vshra.s32 %v1572, 16
  %v1575 = vcvt.s32.f32 %v1573
  %v1576 = vcvt.s32.f32 %v1574
  %1577 = vmin.xlane.f32.xlu0 %v1576
  %v1578 = vpop.xlane.xlu0 %1577
  %vm1579 = vcmp.eq.f32.partialorder %v1576, %v1578
  %v1580 = vsel %vm1579, %v1575, inf
  %1581 = vmin.xlane.f32.xlu0 %v1580
  %v1582 = vpop.xlane.xlu0 %1581
  %v1583 = vcvt.f32.s32 %v1582
  %v1584 = vcvt.f32.s32 %v1578
  %v1585 = vshll.u32 %v1584, 16
  %v1586 = vadd.s32 %v1585, %v1583
  %v1587 = vsel %vm1375, 1, 0
  %vm1588 = vcmp.eq.s32.totalorder %v1587, 1
  %v1589 = vsel %vm1588, %v1504, %v38
  %1590 = vst [vmem:[%s9 + $0x8] sm:$0xff] %v1589
  %v1591 = vsel %vm1375, %v1586, 0
  %vm1592 = vcmp.ne.s32.totalorder %v1586, 27
  %vm1593 = vmand %vm1375, %vm1592
  %v1595 = vsel %vm1162, %v1571, 0
  %1597 = vmatpush.msra.mxu0 0.0
  %1598 = vmatpush.msra.mxu0 0.0
  %1599 = vmatpush.msra.mxu0 0.0
  %1600 = vmatpush.msra.mxu0 0.0
  %1601 = vmatpush.msra.mxu0 0.0
  %1602 = vmatpush.msra.mxu0 0.0
  %1603 = vmatpush.msra.mxu0 0.0
  %1604 = vmatpush.msra.mxu0 0.0
  %1605 = vmatpush.msra.mxu0 0.0
  %1606 = vmatpush.msra.mxu0 0.0
  %1607 = vmatpush.msra.mxu0 0.0
  %1608 = vmatpush.msra.mxu0 0.0
  %1609 = vmatpush.msra.mxu0 %v102
  %1610 = vmatpush.msra.mxu0 %v99
  %1611 = vmatpush.msra.mxu0 %v96
  %1612 = vmatpush.msra.mxu0 %v93
  %1613 = vmatmul.f32.gmra.mxu0 %v1595
  %v1614 = vpop.f32.mrf.mxu0
  %v1615 = vadd.f32 %v107, %v1614
  %1616 = vdwg.mxu0
  %1617 = vmatpush.msra.mxu0 0.0
  %1618 = vmatpush.msra.mxu0 0.0
  %1619 = vmatpush.msra.mxu0 0.0
  %1620 = vmatpush.msra.mxu0 0.0
  %1621 = vmatpush.msra.mxu0 0.0
  %1622 = vmatpush.msra.mxu0 0.0
  %1623 = vmatpush.msra.mxu0 0.0
  %1624 = vmatpush.msra.mxu0 0.0
  %1625 = vmatpush.msra.mxu0 0.0
  %1626 = vmatpush.msra.mxu0 0.0
  %1627 = vmatpush.msra.mxu0 0.0
  %1628 = vmatpush.msra.mxu0 0.0
  %1629 = vmatpush.msra.mxu0 %v103
  %1630 = vmatpush.msra.mxu0 %v100
  %1631 = vmatpush.msra.mxu0 %v97
  %1632 = vmatpush.msra.mxu0 %v94
  %1633 = vmatmul.f32.gmra.mxu0 %v1595
  %v1634 = vpop.f32.mrf.mxu0
  %v1635 = vadd.f32 %v108, %v1634
  %1636 = vdwg.mxu0
  %1637 = vmatpush.msra.mxu0 0.0
  %1638 = vmatpush.msra.mxu0 0.0
  %1639 = vmatpush.msra.mxu0 0.0
  %1640 = vmatpush.msra.mxu0 0.0
  %1641 = vmatpush.msra.mxu0 0.0
  %1642 = vmatpush.msra.mxu0 0.0
  %1643 = vmatpush.msra.mxu0 0.0
  %1644 = vmatpush.msra.mxu0 0.0
  %1645 = vmatpush.msra.mxu0 0.0
  %1646 = vmatpush.msra.mxu0 0.0
  %1647 = vmatpush.msra.mxu0 0.0
  %1648 = vmatpush.msra.mxu0 0.0
  %1649 = vmatpush.msra.mxu0 %v104
  %1650 = vmatpush.msra.mxu0 %v101
  %1651 = vmatpush.msra.mxu0 %v98
  %1652 = vmatpush.msra.mxu0 %v95
  %1653 = vmatmul.f32.gmra.mxu0 %v1595
  %v1654 = vpop.f32.mrf.mxu0
  %v1655 = vadd.f32 %v109, %v1654
  %1656 = vdwg.mxu0
  %v1657 = vadd.f32 %v1615, %v1524
  %v1658 = vxor.u32 %v1657, 2147483648
  %v1659 = vmul.f32 %v1658, 1.442695
  %v1660 = vpow.pop %v1659
  %v1661 = vadd.f32 %v1660, 1.0
  %v1662 = vrcp.pop %v1661
  %v1663 = vmul.f32 %v1661, %v1662
  %v1664 = vsub.f32 1.0, %v1663
  %v1665 = vmul.f32 %v1662, %v1664
  %v1666 = vadd.f32 %v1662, %v1665
  %vm1667 = vweird.f32 %v1661
  %vm1668 = vweird.f32 %v1662
  %vm1669 = vmor %vm1667, %vm1668
  %v1670 = vsel %vm1669, %v1662, %v1666
  %v1671 = vand.u32 2147483647, %v1661
  %vm1672 = vcmp.eq.f32.partialorder %v1671, 8.507059e+37
  %v1673 = vand.u32 %v1661, 2147483648
  %v1674 = vor.u32 1.1754944e-38, %v1673
  %v1675 = vsel %vm1672, %v1674, %v1670
  %v1676 = vmul.f32 1.0, %v1675
  %v1677 = vadd.f32 %v1635, %v1544
  %v1678 = vxor.u32 %v1677, 2147483648
  %v1679 = vmul.f32 %v1678, 1.442695
  %v1680 = vpow.pop %v1679
  %v1681 = vadd.f32 %v1680, 1.0
  %v1682 = vrcp.pop %v1681
  %v1683 = vmul.f32 %v1681, %v1682
  %v1684 = vsub.f32 1.0, %v1683
  %v1685 = vmul.f32 %v1682, %v1684
  %v1686 = vadd.f32 %v1682, %v1685
  %vm1687 = vweird.f32 %v1681
  %vm1688 = vweird.f32 %v1682
  %vm1689 = vmor %vm1687, %vm1688
  %v1690 = vsel %vm1689, %v1682, %v1686
  %v1691 = vand.u32 2147483647, %v1681
  %vm1692 = vcmp.eq.f32.partialorder %v1691, 8.507059e+37
  %v1693 = vand.u32 %v1681, 2147483648
  %v1694 = vor.u32 1.1754944e-38, %v1693
  %v1695 = vsel %vm1692, %v1694, %v1690
  %v1696 = vmul.f32 1.0, %v1695
  %v1697 = vmul.f32 %v1676, %v1564
  %v1698 = vadd.f32 %v1655, %v1697
  %v1699 = vtanh.pop %v1698
  %v1700 = vsub.f32 1.0, %v1696
  %v1701 = vmul.f32 %v1700, %v1699
  %v1702 = vmul.f32 %v1696, %v1485
  %v1703 = vadd.f32 %v1701, %v1702
  %1704 = vmatpush.msra.mxu0 %v173
  %1705 = vmatpush.msra.mxu0 %v169
  %1706 = vmatpush.msra.mxu0 %v165
  %1707 = vmatpush.msra.mxu0 %v161
  %1708 = vmatpush.msra.mxu0 %v157
  %1709 = vmatpush.msra.mxu0 %v153
  %1710 = vmatpush.msra.mxu0 %v149
  %1711 = vmatpush.msra.mxu0 %v145
  %1712 = vmatpush.msra.mxu0 %v141
  %1713 = vmatpush.msra.mxu0 %v137
  %1714 = vmatpush.msra.mxu0 %v133
  %1715 = vmatpush.msra.mxu0 %v129
  %1716 = vmatpush.msra.mxu0 %v125
  %1717 = vmatpush.msra.mxu0 %v121
  %1718 = vmatpush.msra.mxu0 %v117
  %1719 = vmatpush.msra.mxu0 %v113
  %1720 = vmatmul.f32.gmra.mxu0 %v1703
  %v1721 = vpop.f32.mrf.mxu0
  %v1722 = vadd.f32 %v179, %v1721
  %1723 = vdwg.mxu0
  %1724 = vmatpush.msra.mxu0 %v174
  %1725 = vmatpush.msra.mxu0 %v170
  %1726 = vmatpush.msra.mxu0 %v166
  %1727 = vmatpush.msra.mxu0 %v162
  %1728 = vmatpush.msra.mxu0 %v158
  %1729 = vmatpush.msra.mxu0 %v154
  %1730 = vmatpush.msra.mxu0 %v150
  %1731 = vmatpush.msra.mxu0 %v146
  %1732 = vmatpush.msra.mxu0 %v142
  %1733 = vmatpush.msra.mxu0 %v138
  %1734 = vmatpush.msra.mxu0 %v134
  %1735 = vmatpush.msra.mxu0 %v130
  %1736 = vmatpush.msra.mxu0 %v126
  %1737 = vmatpush.msra.mxu0 %v122
  %1738 = vmatpush.msra.mxu0 %v118
  %1739 = vmatpush.msra.mxu0 %v114
  %1740 = vmatmul.f32.gmra.mxu0 %v1703
  %v1741 = vpop.f32.mrf.mxu0
  %v1742 = vadd.f32 %v180, %v1741
  %1743 = vdwg.mxu0
  %1744 = vmatpush.msra.mxu0 %v175
  %1745 = vmatpush.msra.mxu0 %v171
  %1746 = vmatpush.msra.mxu0 %v167
  %1747 = vmatpush.msra.mxu0 %v163
  %1748 = vmatpush.msra.mxu0 %v159
  %1749 = vmatpush.msra.mxu0 %v155
  %1750 = vmatpush.msra.mxu0 %v151
  %1751 = vmatpush.msra.mxu0 %v147
  %1752 = vmatpush.msra.mxu0 %v143
  %1753 = vmatpush.msra.mxu0 %v139
  %1754 = vmatpush.msra.mxu0 %v135
  %1755 = vmatpush.msra.mxu0 %v131
  %1756 = vmatpush.msra.mxu0 %v127
  %1757 = vmatpush.msra.mxu0 %v123
  %1758 = vmatpush.msra.mxu0 %v119
  %1759 = vmatpush.msra.mxu0 %v115
  %1760 = vmatmul.f32.gmra.mxu0 %v1703
  %v1761 = vpop.f32.mrf.mxu0
  %v1762 = vadd.f32 %v181, %v1761
  %1763 = vdwg.mxu0
  %1764 = vmatpush.msra.mxu0 %v176
  %1765 = vmatpush.msra.mxu0 %v172
  %1766 = vmatpush.msra.mxu0 %v168
  %1767 = vmatpush.msra.mxu0 %v164
  %1768 = vmatpush.msra.mxu0 %v160
  %1769 = vmatpush.msra.mxu0 %v156
  %1770 = vmatpush.msra.mxu0 %v152
  %1771 = vmatpush.msra.mxu0 %v148
  %1772 = vmatpush.msra.mxu0 %v144
  %1773 = vmatpush.msra.mxu0 %v140
  %1774 = vmatpush.msra.mxu0 %v136
  %1775 = vmatpush.msra.mxu0 %v132
  %1776 = vmatpush.msra.mxu0 %v128
  %1777 = vmatpush.msra.mxu0 %v124
  %1778 = vmatpush.msra.mxu0 %v120
  %1779 = vmatpush.msra.mxu0 %v116
  %1780 = vmatmul.f32.gmra.mxu0 %v1703
  %v1781 = vpop.f32.mrf.mxu0
  %v1782 = vadd.f32 %v182, %v1781
  %1783 = vdwg.mxu0
  %v1784 = vadd.f32 %v1722, %v40
  %1785 = vmax.xlane.f32.xlu0 %v1784
  %v1786 = vpop.xlane.xlu0 %1785
  %vm1787 = vcmp.eq.f32.partialorder %v1784, %v1786
  %v1788 = vsel %vm1787, 1, 0
  %v1789 = vcvt.s32.f32 %v1788
  %v1790 = vsel %vm1787, %v35, 128
  %v1791 = vand.u32 %v1790, 65535
  %v1792 = vshra.s32 %v1790, 16
  %v1793 = vcvt.s32.f32 %v1791
  %v1794 = vcvt.s32.f32 %v1792
  %1795 = vmin.xlane.f32.xlu0 %v1794
  %v1796 = vpop.xlane.xlu0 %1795
  %vm1797 = vcmp.eq.f32.partialorder %v1794, %v1796
  %v1798 = vsel %vm1797, %v1793, inf
  %1799 = vmin.xlane.f32.xlu0 %v1798
  %v1800 = vpop.xlane.xlu0 %1799
  %v1801 = vcvt.f32.s32 %v1800
  %v1802 = vcvt.f32.s32 %v1796
  %v1803 = vshll.u32 %v1802, 16
  %v1804 = vadd.s32 %v1803, %v1801
  %v1805 = vsel %vm1593, 1, 0
  %vm1806 = vcmp.eq.s32.totalorder %v1805, 1
  %v1807 = vsel %vm1806, %v1722, %v38
  %1808 = vst [vmem:[%s9 + $0x10] sm:$0xff] %v1807
  %v1809 = vsel %vm1593, %v1804, 0
  %vm1810 = vcmp.ne.s32.totalorder %v1804, 27
  %vm1811 = vmand %vm1593, %vm1810
  %v1813 = vsel %vm1162, %v1789, 0
  %1815 = vmatpush.msra.mxu0 0.0
  %1816 = vmatpush.msra.mxu0 0.0
  %1817 = vmatpush.msra.mxu0 0.0
  %1818 = vmatpush.msra.mxu0 0.0
  %1819 = vmatpush.msra.mxu0 0.0
  %1820 = vmatpush.msra.mxu0 0.0
  %1821 = vmatpush.msra.mxu0 0.0
  %1822 = vmatpush.msra.mxu0 0.0
  %1823 = vmatpush.msra.mxu0 0.0
  %1824 = vmatpush.msra.mxu0 0.0
  %1825 = vmatpush.msra.mxu0 0.0
  %1826 = vmatpush.msra.mxu0 0.0
  %1827 = vmatpush.msra.mxu0 %v102
  %1828 = vmatpush.msra.mxu0 %v99
  %1829 = vmatpush.msra.mxu0 %v96
  %1830 = vmatpush.msra.mxu0 %v93
  %1831 = vmatmul.f32.gmra.mxu0 %v1813
  %v1832 = vpop.f32.mrf.mxu0
  %v1833 = vadd.f32 %v107, %v1832
  %1834 = vdwg.mxu0
  %1835 = vmatpush.msra.mxu0 0.0
  %1836 = vmatpush.msra.mxu0 0.0
  %1837 = vmatpush.msra.mxu0 0.0
  %1838 = vmatpush.msra.mxu0 0.0
  %1839 = vmatpush.msra.mxu0 0.0
  %1840 = vmatpush.msra.mxu0 0.0
  %1841 = vmatpush.msra.mxu0 0.0
  %1842 = vmatpush.msra.mxu0 0.0
  %1843 = vmatpush.msra.mxu0 0.0
  %1844 = vmatpush.msra.mxu0 0.0
  %1845 = vmatpush.msra.mxu0 0.0
  %1846 = vmatpush.msra.mxu0 0.0
  %1847 = vmatpush.msra.mxu0 %v103
  %1848 = vmatpush.msra.mxu0 %v100
  %1849 = vmatpush.msra.mxu0 %v97
  %1850 = vmatpush.msra.mxu0 %v94
  %1851 = vmatmul.f32.gmra.mxu0 %v1813
  %v1852 = vpop.f32.mrf.mxu0
  %v1853 = vadd.f32 %v108, %v1852
  %1854 = vdwg.mxu0
  %1855 = vmatpush.msra.mxu0 0.0
  %1856 = vmatpush.msra.mxu0 0.0
  %1857 = vmatpush.msra.mxu0 0.0
  %1858 = vmatpush.msra.mxu0 0.0
  %1859 = vmatpush.msra.mxu0 0.0
  %1860 = vmatpush.msra.mxu0 0.0
  %1861 = vmatpush.msra.mxu0 0.0
  %1862 = vmatpush.msra.mxu0 0.0
  %1863 = vmatpush.msra.mxu0 0.0
  %1864 = vmatpush.msra.mxu0 0.0
  %1865 = vmatpush.msra.mxu0 0.0
  %1866 = vmatpush.msra.mxu0 0.0
  %1867 = vmatpush.msra.mxu0 %v104
  %1868 = vmatpush.msra.mxu0 %v101
  %1869 = vmatpush.msra.mxu0 %v98
  %1870 = vmatpush.msra.mxu0 %v95
  %1871 = vmatmul.f32.gmra.mxu0 %v1813
  %v1872 = vpop.f32.mrf.mxu0
  %v1873 = vadd.f32 %v109, %v1872
  %1874 = vdwg.mxu0
  %v1875 = vadd.f32 %v1833, %v1742
  %v1876 = vxor.u32 %v1875, 2147483648
  %v1877 = vmul.f32 %v1876, 1.442695
  %v1878 = vpow.pop %v1877
  %v1879 = vadd.f32 %v1878, 1.0
  %v1880 = vrcp.pop %v1879
  %v1881 = vmul.f32 %v1879, %v1880
  %v1882 = vsub.f32 1.0, %v1881
  %v1883 = vmul.f32 %v1880, %v1882
  %v1884 = vadd.f32 %v1880, %v1883
  %vm1885 = vweird.f32 %v1879
  %vm1886 = vweird.f32 %v1880
  %vm1887 = vmor %vm1885, %vm1886
  %v1888 = vsel %vm1887, %v1880, %v1884
  %v1889 = vand.u32 2147483647, %v1879
  %vm1890 = vcmp.eq.f32.partialorder %v1889, 8.507059e+37
  %v1891 = vand.u32 %v1879, 2147483648
  %v1892 = vor.u32 1.1754944e-38, %v1891
  %v1893 = vsel %vm1890, %v1892, %v1888
  %v1894 = vmul.f32 1.0, %v1893
  %v1895 = vadd.f32 %v1853, %v1762
  %v1896 = vxor.u32 %v1895, 2147483648
  %v1897 = vmul.f32 %v1896, 1.442695
  %v1898 = vpow.pop %v1897
  %v1899 = vadd.f32 %v1898, 1.0
  %v1900 = vrcp.pop %v1899
  %v1901 = vmul.f32 %v1899, %v1900
  %v1902 = vsub.f32 1.0, %v1901
  %v1903 = vmul.f32 %v1900, %v1902
  %v1904 = vadd.f32 %v1900, %v1903
  %vm1905 = vweird.f32 %v1899
  %vm1906 = vweird.f32 %v1900
  %vm1907 = vmor %vm1905, %vm1906
  %v1908 = vsel %vm1907, %v1900, %v1904
  %v1909 = vand.u32 2147483647, %v1899
  %vm1910 = vcmp.eq.f32.partialorder %v1909, 8.507059e+37
  %v1911 = vand.u32 %v1899, 2147483648
  %v1912 = vor.u32 1.1754944e-38, %v1911
  %v1913 = vsel %vm1910, %v1912, %v1908
  %v1914 = vmul.f32 1.0, %v1913
  %v1915 = vmul.f32 %v1894, %v1782
  %v1916 = vadd.f32 %v1873, %v1915
  %v1917 = vtanh.pop %v1916
  %v1918 = vsub.f32 1.0, %v1914
  %v1919 = vmul.f32 %v1918, %v1917
  %v1920 = vmul.f32 %v1914, %v1703
  %v1921 = vadd.f32 %v1919, %v1920
  %1922 = vmatpush.msra.mxu0 %v173
  %1923 = vmatpush.msra.mxu0 %v169
  %1924 = vmatpush.msra.mxu0 %v165
  %1925 = vmatpush.msra.mxu0 %v161
  %1926 = vmatpush.msra.mxu0 %v157
  %1927 = vmatpush.msra.mxu0 %v153
  %1928 = vmatpush.msra.mxu0 %v149
  %1929 = vmatpush.msra.mxu0 %v145
  %1930 = vmatpush.msra.mxu0 %v141
  %1931 = vmatpush.msra.mxu0 %v137
  %1932 = vmatpush.msra.mxu0 %v133
  %1933 = vmatpush.msra.mxu0 %v129
  %1934 = vmatpush.msra.mxu0 %v125
  %1935 = vmatpush.msra.mxu0 %v121
  %1936 = vmatpush.msra.mxu0 %v117
  %1937 = vmatpush.msra.mxu0 %v113
  %1938 = vmatmul.f32.gmra.mxu0 %v1921
  %v1939 = vpop.f32.mrf.mxu0
  %v1940 = vadd.f32 %v179, %v1939
  %1941 = vdwg.mxu0
  %1942 = vmatpush.msra.mxu0 %v174
  %1943 = vmatpush.msra.mxu0 %v170
  %1944 = vmatpush.msra.mxu0 %v166
  %1945 = vmatpush.msra.mxu0 %v162
  %1946 = vmatpush.msra.mxu0 %v158
  %1947 = vmatpush.msra.mxu0 %v154
  %1948 = vmatpush.msra.mxu0 %v150
  %1949 = vmatpush.msra.mxu0 %v146
  %1950 = vmatpush.msra.mxu0 %v142
  %1951 = vmatpush.msra.mxu0 %v138
  %1952 = vmatpush.msra.mxu0 %v134
  %1953 = vmatpush.msra.mxu0 %v130
  %1954 = vmatpush.msra.mxu0 %v126
  %1955 = vmatpush.msra.mxu0 %v122
  %1956 = vmatpush.msra.mxu0 %v118
  %1957 = vmatpush.msra.mxu0 %v114
  %1958 = vmatmul.f32.gmra.mxu0 %v1921
  %v1959 = vpop.f32.mrf.mxu0
  %v1960 = vadd.f32 %v180, %v1959
  %1961 = vdwg.mxu0
  %1962 = vmatpush.msra.mxu0 %v175
  %1963 = vmatpush.msra.mxu0 %v171
  %1964 = vmatpush.msra.mxu0 %v167
  %1965 = vmatpush.msra.mxu0 %v163
  %1966 = vmatpush.msra.mxu0 %v159
  %1967 = vmatpush.msra.mxu0 %v155
  %1968 = vmatpush.msra.mxu0 %v151
  %1969 = vmatpush.msra.mxu0 %v147
  %1970 = vmatpush.msra.mxu0 %v143
  %1971 = vmatpush.msra.mxu0 %v139
  %1972 = vmatpush.msra.mxu0 %v135
  %1973 = vmatpush.msra.mxu0 %v131
  %1974 = vmatpush.msra.mxu0 %v127
  %1975 = vmatpush.msra.mxu0 %v123
  %1976 = vmatpush.msra.mxu0 %v119
  %1977 = vmatpush.msra.mxu0 %v115
  %1978 = vmatmul.f32.gmra.mxu0 %v1921
  %v1979 = vpop.f32.mrf.mxu0
  %v1980 = vadd.f32 %v181, %v1979
  %1981 = vdwg.mxu0
  %1982 = vmatpush.msra.mxu0 %v176
  %1983 = vmatpush.msra.mxu0 %v172
  %1984 = vmatpush.msra.mxu0 %v168
  %1985 = vmatpush.msra.mxu0 %v164
  %1986 = vmatpush.msra.mxu0 %v160
  %1987 = vmatpush.msra.mxu0 %v156
  %1988 = vmatpush.msra.mxu0 %v152
  %1989 = vmatpush.msra.mxu0 %v148
  %1990 = vmatpush.msra.mxu0 %v144
  %1991 = vmatpush.msra.mxu0 %v140
  %1992 = vmatpush.msra.mxu0 %v136
  %1993 = vmatpush.msra.mxu0 %v132
  %1994 = vmatpush.msra.mxu0 %v128
  %1995 = vmatpush.msra.mxu0 %v124
  %1996 = vmatpush.msra.mxu0 %v120
  %1997 = vmatpush.msra.mxu0 %v116
  %1998 = vmatmul.f32.gmra.mxu0 %v1921
  %v1999 = vpop.f32.mrf.mxu0
  %v2000 = vadd.f32 %v182, %v1999
  %2001 = vdwg.mxu0
  %v2002 = vadd.f32 %v1940, %v40
  %2003 = vmax.xlane.f32.xlu0 %v2002
  %v2004 = vpop.xlane.xlu0 %2003
  %vm2005 = vcmp.eq.f32.partialorder %v2002, %v2004
  %v2006 = vsel %vm2005, 1, 0
  %v2007 = vcvt.s32.f32 %v2006
  %v2008 = vsel %vm2005, %v35, 128
  %v2009 = vand.u32 %v2008, 65535
  %v2010 = vshra.s32 %v2008, 16
  %v2011 = vcvt.s32.f32 %v2009
  %v2012 = vcvt.s32.f32 %v2010
  %2013 = vmin.xlane.f32.xlu0 %v2012
  %v2014 = vpop.xlane.xlu0 %2013
  %vm2015 = vcmp.eq.f32.partialorder %v2012, %v2014
  %v2016 = vsel %vm2015, %v2011, inf
  %2017 = vmin.xlane.f32.xlu0 %v2016
  %v2018 = vpop.xlane.xlu0 %2017
  %v2019 = vcvt.f32.s32 %v2018
  %v2020 = vcvt.f32.s32 %v2014
  %v2021 = vshll.u32 %v2020, 16
  %v2022 = vadd.s32 %v2021, %v2019
  %v2023 = vsel %vm1811, 1, 0
  %vm2024 = vcmp.eq.s32.totalorder %v2023, 1
  %v2025 = vsel %vm2024, %v1940, %v38
  %2026 = vst [vmem:[%s9 + $0x18] sm:$0xff] %v2025
  %v2027 = vsel %vm1811, %v2022, 0
  %vm2028 = vcmp.ne.s32.totalorder %v2022, 27
  %vm2029 = vmand %vm1811, %vm2028
  %v2031 = vsel %vm1162, %v2007, 0
  %2033 = vmatpush.msra.mxu0 0.0
  %2034 = vmatpush.msra.mxu0 0.0
  %2035 = vmatpush.msra.mxu0 0.0
  %2036 = vmatpush.msra.mxu0 0.0
  %2037 = vmatpush.msra.mxu0 0.0
  %2038 = vmatpush.msra.mxu0 0.0
  %2039 = vmatpush.msra.mxu0 0.0
  %2040 = vmatpush.msra.mxu0 0.0
  %2041 = vmatpush.msra.mxu0 0.0
  %2042 = vmatpush.msra.mxu0 0.0
  %2043 = vmatpush.msra.mxu0 0.0
  %2044 = vmatpush.msra.mxu0 0.0
  %2045 = vmatpush.msra.mxu0 %v102
  %2046 = vmatpush.msra.mxu0 %v99
  %2047 = vmatpush.msra.mxu0 %v96
  %2048 = vmatpush.msra.mxu0 %v93
  %2049 = vmatmul.f32.gmra.mxu0 %v2031
  %v2050 = vpop.f32.mrf.mxu0
  %v2051 = vadd.f32 %v107, %v2050
  %2052 = vdwg.mxu0
  %2053 = vmatpush.msra.mxu0 0.0
  %2054 = vmatpush.msra.mxu0 0.0
  %2055 = vmatpush.msra.mxu0 0.0
  %2056 = vmatpush.msra.mxu0 0.0
  %2057 = vmatpush.msra.mxu0 0.0
  %2058 = vmatpush.msra.mxu0 0.0
  %2059 = vmatpush.msra.mxu0 0.0
  %2060 = vmatpush.msra.mxu0 0.0
  %2061 = vmatpush.msra.mxu0 0.0
  %2062 = vmatpush.msra.mxu0 0.0
  %2063 = vmatpush.msra.mxu0 0.0
  %2064 = vmatpush.msra.mxu0 0.0
  %2065 = vmatpush.msra.mxu0 %v103
  %2066 = vmatpush.msra.mxu0 %v100
  %2067 = vmatpush.msra.mxu0 %v97
  %2068 = vmatpush.msra.mxu0 %v94
  %2069 = vmatmul.f32.gmra.mxu0 %v2031
  %v2070 = vpop.f32.mrf.mxu0
  %v2071 = vadd.f32 %v108, %v2070
  %2072 = vdwg.mxu0
  %2073 = vmatpush.msra.mxu0 0.0
  %2074 = vmatpush.msra.mxu0 0.0
  %2075 = vmatpush.msra.mxu0 0.0
  %2076 = vmatpush.msra.mxu0 0.0
  %2077 = vmatpush.msra.mxu0 0.0
  %2078 = vmatpush.msra.mxu0 0.0
  %2079 = vmatpush.msra.mxu0 0.0
  %2080 = vmatpush.msra.mxu0 0.0
  %2081 = vmatpush.msra.mxu0 0.0
  %2082 = vmatpush.msra.mxu0 0.0
  %2083 = vmatpush.msra.mxu0 0.0
  %2084 = vmatpush.msra.mxu0 0.0
  %2085 = vmatpush.msra.mxu0 %v104
  %2086 = vmatpush.msra.mxu0 %v101
  %2087 = vmatpush.msra.mxu0 %v98
  %2088 = vmatpush.msra.mxu0 %v95
  %2089 = vmatmul.f32.gmra.mxu0 %v2031
  %v2090 = vpop.f32.mrf.mxu0
  %v2091 = vadd.f32 %v109, %v2090
  %2092 = vdwg.mxu0
  %v2093 = vadd.f32 %v2051, %v1960
  %v2094 = vxor.u32 %v2093, 2147483648
  %v2095 = vmul.f32 %v2094, 1.442695
  %v2096 = vpow.pop %v2095
  %v2097 = vadd.f32 %v2096, 1.0
  %v2098 = vrcp.pop %v2097
  %v2099 = vmul.f32 %v2097, %v2098
  %v2100 = vsub.f32 1.0, %v2099
  %v2101 = vmul.f32 %v2098, %v2100
  %v2102 = vadd.f32 %v2098, %v2101
  %vm2103 = vweird.f32 %v2097
  %vm2104 = vweird.f32 %v2098
  %vm2105 = vmor %vm2103, %vm2104
  %v2106 = vsel %vm2105, %v2098, %v2102
  %v2107 = vand.u32 2147483647, %v2097
  %vm2108 = vcmp.eq.f32.partialorder %v2107, 8.507059e+37
  %v2109 = vand.u32 %v2097, 2147483648
  %v2110 = vor.u32 1.1754944e-38, %v2109
  %v2111 = vsel %vm2108, %v2110, %v2106
  %v2112 = vmul.f32 1.0, %v2111
  %v2113 = vadd.f32 %v2071, %v1980
  %v2114 = vxor.u32 %v2113, 2147483648
  %v2115 = vmul.f32 %v2114, 1.442695
  %v2116 = vpow.pop %v2115
  %v2117 = vadd.f32 %v2116, 1.0
  %v2118 = vrcp.pop %v2117
  %v2119 = vmul.f32 %v2117, %v2118
  %v2120 = vsub.f32 1.0, %v2119
  %v2121 = vmul.f32 %v2118, %v2120
  %v2122 = vadd.f32 %v2118, %v2121
  %vm2123 = vweird.f32 %v2117
  %vm2124 = vweird.f32 %v2118
  %vm2125 = vmor %vm2123, %vm2124
  %v2126 = vsel %vm2125, %v2118, %v2122
  %v2127 = vand.u32 2147483647, %v2117
  %vm2128 = vcmp.eq.f32.partialorder %v2127, 8.507059e+37
  %v2129 = vand.u32 %v2117, 2147483648
  %v2130 = vor.u32 1.1754944e-38, %v2129
  %v2131 = vsel %vm2128, %v2130, %v2126
  %v2132 = vmul.f32 1.0, %v2131
  %v2133 = vmul.f32 %v2112, %v2000
  %v2134 = vadd.f32 %v2091, %v2133
  %v2135 = vtanh.pop %v2134
  %v2136 = vsub.f32 1.0, %v2132
  %v2137 = vmul.f32 %v2136, %v2135
  %v2138 = vmul.f32 %v2132, %v1921
  %v2139 = vadd.f32 %v2137, %v2138
  %2140 = vmatpush.msra.mxu0 %v173
  %2141 = vmatpush.msra.mxu0 %v169
  %2142 = vmatpush.msra.mxu0 %v165
  %2143 = vmatpush.msra.mxu0 %v161
  %2144 = vmatpush.msra.mxu0 %v157
  %2145 = vmatpush.msra.mxu0 %v153
  %2146 = vmatpush.msra.mxu0 %v149
  %2147 = vmatpush.msra.mxu0 %v145
  %2148 = vmatpush.msra.mxu0 %v141
  %2149 = vmatpush.msra.mxu0 %v137
  %2150 = vmatpush.msra.mxu0 %v133
  %2151 = vmatpush.msra.mxu0 %v129
  %2152 = vmatpush.msra.mxu0 %v125
  %2153 = vmatpush.msra.mxu0 %v121
  %2154 = vmatpush.msra.mxu0 %v117
  %2155 = vmatpush.msra.mxu0 %v113
  %2156 = vmatmul.f32.gmra.mxu0 %v2139
  %v2157 = vpop.f32.mrf.mxu0
  %v2158 = vadd.f32 %v179, %v2157
  %2159 = vdwg.mxu0
  %2160 = vmatpush.msra.mxu0 %v174
  %2161 = vmatpush.msra.mxu0 %v170
  %2162 = vmatpush.msra.mxu0 %v166
  %2163 = vmatpush.msra.mxu0 %v162
  %2164 = vmatpush.msra.mxu0 %v158
  %2165 = vmatpush.msra.mxu0 %v154
  %2166 = vmatpush.msra.mxu0 %v150
  %2167 = vmatpush.msra.mxu0 %v146
  %2168 = vmatpush.msra.mxu0 %v142
  %2169 = vmatpush.msra.mxu0 %v138
  %2170 = vmatpush.msra.mxu0 %v134
  %2171 = vmatpush.msra.mxu0 %v130
  %2172 = vmatpush.msra.mxu0 %v126
  %2173 = vmatpush.msra.mxu0 %v122
  %2174 = vmatpush.msra.mxu0 %v118
  %2175 = vmatpush.msra.mxu0 %v114
  %2176 = vmatmul.f32.gmra.mxu0 %v2139
  %v2177 = vpop.f32.mrf.mxu0
  %v2178 = vadd.f32 %v180, %v2177
  %2179 = vdwg.mxu0
  %2180 = vmatpush.msra.mxu0 %v175
  %2181 = vmatpush.msra.mxu0 %v171
  %2182 = vmatpush.msra.mxu0 %v167
  %2183 = vmatpush.msra.mxu0 %v163
  %2184 = vmatpush.msra.mxu0 %v159
  %2185 = vmatpush.msra.mxu0 %v155
  %2186 = vmatpush.msra.mxu0 %v151
  %2187 = vmatpush.msra.mxu0 %v147
  %2188 = vmatpush.msra.mxu0 %v143
  %2189 = vmatpush.msra.mxu0 %v139
  %2190 = vmatpush.msra.mxu0 %v135
  %2191 = vmatpush.msra.mxu0 %v131
  %2192 = vmatpush.msra.mxu0 %v127
  %2193 = vmatpush.msra.mxu0 %v123
  %2194 = vmatpush.msra.mxu0 %v119
  %2195 = vmatpush.msra.mxu0 %v115
  %2196 = vmatmul.f32.gmra.mxu0 %v2139
  %v2197 = vpop.f32.mrf.mxu0
  %v2198 = vadd.f32 %v181, %v2197
  %2199 = vdwg.mxu0
  %2200 = vmatpush.msra.mxu0 %v176
  %2201 = vmatpush.msra.mxu0 %v172
  %2202 = vmatpush.msra.mxu0 %v168
  %2203 = vmatpush.msra.mxu0 %v164
  %2204 = vmatpush.msra.mxu0 %v160
  %2205 = vmatpush.msra.mxu0 %v156
  %2206 = vmatpush.msra.mxu0 %v152
  %2207 = vmatpush.msra.mxu0 %v148
  %2208 = vmatpush.msra.mxu0 %v144
  %2209 = vmatpush.msra.mxu0 %v140
  %2210 = vmatpush.msra.mxu0 %v136
  %2211 = vmatpush.msra.mxu0 %v132
  %2212 = vmatpush.msra.mxu0 %v128
  %2213 = vmatpush.msra.mxu0 %v124
  %2214 = vmatpush.msra.mxu0 %v120
  %2215 = vmatpush.msra.mxu0 %v116
  %2216 = vmatmul.f32.gmra.mxu0 %v2139
  %v2217 = vpop.f32.mrf.mxu0
  %v2218 = vadd.f32 %v182, %v2217
  %2219 = vdwg.mxu0
  %v2220 = vadd.f32 %v2158, %v40
  %2221 = vmax.xlane.f32.xlu0 %v2220
  %v2222 = vpop.xlane.xlu0 %2221
  %vm2223 = vcmp.eq.f32.partialorder %v2220, %v2222
  %v2224 = vsel %vm2223, 1, 0
  %v2225 = vcvt.s32.f32 %v2224
  %v2226 = vsel %vm2223, %v35, 128
  %v2227 = vand.u32 %v2226, 65535
  %v2228 = vshra.s32 %v2226, 16
  %v2229 = vcvt.s32.f32 %v2227
  %v2230 = vcvt.s32.f32 %v2228
  %2231 = vmin.xlane.f32.xlu0 %v2230
  %v2232 = vpop.xlane.xlu0 %2231
  %vm2233 = vcmp.eq.f32.partialorder %v2230, %v2232
  %v2234 = vsel %vm2233, %v2229, inf
  %2235 = vmin.xlane.f32.xlu0 %v2234
  %v2236 = vpop.xlane.xlu0 %2235
  %v2237 = vcvt.f32.s32 %v2236
  %v2238 = vcvt.f32.s32 %v2232
  %v2239 = vshll.u32 %v2238, 16
  %v2240 = vadd.s32 %v2239, %v2237
  %v2241 = vsel %vm2029, 1, 0
  %vm2242 = vcmp.eq.s32.totalorder %v2241, 1
  %v2243 = vsel %vm2242, %v2158, %v38
  %2244 = vst [vmem:[%s9 + $0x20] sm:$0xff] %v2243
  %v2245 = vsel %vm2029, %v2240, 0
  %vm2246 = vcmp.ne.s32.totalorder %v2240, 27
  %vm2247 = vmand %vm2029, %vm2246
  %v2249 = vsel %vm1162, %v2225, 0
  %2251 = vmatpush.msra.mxu0 0.0
  %2252 = vmatpush.msra.mxu0 0.0
  %2253 = vmatpush.msra.mxu0 0.0
  %2254 = vmatpush.msra.mxu0 0.0
  %2255 = vmatpush.msra.mxu0 0.0
  %2256 = vmatpush.msra.mxu0 0.0
  %2257 = vmatpush.msra.mxu0 0.0
  %2258 = vmatpush.msra.mxu0 0.0
  %2259 = vmatpush.msra.mxu0 0.0
  %2260 = vmatpush.msra.mxu0 0.0
  %2261 = vmatpush.msra.mxu0 0.0
  %2262 = vmatpush.msra.mxu0 0.0
  %2263 = vmatpush.msra.mxu0 %v102
  %2264 = vmatpush.msra.mxu0 %v99
  %2265 = vmatpush.msra.mxu0 %v96
  %2266 = vmatpush.msra.mxu0 %v93
  %2267 = vmatmul.f32.gmra.mxu0 %v2249
  %v2268 = vpop.f32.mrf.mxu0
  %v2269 = vadd.f32 %v107, %v2268
  %2270 = vdwg.mxu0
  %2271 = vmatpush.msra.mxu0 0.0
  %2272 = vmatpush.msra.mxu0 0.0
  %2273 = vmatpush.msra.mxu0 0.0
  %2274 = vmatpush.msra.mxu0 0.0
  %2275 = vmatpush.msra.mxu0 0.0
  %2276 = vmatpush.msra.mxu0 0.0
  %2277 = vmatpush.msra.mxu0 0.0
  %2278 = vmatpush.msra.mxu0 0.0
  %2279 = vmatpush.msra.mxu0 0.0
  %2280 = vmatpush.msra.mxu0 0.0
  %2281 = vmatpush.msra.mxu0 0.0
  %2282 = vmatpush.msra.mxu0 0.0
  %2283 = vmatpush.msra.mxu0 %v103
  %2284 = vmatpush.msra.mxu0 %v100
  %2285 = vmatpush.msra.mxu0 %v97
  %2286 = vmatpush.msra.mxu0 %v94
  %2287 = vmatmul.f32.gmra.mxu0 %v2249
  %v2288 = vpop.f32.mrf.mxu0
  %v2289 = vadd.f32 %v108, %v2288
  %2290 = vdwg.mxu0
  %2291 = vmatpush.msra.mxu0 0.0
  %2292 = vmatpush.msra.mxu0 0.0
  %2293 = vmatpush.msra.mxu0 0.0
  %2294 = vmatpush.msra.mxu0 0.0
  %2295 = vmatpush.msra.mxu0 0.0
  %2296 = vmatpush.msra.mxu0 0.0
  %2297 = vmatpush.msra.mxu0 0.0
  %2298 = vmatpush.msra.mxu0 0.0
  %2299 = vmatpush.msra.mxu0 0.0
  %2300 = vmatpush.msra.mxu0 0.0
  %2301 = vmatpush.msra.mxu0 0.0
  %2302 = vmatpush.msra.mxu0 0.0
  %2303 = vmatpush.msra.mxu0 %v104
  %2304 = vmatpush.msra.mxu0 %v101
  %2305 = vmatpush.msra.mxu0 %v98
  %2306 = vmatpush.msra.mxu0 %v95
  %2307 = vmatmul.f32.gmra.mxu0 %v2249
  %v2308 = vpop.f32.mrf.mxu0
  %v2309 = vadd.f32 %v109, %v2308
  %2310 = vdwg.mxu0
  %v2311 = vadd.f32 %v2269, %v2178
  %v2312 = vxor.u32 %v2311, 2147483648
  %v2313 = vmul.f32 %v2312, 1.442695
  %v2314 = vpow.pop %v2313
  %v2315 = vadd.f32 %v2314, 1.0
  %v2316 = vrcp.pop %v2315
  %v2317 = vmul.f32 %v2315, %v2316
  %v2318 = vsub.f32 1.0, %v2317
  %v2319 = vmul.f32 %v2316, %v2318
  %v2320 = vadd.f32 %v2316, %v2319
  %vm2321 = vweird.f32 %v2315
  %vm2322 = vweird.f32 %v2316
  %vm2323 = vmor %vm2321, %vm2322
  %v2324 = vsel %vm2323, %v2316, %v2320
  %v2325 = vand.u32 2147483647, %v2315
  %vm2326 = vcmp.eq.f32.partialorder %v2325, 8.507059e+37
  %v2327 = vand.u32 %v2315, 2147483648
  %v2328 = vor.u32 1.1754944e-38, %v2327
  %v2329 = vsel %vm2326, %v2328, %v2324
  %v2330 = vmul.f32 1.0, %v2329
  %v2331 = vadd.f32 %v2289, %v2198
  %v2332 = vxor.u32 %v2331, 2147483648
  %v2333 = vmul.f32 %v2332, 1.442695
  %v2334 = vpow.pop %v2333
  %v2335 = vadd.f32 %v2334, 1.0
  %v2336 = vrcp.pop %v2335
  %v2337 = vmul.f32 %v2335, %v2336
  %v2338 = vsub.f32 1.0, %v2337
  %v2339 = vmul.f32 %v2336, %v2338
  %v2340 = vadd.f32 %v2336, %v2339
  %vm2341 = vweird.f32 %v2335
  %vm2342 = vweird.f32 %v2336
  %vm2343 = vmor %vm2341, %vm2342
  %v2344 = vsel %vm2343, %v2336, %v2340
  %v2345 = vand.u32 2147483647, %v2335
  %vm2346 = vcmp.eq.f32.partialorder %v2345, 8.507059e+37
  %v2347 = vand.u32 %v2335, 2147483648
  %v2348 = vor.u32 1.1754944e-38, %v2347
  %v2349 = vsel %vm2346, %v2348, %v2344
  %v2350 = vmul.f32 1.0, %v2349
  %v2351 = vmul.f32 %v2330, %v2218
  %v2352 = vadd.f32 %v2309, %v2351
  %v2353 = vtanh.pop %v2352
  %v2354 = vsub.f32 1.0, %v2350
  %v2355 = vmul.f32 %v2354, %v2353
  %v2356 = vmul.f32 %v2350, %v2139
  %v2357 = vadd.f32 %v2355, %v2356
  %2358 = vmatpush.msra.mxu0 %v173
  %2359 = vmatpush.msra.mxu0 %v169
  %2360 = vmatpush.msra.mxu0 %v165
  %2361 = vmatpush.msra.mxu0 %v161
  %2362 = vmatpush.msra.mxu0 %v157
  %2363 = vmatpush.msra.mxu0 %v153
  %2364 = vmatpush.msra.mxu0 %v149
  %2365 = vmatpush.msra.mxu0 %v145
  %2366 = vmatpush.msra.mxu0 %v141
  %2367 = vmatpush.msra.mxu0 %v137
  %2368 = vmatpush.msra.mxu0 %v133
  %2369 = vmatpush.msra.mxu0 %v129
  %2370 = vmatpush.msra.mxu0 %v125
  %2371 = vmatpush.msra.mxu0 %v121
  %2372 = vmatpush.msra.mxu0 %v117
  %2373 = vmatpush.msra.mxu0 %v113
  %2374 = vmatmul.f32.gmra.mxu0 %v2357
  %v2375 = vpop.f32.mrf.mxu0
  %v2376 = vadd.f32 %v179, %v2375
  %2377 = vdwg.mxu0
  %2378 = vmatpush.msra.mxu0 %v174
  %2379 = vmatpush.msra.mxu0 %v170
  %2380 = vmatpush.msra.mxu0 %v166
  %2381 = vmatpush.msra.mxu0 %v162
  %2382 = vmatpush.msra.mxu0 %v158
  %2383 = vmatpush.msra.mxu0 %v154
  %2384 = vmatpush.msra.mxu0 %v150
  %2385 = vmatpush.msra.mxu0 %v146
  %2386 = vmatpush.msra.mxu0 %v142
  %2387 = vmatpush.msra.mxu0 %v138
  %2388 = vmatpush.msra.mxu0 %v134
  %2389 = vmatpush.msra.mxu0 %v130
  %2390 = vmatpush.msra.mxu0 %v126
  %2391 = vmatpush.msra.mxu0 %v122
  %2392 = vmatpush.msra.mxu0 %v118
  %2393 = vmatpush.msra.mxu0 %v114
  %2394 = vmatmul.f32.gmra.mxu0 %v2357
  %v2395 = vpop.f32.mrf.mxu0
  %v2396 = vadd.f32 %v180, %v2395
  %2397 = vdwg.mxu0
  %2398 = vmatpush.msra.mxu0 %v175
  %2399 = vmatpush.msra.mxu0 %v171
  %2400 = vmatpush.msra.mxu0 %v167
  %2401 = vmatpush.msra.mxu0 %v163
  %2402 = vmatpush.msra.mxu0 %v159
  %2403 = vmatpush.msra.mxu0 %v155
  %2404 = vmatpush.msra.mxu0 %v151
  %2405 = vmatpush.msra.mxu0 %v147
  %2406 = vmatpush.msra.mxu0 %v143
  %2407 = vmatpush.msra.mxu0 %v139
  %2408 = vmatpush.msra.mxu0 %v135
  %2409 = vmatpush.msra.mxu0 %v131
  %2410 = vmatpush.msra.mxu0 %v127
  %2411 = vmatpush.msra.mxu0 %v123
  %2412 = vmatpush.msra.mxu0 %v119
  %2413 = vmatpush.msra.mxu0 %v115
  %2414 = vmatmul.f32.gmra.mxu0 %v2357
  %v2415 = vpop.f32.mrf.mxu0
  %v2416 = vadd.f32 %v181, %v2415
  %2417 = vdwg.mxu0
  %2418 = vmatpush.msra.mxu0 %v176
  %2419 = vmatpush.msra.mxu0 %v172
  %2420 = vmatpush.msra.mxu0 %v168
  %2421 = vmatpush.msra.mxu0 %v164
  %2422 = vmatpush.msra.mxu0 %v160
  %2423 = vmatpush.msra.mxu0 %v156
  %2424 = vmatpush.msra.mxu0 %v152
  %2425 = vmatpush.msra.mxu0 %v148
  %2426 = vmatpush.msra.mxu0 %v144
  %2427 = vmatpush.msra.mxu0 %v140
  %2428 = vmatpush.msra.mxu0 %v136
  %2429 = vmatpush.msra.mxu0 %v132
  %2430 = vmatpush.msra.mxu0 %v128
  %2431 = vmatpush.msra.mxu0 %v124
  %2432 = vmatpush.msra.mxu0 %v120
  %2433 = vmatpush.msra.mxu0 %v116
  %2434 = vmatmul.f32.gmra.mxu0 %v2357
  %v2435 = vpop.f32.mrf.mxu0
  %v2436 = vadd.f32 %v182, %v2435
  %2437 = vdwg.mxu0
  %v2438 = vadd.f32 %v2376, %v40
  %2439 = vmax.xlane.f32.xlu0 %v2438
  %v2440 = vpop.xlane.xlu0 %2439
  %vm2441 = vcmp.eq.f32.partialorder %v2438, %v2440
  %v2442 = vsel %vm2441, 1, 0
  %v2443 = vcvt.s32.f32 %v2442
  %v2444 = vsel %vm2441, %v35, 128
  %v2445 = vand.u32 %v2444, 65535
  %v2446 = vshra.s32 %v2444, 16
  %v2447 = vcvt.s32.f32 %v2445
  %v2448 = vcvt.s32.f32 %v2446
  %2449 = vmin.xlane.f32.xlu0 %v2448
  %v2450 = vpop.xlane.xlu0 %2449
  %vm2451 = vcmp.eq.f32.partialorder %v2448, %v2450
  %v2452 = vsel %vm2451, %v2447, inf
  %2453 = vmin.xlane.f32.xlu0 %v2452
  %v2454 = vpop.xlane.xlu0 %2453
  %v2455 = vcvt.f32.s32 %v2454
  %v2456 = vcvt.f32.s32 %v2450
  %v2457 = vshll.u32 %v2456, 16
  %v2458 = vadd.s32 %v2457, %v2455
  %v2459 = vsel %vm2247, 1, 0
  %vm2460 = vcmp.eq.s32.totalorder %v2459, 1
  %v2461 = vsel %vm2460, %v2376, %v38
  %2462 = vst [vmem:[%s9 + $0x28] sm:$0xff] %v2461
  %v2463 = vsel %vm2247, %v2458, 0
  %vm2464 = vcmp.ne.s32.totalorder %v2458, 27
  %vm2465 = vmand %vm2247, %vm2464
  %v2467 = vsel %vm1162, %v2443, 0
  %2469 = vmatpush.msra.mxu0 0.0
  %2470 = vmatpush.msra.mxu0 0.0
  %2471 = vmatpush.msra.mxu0 0.0
  %2472 = vmatpush.msra.mxu0 0.0
  %2473 = vmatpush.msra.mxu0 0.0
  %2474 = vmatpush.msra.mxu0 0.0
  %2475 = vmatpush.msra.mxu0 0.0
  %2476 = vmatpush.msra.mxu0 0.0
  %2477 = vmatpush.msra.mxu0 0.0
  %2478 = vmatpush.msra.mxu0 0.0
  %2479 = vmatpush.msra.mxu0 0.0
  %2480 = vmatpush.msra.mxu0 0.0
  %2481 = vmatpush.msra.mxu0 %v102
  %2482 = vmatpush.msra.mxu0 %v99
  %2483 = vmatpush.msra.mxu0 %v96
  %2484 = vmatpush.msra.mxu0 %v93
  %2485 = vmatmul.f32.gmra.mxu0 %v2467
  %v2486 = vpop.f32.mrf.mxu0
  %v2487 = vadd.f32 %v107, %v2486
  %2488 = vdwg.mxu0
  %2489 = vmatpush.msra.mxu0 0.0
  %2490 = vmatpush.msra.mxu0 0.0
  %2491 = vmatpush.msra.mxu0 0.0
  %2492 = vmatpush.msra.mxu0 0.0
  %2493 = vmatpush.msra.mxu0 0.0
  %2494 = vmatpush.msra.mxu0 0.0
  %2495 = vmatpush.msra.mxu0 0.0
  %2496 = vmatpush.msra.mxu0 0.0
  %2497 = vmatpush.msra.mxu0 0.0
  %2498 = vmatpush.msra.mxu0 0.0
  %2499 = vmatpush.msra.mxu0 0.0
  %2500 = vmatpush.msra.mxu0 0.0
  %2501 = vmatpush.msra.mxu0 %v103
  %2502 = vmatpush.msra.mxu0 %v100
  %2503 = vmatpush.msra.mxu0 %v97
  %2504 = vmatpush.msra.mxu0 %v94
  %2505 = vmatmul.f32.gmra.mxu0 %v2467
  %v2506 = vpop.f32.mrf.mxu0
  %v2507 = vadd.f32 %v108, %v2506
  %2508 = vdwg.mxu0
  %2509 = vmatpush.msra.mxu0 0.0
  %2510 = vmatpush.msra.mxu0 0.0
  %2511 = vmatpush.msra.mxu0 0.0
  %2512 = vmatpush.msra.mxu0 0.0
  %2513 = vmatpush.msra.mxu0 0.0
  %2514 = vmatpush.msra.mxu0 0.0
  %2515 = vmatpush.msra.mxu0 0.0
  %2516 = vmatpush.msra.mxu0 0.0
  %2517 = vmatpush.msra.mxu0 0.0
  %2518 = vmatpush.msra.mxu0 0.0
  %2519 = vmatpush.msra.mxu0 0.0
  %2520 = vmatpush.msra.mxu0 0.0
  %2521 = vmatpush.msra.mxu0 %v104
  %2522 = vmatpush.msra.mxu0 %v101
  %2523 = vmatpush.msra.mxu0 %v98
  %2524 = vmatpush.msra.mxu0 %v95
  %2525 = vmatmul.f32.gmra.mxu0 %v2467
  %v2526 = vpop.f32.mrf.mxu0
  %v2527 = vadd.f32 %v109, %v2526
  %2528 = vdwg.mxu0
  %v2529 = vadd.f32 %v2487, %v2396
  %v2530 = vxor.u32 %v2529, 2147483648
  %v2531 = vmul.f32 %v2530, 1.442695
  %v2532 = vpow.pop %v2531
  %v2533 = vadd.f32 %v2532, 1.0
  %v2534 = vrcp.pop %v2533
  %v2535 = vmul.f32 %v2533, %v2534
  %v2536 = vsub.f32 1.0, %v2535
  %v2537 = vmul.f32 %v2534, %v2536
  %v2538 = vadd.f32 %v2534, %v2537
  %vm2539 = vweird.f32 %v2533
  %vm2540 = vweird.f32 %v2534
  %vm2541 = vmor %vm2539, %vm2540
  %v2542 = vsel %vm2541, %v2534, %v2538
  %v2543 = vand.u32 2147483647, %v2533
  %vm2544 = vcmp.eq.f32.partialorder %v2543, 8.507059e+37
  %v2545 = vand.u32 %v2533, 2147483648
  %v2546 = vor.u32 1.1754944e-38, %v2545
  %v2547 = vsel %vm2544, %v2546, %v2542
  %v2548 = vmul.f32 1.0, %v2547
  %v2549 = vadd.f32 %v2507, %v2416
  %v2550 = vxor.u32 %v2549, 2147483648
  %v2551 = vmul.f32 %v2550, 1.442695
  %v2552 = vpow.pop %v2551
  %v2553 = vadd.f32 %v2552, 1.0
  %v2554 = vrcp.pop %v2553
  %v2555 = vmul.f32 %v2553, %v2554
  %v2556 = vsub.f32 1.0, %v2555
  %v2557 = vmul.f32 %v2554, %v2556
  %v2558 = vadd.f32 %v2554, %v2557
  %vm2559 = vweird.f32 %v2553
  %vm2560 = vweird.f32 %v2554
  %vm2561 = vmor %vm2559, %vm2560
  %v2562 = vsel %vm2561, %v2554, %v2558
  %v2563 = vand.u32 2147483647, %v2553
  %vm2564 = vcmp.eq.f32.partialorder %v2563, 8.507059e+37
  %v2565 = vand.u32 %v2553, 2147483648
  %v2566 = vor.u32 1.1754944e-38, %v2565
  %v2567 = vsel %vm2564, %v2566, %v2562
  %v2568 = vmul.f32 1.0, %v2567
  %v2569 = vmul.f32 %v2548, %v2436
  %v2570 = vadd.f32 %v2527, %v2569
  %v2571 = vtanh.pop %v2570
  %v2572 = vsub.f32 1.0, %v2568
  %v2573 = vmul.f32 %v2572, %v2571
  %v2574 = vmul.f32 %v2568, %v2357
  %v2575 = vadd.f32 %v2573, %v2574
  %2576 = vmatpush.msra.mxu0 %v173
  %2577 = vmatpush.msra.mxu0 %v169
  %2578 = vmatpush.msra.mxu0 %v165
  %2579 = vmatpush.msra.mxu0 %v161
  %2580 = vmatpush.msra.mxu0 %v157
  %2581 = vmatpush.msra.mxu0 %v153
  %2582 = vmatpush.msra.mxu0 %v149
  %2583 = vmatpush.msra.mxu0 %v145
  %2584 = vmatpush.msra.mxu0 %v141
  %2585 = vmatpush.msra.mxu0 %v137
  %2586 = vmatpush.msra.mxu0 %v133
  %2587 = vmatpush.msra.mxu0 %v129
  %2588 = vmatpush.msra.mxu0 %v125
  %2589 = vmatpush.msra.mxu0 %v121
  %2590 = vmatpush.msra.mxu0 %v117
  %2591 = vmatpush.msra.mxu0 %v113
  %2592 = vmatmul.f32.gmra.mxu0 %v2575
  %v2593 = vpop.f32.mrf.mxu0
  %v2594 = vadd.f32 %v179, %v2593
  %2595 = vdwg.mxu0
  %v2596 = vadd.f32 %v2594, %v40
  %2597 = vmax.xlane.f32.xlu0 %v2596
  %v2598 = vpop.xlane.xlu0 %2597
  %vm2599 = vcmp.eq.f32.partialorder %v2596, %v2598
  %v2600 = vsel %vm2599, %v35, 128
  %v2601 = vand.u32 %v2600, 65535
  %v2602 = vshra.s32 %v2600, 16
  %v2603 = vcvt.s32.f32 %v2601
  %v2604 = vcvt.s32.f32 %v2602
  %2605 = vmin.xlane.f32.xlu0 %v2604
  %v2606 = vpop.xlane.xlu0 %2605
  %vm2607 = vcmp.eq.f32.partialorder %v2604, %v2606
  %v2608 = vsel %vm2607, %v2603, inf
  %2609 = vmin.xlane.f32.xlu0 %v2608
  %v2610 = vpop.xlane.xlu0 %2609
  %v2611 = vcvt.f32.s32 %v2610
  %v2612 = vcvt.f32.s32 %v2606
  %v2613 = vshll.u32 %v2612, 16
  %v2614 = vadd.s32 %v2613, %v2611
  %v2615 = vsel %vm2465, 1, 0
  %vm2616 = vcmp.eq.s32.totalorder %v2615, 1
  %v2617 = vsel %vm2616, %v2594, %v38
  %2618 = vst [vmem:[%s9 + $0x30] sm:$0xff] %v2617
  %v2619 = vsel %vm2465, %v2614, 0
  %vm2620 = vcmask 7168
  %v2621 = vsel %vm2620, %v1373, %v1591
  %vm2622 = vcmask 15360
  %v2623 = vsel %vm2622, %v2621, %v1809
  %vm2624 = vcmask 23552
  %v2625 = vsel %vm2624, %v2623, %v2027
  %vm2626 = vcmask 31744
  %v2627 = vsel %vm2626, %v2625, %v2245
  %vm2628 = vcmask 39936
  %v2629 = vsel %vm2628, %v2627, %v2463
  %vm2630 = vcmask 48128
  %v2631 = vsel %vm2630, %v2629, %v2619
  %vm2632 = vcmask 56320
  %2633 = vst.msk [vmem:[%s10] sm:$0xff] %vm2632, %v2631
  // Predicated region
  $region38: #{_lambda_.1} parent=0 // pred_check
    _
  $region39: #{_lambda_.1} parent=0 // pred_check_branch
    %2635 = sbr.rel (0) target = $region41
  $region40: #{_lambda_.1} parent=0 // pred_region
    _
  $region41: #{_lambda_.1} parent=0 // pred_fallthru
    _
  // Predicated region
  $region42: #{_lambda_.1} parent=0 // pred_check
    _
  $region43: #{_lambda_.1} parent=0 // pred_check_branch
    %2637 = sbr.rel (0) target = $region45
  $region44: #{_lambda_.1} parent=0 // pred_region
    _
  $region45: #{_lambda_.1} parent=0 // pred_fallthru
    _
  // Predicated region
  $region46: #{_lambda_.1} parent=0 // pred_check
    _
  $region47: #{_lambda_.1} parent=0 // pred_check_branch
    %2639 = sbr.rel (0) target = $region49
  $region48: #{_lambda_.1} parent=0 // pred_region
    _
  $region49: #{_lambda_.1} parent=0 // pred_fallthru
    _
  // Predicated region
  $region50: #{_lambda_.1} parent=0 // pred_check
    _
  $region51: #{_lambda_.1} parent=0 // pred_check_branch
    %2641 = sbr.rel (0) target = $region53
  $region52: #{_lambda_.1} parent=0 // pred_region
    _
  $region53: #{_lambda_.1} parent=0 // pred_fallthru
    _

</llo_original>
